<compile_context>
chip_gen: v7x
topology: tpu7x:2x2x1
jax: 0.10.0
libtpu: 0.0.40
codegen_flags: <defaults>
</compile_context>

<pallas_src>
import functools

import jax
import jax.numpy as jnp
from jax import lax
from jax.experimental import pallas as pl
from jax.experimental.pallas import tpu as pltpu


# ----------------------------- tiling helper --------------------------------

def _row_tile(m, cap=512):
    """Largest multiple-of-8 row tile dividing m (<= cap, <= ~m//2 when possible)."""
    if m % 8 != 0 or m <= 8:
        return m
    limit = min(m, cap, max(8, (m // 2) // 8 * 8))
    t = (limit // 8) * 8
    while t >= 8:
        if m % t == 0:
            return t
        t -= 8
    return m


# ----------------------------- fused GCN layer -------------------------------

def _gcn_layer_kernel(a_ref, x_ref, w_ref, b_ref, o_ref):
    # relu(A_norm @ (X @ W) + b): bf16 MXU operands, f32 accumulation, fused in VMEM.
    xw = jnp.dot(x_ref[...].astype(jnp.bfloat16), w_ref[...].astype(jnp.bfloat16),
                 preferred_element_type=jnp.float32)
    y = jnp.dot(a_ref[...].astype(jnp.bfloat16), xw.astype(jnp.bfloat16),
                preferred_element_type=jnp.float32) + b_ref[...]
    o_ref[...] = jnp.maximum(y, 0.0)


def pallas_gcn_layer(a_norm, x, w, b):
    m, m2 = a_norm.shape
    assert m == m2 and x.shape[0] == m
    k = x.shape[1]
    n = w.shape[1]
    tm = _row_tile(m)
    # TODO(synk): for large graphs, stage XW in a VMEM scratch instead of recomputing it
    #             per row tile (here feature dims are tiny so recompute is negligible).
    b2 = jnp.reshape(b, (1, n)).astype(jnp.float32)
    return pl.pallas_call(
        _gcn_layer_kernel,
        out_shape=jax.ShapeDtypeStruct((m, n), jnp.float32),
        grid=(m // tm,),
        in_specs=[
            pl.BlockSpec((tm, m), lambda i: (i, 0)),   # A_norm row tile
            pl.BlockSpec((m, k), lambda i: (0, 0)),    # X (full)
            pl.BlockSpec((k, n), lambda i: (0, 0)),    # W (full)
            pl.BlockSpec((1, n), lambda i: (0, 0)),    # bias
        ],
        out_specs=pl.BlockSpec((tm, n), lambda i: (i, 0)),
        compiler_params=pltpu.CompilerParams(dimension_semantics=("parallel",)),
    )(a_norm.astype(jnp.float32), x.astype(jnp.float32), w.astype(jnp.float32), b2)


# ----------------------------- fused projector -------------------------------

def _projector_kernel(x_ref, w1_ref, b1_ref, w2_ref, b2_ref, o_ref, *, eps):
    # Linear -> BatchNorm1d (training-mode batch stats, gamma=1, beta=0) -> ReLU -> Linear.
    h = jnp.dot(x_ref[...].astype(jnp.bfloat16), w1_ref[...].astype(jnp.bfloat16),
                preferred_element_type=jnp.float32) + b1_ref[...]
    mean = jnp.mean(h, axis=0, keepdims=True)
    var = jnp.mean((h - mean) ** 2, axis=0, keepdims=True)   # biased var (training-mode BN)
    hn = jnp.maximum((h - mean) * lax.rsqrt(var + eps), 0.0)
    o_ref[...] = jnp.dot(hn.astype(jnp.bfloat16), w2_ref[...].astype(jnp.bfloat16),
                         preferred_element_type=jnp.float32) + b2_ref[...]


def pallas_projector(x, params, num_views, rows_per_view, eps=1e-5):
    (w1, b1), (w2, b2) = params
    m, k = x.shape
    assert m == num_views * rows_per_view
    if num_views > 1 and rows_per_view % 8 != 0:
        # fall back to one call per view to respect the (8,128) block constraint
        outs = [pallas_projector(x[v * rows_per_view:(v + 1) * rows_per_view],
                                 params, 1, rows_per_view, eps) for v in range(num_views)]
        return jnp.concatenate(outs, axis=0)
    h1 = w1.shape[1]
    n = w2.shape[1]
    b1r = jnp.reshape(b1, (1, h1)).astype(jnp.float32)
    b2r = jnp.reshape(b2, (1, n)).astype(jnp.float32)
    return pl.pallas_call(
        functools.partial(_projector_kernel, eps=eps),
        out_shape=jax.ShapeDtypeStruct((m, n), jnp.float32),
        grid=(num_views,),   # one grid step per view => per-view BN statistics (as in PyTorch)
        in_specs=[
            pl.BlockSpec((rows_per_view, k), lambda v: (v, 0)),
            pl.BlockSpec((k, h1), lambda v: (0, 0)),
            pl.BlockSpec((1, h1), lambda v: (0, 0)),
            pl.BlockSpec((h1, n), lambda v: (0, 0)),
            pl.BlockSpec((1, n), lambda v: (0, 0)),
        ],
        out_specs=pl.BlockSpec((rows_per_view, n), lambda v: (v, 0)),
        compiler_params=pltpu.CompilerParams(dimension_semantics=("parallel",)),
    )(x.astype(jnp.float32), w1.astype(jnp.float32), b1r, w2.astype(jnp.float32), b2r)


# -------------------- fused batched semi-EMD contrastive loss ----------------

def _emd_score(o1, a1, o2, a2, *, lamb, n, iters):
    """Semi-EMD similarity S = 2 - 2*sum(transport * cost) for one graph pair.

    o1, o2: (N, D) node reps; a1, a2: (1, D) mean-pooled reps.  All mat-vecs go
    through the MXU (row-vector x matrix), divisions via approx reciprocal (EUP).
    """
    f32 = jnp.float32
    dn_ff = (((1,), (1,)), ((), ()))        # contract the feature axis of both operands
    dn_P_cols = (((1,), (1,)), ((), ()))    # (1,N) x (N,N) over P's cols -> (P @ vec)^T
    dn_P_rows = (((1,), (0,)), ((), ()))    # (1,N) x (N,N) over P's rows -> (P^T @ vec)^T

    # cost = 1 - cosine_sim  (F.normalize semantics, eps=1e-12)
    inv1 = lax.rsqrt(jnp.maximum(jnp.sum(o1 * o1, axis=1, keepdims=True), 1e-24))
    inv2 = lax.rsqrt(jnp.maximum(jnp.sum(o2 * o2, axis=1, keepdims=True), 1e-24))
    o1u = (o1 * inv1).astype(jnp.bfloat16)
    o2u = (o2 * inv2).astype(jnp.bfloat16)
    sim = lax.dot_general(o1u, o2u, dn_ff, preferred_element_type=f32)        # (N, N)
    cost = 1.0 - sim

    # marginals r (over o1 nodes) / c (over o2 nodes), kept as row vectors (no transposes)
    r_row = lax.dot_general(a2, o1, dn_ff, preferred_element_type=f32)        # (1, N)
    r_row = jnp.where(r_row <= 0.0, 1e-8, r_row)
    r_row = r_row * pl.reciprocal(jnp.sum(r_row, axis=1, keepdims=True), approx=True)
    c_row = lax.dot_general(a1, o2, dn_ff, preferred_element_type=f32)        # (1, N)
    c_row = jnp.where(c_row <= 0.0, 1e-8, c_row)
    c_row = c_row * pl.reciprocal(jnp.sum(c_row, axis=1, keepdims=True), approx=True)

    p = jnp.exp(-lamb * cost)                                                 # (N, N)
    # TODO(synk): for large max_nodes on v7x (64 MiB VMEM), tile the NxN Sinkhorn
    #             temporaries along the column axis / store P in bf16.
    u_row = jnp.full((1, n), 1.0 / n, dtype=f32)
    v_row = r_row
    for _ in range(iters):
        pu = lax.dot_general(u_row, p, dn_P_cols, preferred_element_type=f32)   # (P @ u)^T
        v_row = r_row * pl.reciprocal(jnp.maximum(pu, 1e-30), approx=True)
        ptv = lax.dot_general(v_row, p, dn_P_rows, preferred_element_type=f32)  # (P^T @ v)^T
        u_row = c_row * pl.reciprocal(jnp.maximum(ptv, 1e-30), approx=True)

    # emd = v^T (P * cost) u  (never materializes diag(v) P diag(u))
    t1 = lax.dot_general(v_row, p * cost, dn_P_rows, preferred_element_type=f32)  # (1, N)
    emd = lax.dot_general(t1, u_row, dn_ff, preferred_element_type=f32)           # (1, 1)
    return 2.0 - 2.0 * emd


def _rosa_loss_kernel(perm_ref, o1_ref, a1_ref, o1p_ref, a1p_ref, o2p_ref, a2p_ref,
                      loss_ref, pos_sc, neg_sc, *, lamb, n, iters, inv_t):
    del perm_ref  # consumed only by the index_maps
    s_idx = pl.program_id(1)
    o1 = o1_ref[0]
    a1 = a1_ref[0]
    # score vs permuted view-2 partner (shift 0 == the positive pair)
    s_v2 = _emd_score(o1, a1, o2p_ref[0], a2p_ref[0], lamb=lamb, n=n, iters=iters)
    # score vs permuted view-1 partner (consumed only for shifts > 0)
    s_v1 = _emd_score(o1, a1, o1p_ref[0], a1p_ref[0], lamb=lamb, n=n, iters=iters)

    @pl.when(s_idx == 0)
    def _():
        pos_sc[...] = s_v2
        neg_sc[...] = jnp.zeros_like(neg_sc)

    @pl.when(s_idx > 0)
    def _():
        neg_sc[...] += jnp.exp(s_v2 * inv_t) + jnp.exp(s_v1 * inv_t)

    @pl.when(s_idx == pl.num_programs(1) - 1)
    def _():
        # -log(exp(pos/T) / total_neg) = log(total_neg) - pos/T
        loss_ref[0] = jnp.log(neg_sc[...]) - pos_sc[...] * inv_t


def pallas_rosa_loss(out1, avg1, out2, avg2, temperature, lamb=20.0, iters=5):
    """Per-graph contrastive loss -log(f(S_pos) / sum_neg f(S_neg)) in ONE pallas_call.

    grid = (graph b [parallel], shift s [arbitrary]); perm[s, b] = (b - s) % B is a
    scalar-prefetch table so the permuted partner blocks are gathered by the index_maps
    directly from HBM.  The anchor block (b) is resident across the whole shift axis.
    """
    b, n, d = out1.shape
    assert avg1.shape == (b, 1, d) and out2.shape == (b, n, d) and avg2.shape == (b, 1, d)
    f32 = jnp.float32
    idx = jnp.arange(b, dtype=jnp.int32)
    perm = (idx[None, :] - idx[:, None]) % b            # perm[s, i] = (i - s) % b

    grid_spec = pltpu.PrefetchScalarGridSpec(
        num_scalar_prefetch=1,
        grid=(b, b),
        in_specs=[
            pl.BlockSpec((1, n, d), lambda i, s, perm: (i, 0, 0)),           # anchor out1[b]
            pl.BlockSpec((1, 1, d), lambda i, s, perm: (i, 0, 0)),           # anchor avg1[b]
            pl.BlockSpec((1, n, d), lambda i, s, perm: (perm[s, i], 0, 0)),  # out1[perm]
            pl.BlockSpec((1, 1, d), lambda i, s, perm: (perm[s, i], 0, 0)),  # avg1[perm]
            pl.BlockSpec((1, n, d), lambda i, s, perm: (perm[s, i], 0, 0)),  # out2[perm]
            pl.BlockSpec((1, 1, d), lambda i, s, perm: (perm[s, i], 0, 0)),  # avg2[perm]
        ],
        out_specs=pl.BlockSpec((1, 1, 1), lambda i, s, perm: (i, 0, 0)),
        scratch_shapes=[pltpu.VMEM((1, 1), f32), pltpu.VMEM((1, 1), f32)],
    )
    loss = pl.pallas_call(
        functools.partial(_rosa_loss_kernel, lamb=lamb, n=n, iters=iters,
                          inv_t=1.0 / temperature),
        out_shape=jax.ShapeDtypeStruct((b, 1, 1), f32),
        grid_spec=grid_spec,
        compiler_params=pltpu.CompilerParams(
            dimension_semantics=("parallel", "arbitrary")),
    )(perm, out1.astype(f32), avg1.astype(f32), out1.astype(f32), avg1.astype(f32),
      out2.astype(f32), avg2.astype(f32))
    return loss[:, 0, 0]                                # [B]


# ----------------------------- JAX glue --------------------------------------

def gcn_norm_dense_adj(edge_index, num_nodes):
    """D^{-1/2} (A + I) D^{-1/2}, dense.  A[dst, src] = 1 for each edge src->dst."""
    a = jnp.zeros((num_nodes, num_nodes), jnp.float32)
    a = a.at[edge_index[1], edge_index[0]].set(1.0)
    a = a + jnp.eye(num_nodes, dtype=jnp.float32)
    deg = jnp.sum(a, axis=1)
    dinv = lax.rsqrt(deg)
    return a * dinv[:, None] * dinv[None, :]


def global_mean_pool(x, batch, num_graphs):
    ones = jnp.ones((x.shape[0],), jnp.float32)
    counts = jax.ops.segment_sum(ones, batch, num_segments=num_graphs)
    sums = jax.ops.segment_sum(x, batch, num_segments=num_graphs)
    return sums / counts[:, None]


def to_dense_batch(x, batch, num_graphs, max_nodes, fill_value=1e-8):
    n = x.shape[0]
    ones = jnp.ones((n,), jnp.int32)
    counts = jax.ops.segment_sum(ones, batch, num_segments=num_graphs)
    starts = jnp.concatenate([jnp.zeros((1,), counts.dtype), jnp.cumsum(counts)[:-1]])
    pos = jnp.arange(n, dtype=jnp.int32) - starts[batch].astype(jnp.int32)
    dense = jnp.full((num_graphs, max_nodes, x.shape[1]), fill_value, x.dtype)
    dense = dense.at[batch, pos].set(x)
    return dense


def batched_semi_emd_loss(reps1, reps2, batch1, batch2, num_graphs, max_nodes, temperature):
    pooled1 = global_mean_pool(reps1, batch1, num_graphs)
    pooled2 = global_mean_pool(reps2, batch2, num_graphs)
    out1 = to_dense_batch(reps1, batch1, num_graphs, max_nodes)
    out2 = to_dense_batch(reps2, batch2, num_graphs, max_nodes)
    return pallas_rosa_loss(out1, pooled1[:, None, :], out2, pooled2[:, None, :], temperature)


def rosa_forward(params, x1, a_norm1, x2, a_norm2, batch1, batch2,
                 num_graphs, max_nodes, temperature=0.4):
    n1, n2 = x1.shape[0], x2.shape[0]
    assert n1 == n2, "fused two-view path assumes equal node counts per view"
    # Encoder/projector weights are shared between views -> batch both views through the
    # kernels once via a block-diagonal normalized adjacency (exactly equivalent).
    x = jnp.concatenate([x1, x2], axis=0)
    a = jnp.zeros((n1 + n2, n1 + n2), jnp.float32)
    a = a.at[:n1, :n1].set(a_norm1).at[n1:, n1:].set(a_norm2)

    h = x
    for (w, b) in params["gcn"]:
        h = pallas_gcn_layer(a, h, w, b)                 # F.relu(GCNConv(x, edge_index))
    z = pallas_projector(h, params["proj"], num_views=2, rows_per_view=n1)
    z1, z2 = z[:n1], z[n1:]

    loss1 = batched_semi_emd_loss(z1, z2, batch1, batch2, num_graphs, max_nodes, temperature)
    loss2 = batched_semi_emd_loss(z2, z1, batch2, batch1, num_graphs, max_nodes, temperature)
    return jnp.mean(0.5 * loss1 + 0.5 * loss2)


# ----------------------------- parameter init --------------------------------

def glorot(key, shape):
    a = (6.0 / (shape[0] + shape[1])) ** 0.5
    return jax.random.uniform(key, shape, jnp.float32, -a, a)


def linear_init(key, fan_in, fan_out):
    k1, k2 = jax.random.split(key)
    bound = 1.0 / (fan_in ** 0.5)
    w = jax.random.uniform(k1, (fan_in, fan_out), jnp.float32, -bound, bound)
    b = jax.random.uniform(k2, (fan_out,), jnp.float32, -bound, bound)
    return w, b


def ring_edges(num_graphs, nodes_per_graph, step):
    src, dst = [], []
    for g in range(num_graphs):
        off = g * nodes_per_graph
        for i in range(nodes_per_graph):
            j = (i + step) % nodes_per_graph
            src += [off + i, off + j]
            dst += [off + j, off + i]
    return jnp.array([src, dst], dtype=jnp.int32)


# ----------------------------- main -------------------------------------------

if __name__ == "__main__":
    # small synthetic config consistent with RoSA(encoder='gcn', layer_num=2)
    num_graphs = 2
    nodes_per_graph = 8
    num_nodes = num_graphs * nodes_per_graph          # 16 nodes per view
    input_dim = 32
    hidden = 16                                       # GCN: input_dim -> 2*hidden -> hidden
    proj_dim = 16                                     # Projector: [hidden, proj_dim, proj_dim]
    T = 0.4

    key = jax.random.PRNGKey(0)
    kx1, kx2, kg1, kg2, kp1, kp2 = jax.random.split(key, 6)

    # two augmented "views" of the batched graphs
    x1 = jax.random.normal(kx1, (num_nodes, input_dim), jnp.float32)
    x2 = jax.random.normal(kx2, (num_nodes, input_dim), jnp.float32)
    edge_index1 = ring_edges(num_graphs, nodes_per_graph, step=1)
    edge_index2 = ring_edges(num_graphs, nodes_per_graph, step=2)
    a_norm1 = gcn_norm_dense_adj(edge_index1, num_nodes)
    a_norm2 = gcn_norm_dense_adj(edge_index2, num_nodes)
    batch = jnp.repeat(jnp.arange(num_graphs, dtype=jnp.int32), nodes_per_graph)

    # encoder weights (glorot, zero bias — GCNConv default) and projector Linears
    params = {
        "gcn": [
            (glorot(kg1, (input_dim, hidden * 2)), jnp.zeros((hidden * 2,), jnp.float32)),
            (glorot(kg2, (hidden * 2, hidden)), jnp.zeros((hidden,), jnp.float32)),
        ],
        "proj": [
            linear_init(kp1, hidden, proj_dim),
            linear_init(kp2, proj_dim, proj_dim),
        ],
    }

    forward = jax.jit(rosa_forward, static_argnums=(7, 8, 9))
    loss = forward(params, x1, a_norm1, x2, a_norm2, batch, batch,
                   num_graphs, nodes_per_graph, T)
    loss = jax.block_until_ready(loss)
    assert loss.shape == () and bool(jnp.isfinite(loss))
    print("KERNEL_OK")
</pallas_src>

<mosaic_0001>
module attributes {stable_mosaic.version = 11 : i64} {
  func.func private @main(%arg0: i32) attributes {dimension_semantics = [#tpu.dimension_semantics<core_parallel>], iteration_bounds = array<i64: 2>, tpu.core_type = #tpu.core_type<sc_scalar_subcore>, window_params = []} {
    return
  }
}

module attributes {stable_mosaic.version = 11 : i64} {
  func.func private @main(%arg0: i32) attributes {dimension_semantics = [#tpu.dimension_semantics<core_parallel>], iteration_bounds = array<i64: 2>, tpu.core_type = #tpu.core_type<sc_scalar_subcore>, window_params = []} {
    return
  }
}

module attributes {stable_mosaic.version = 11 : i64} {
  func.func @_gcn_layer_kernel(%arg0: i32, %arg1: memref<16x32xf32, #tpu.memory_space<vmem>>, %arg2: memref<32x32xf32, #tpu.memory_space<vmem>>, %arg3: memref<32x32xf32, #tpu.memory_space<vmem>>, %arg4: memref<1x32xf32, #tpu.memory_space<vmem>>, %arg5: memref<16x32xf32, #tpu.memory_space<vmem>>) attributes {dimension_semantics = [#tpu.dimension_semantics<parallel>], iteration_bounds = array<i64: 2>, scalar_prefetch = 0 : i64, scratch_operands = 0 : i64, tpu.core_type = #tpu.core_type<tc>, window_params = [{transform_indices = @transform_0, window_bounds = array<i64: 16, 32>}, {pipeline_mode = #tpu.pipeline_mode<synchronous>, transform_indices = @transform_1, window_bounds = array<i64: 32, 32>}, {pipeline_mode = #tpu.pipeline_mode<synchronous>, transform_indices = @transform_2, window_bounds = array<i64: 32, 32>}, {pipeline_mode = #tpu.pipeline_mode<synchronous>, transform_indices = @transform_3, window_bounds = array<i64: 1, 32>}, {transform_indices = @transform_4, window_bounds = array<i64: 16, 32>}]} {
    %c0 = arith.constant 0 : index
    %c0_0 = arith.constant 0 : index
    %0 = vector.load %arg2[%c0, %c0_0] : memref<32x32xf32, #tpu.memory_space<vmem>>, vector<32x32xf32>
    %1 = arith.truncf %0 : vector<32x32xf32> to vector<32x32xbf16>
    %c0_1 = arith.constant 0 : index
    %c0_2 = arith.constant 0 : index
    %2 = vector.load %arg3[%c0_1, %c0_2] : memref<32x32xf32, #tpu.memory_space<vmem>>, vector<32x32xf32>
    %3 = arith.truncf %2 : vector<32x32xf32> to vector<32x32xbf16>
    %cst = arith.constant dense<0.000000e+00> : vector<32x32xf32>
    %4 = tpu.matmul %1, %3, %cst {dimension_numbers = #tpu.dot_dimension_numbers<[1], [0], [0], [1], [0, 0, 1, 1], [], []>} : vector<32x32xbf16>, vector<32x32xbf16>, vector<32x32xf32> -> vector<32x32xf32>
    %c0_3 = arith.constant 0 : index
    %c0_4 = arith.constant 0 : index
    %5 = vector.load %arg1[%c0_3, %c0_4] : memref<16x32xf32, #tpu.memory_space<vmem>>, vector<16x32xf32>
    %6 = arith.truncf %5 : vector<16x32xf32> to vector<16x32xbf16>
    %7 = arith.truncf %4 : vector<32x32xf32> to vector<32x32xbf16>
    %cst_5 = arith.constant dense<0.000000e+00> : vector<16x32xf32>
    %8 = tpu.matmul %6, %7, %cst_5 {dimension_numbers = #tpu.dot_dimension_numbers<[1], [0], [0], [1], [0, 0, 1, 1], [], []>} : vector<16x32xbf16>, vector<32x32xbf16>, vector<16x32xf32> -> vector<16x32xf32>
    %c0_6 = arith.constant 0 : index
    %c0_7 = arith.constant 0 : index
    %9 = vector.load %arg4[%c0_6, %c0_7] : memref<1x32xf32, #tpu.memory_space<vmem>>, vector<1x32xf32>
    %10 = vector.broadcast %9 : vector<1x32xf32> to vector<16x32xf32>
    %11 = arith.addf %8, %10 : vector<16x32xf32>
    %cst_8 = arith.constant 0.000000e+00 : f32
    %12 = vector.broadcast %cst_8 : f32 to vector<16x32xf32>
    %13 = arith.maximumf %11, %12 : vector<16x32xf32>
    %c0_9 = arith.constant 0 : index
    %c0_10 = arith.constant 0 : index
    %14 = vector.load %arg5[%c0_9, %c0_10] : memref<16x32xf32, #tpu.memory_space<vmem>>, vector<16x32xf32>
    tpu.vector_store %arg5[%c0_9, %c0_10], %13 {strides = array<i32>} : memref<16x32xf32, #tpu.memory_space<vmem>>, vector<16x32xf32>,
    return
  }
  func.func @transform_0(%arg0: i32) -> (i32, i32) {
    %c0_i32 = arith.constant 0 : i32
    %c0_i32_0 = arith.constant 0 : i32
    return %arg0, %c0_i32 : i32, i32
  }
  func.func @transform_1(%arg0: i32) -> (i32, i32) {
    %c0_i32 = arith.constant 0 : i32
    %c0_i32_0 = arith.constant 0 : i32
    %c0_i32_1 = arith.constant 0 : i32
    return %c0_i32, %c0_i32_0 : i32, i32
  }
  func.func @transform_2(%arg0: i32) -> (i32, i32) {
    %c0_i32 = arith.constant 0 : i32
    %c0_i32_0 = arith.constant 0 : i32
    %c0_i32_1 = arith.constant 0 : i32
    return %c0_i32, %c0_i32_0 : i32, i32
  }
  func.func @transform_3(%arg0: i32) -> (i32, i32) {
    %c0_i32 = arith.constant 0 : i32
    %c0_i32_0 = arith.constant 0 : i32
    %c0_i32_1 = arith.constant 0 : i32
    return %c0_i32, %c0_i32_0 : i32, i32
  }
  func.func @transform_4(%arg0: i32) -> (i32, i32) {
    %c0_i32 = arith.constant 0 : i32
    %c0_i32_0 = arith.constant 0 : i32
    return %arg0, %c0_i32 : i32, i32
  }
}

module attributes {stable_mosaic.version = 11 : i64} {
  func.func @_projector_kernel(%arg0: i32, %arg1: memref<16x16xf32, #tpu.memory_space<vmem>>, %arg2: memref<16x16xf32, #tpu.memory_space<vmem>>, %arg3: memref<1x16xf32, #tpu.memory_space<vmem>>, %arg4: memref<16x16xf32, #tpu.memory_space<vmem>>, %arg5: memref<1x16xf32, #tpu.memory_space<vmem>>, %arg6: memref<16x16xf32, #tpu.memory_space<vmem>>) attributes {dimension_semantics = [#tpu.dimension_semantics<parallel>], iteration_bounds = array<i64: 2>, scalar_prefetch = 0 : i64, scratch_operands = 0 : i64, tpu.core_type = #tpu.core_type<tc>, window_params = [{transform_indices = @transform_0, window_bounds = array<i64: 16, 16>}, {pipeline_mode = #tpu.pipeline_mode<synchronous>, transform_indices = @transform_1, window_bounds = array<i64: 16, 16>}, {pipeline_mode = #tpu.pipeline_mode<synchronous>, transform_indices = @transform_2, window_bounds = array<i64: 1, 16>}, {pipeline_mode = #tpu.pipeline_mode<synchronous>, transform_indices = @transform_3, window_bounds = array<i64: 16, 16>}, {pipeline_mode = #tpu.pipeline_mode<synchronous>, transform_indices = @transform_4, window_bounds = array<i64: 1, 16>}, {transform_indices = @transform_5, window_bounds = array<i64: 16, 16>}]} {
    %c0 = arith.constant 0 : index
    %c0_0 = arith.constant 0 : index
    %0 = vector.load %arg1[%c0, %c0_0] : memref<16x16xf32, #tpu.memory_space<vmem>>, vector<16x16xf32>
    %1 = arith.truncf %0 : vector<16x16xf32> to vector<16x16xbf16>
    %c0_1 = arith.constant 0 : index
    %c0_2 = arith.constant 0 : index
    %2 = vector.load %arg2[%c0_1, %c0_2] : memref<16x16xf32, #tpu.memory_space<vmem>>, vector<16x16xf32>
    %3 = arith.truncf %2 : vector<16x16xf32> to vector<16x16xbf16>
    %cst = arith.constant dense<0.000000e+00> : vector<16x16xf32>
    %4 = tpu.matmul %1, %3, %cst {dimension_numbers = #tpu.dot_dimension_numbers<[1], [0], [0], [1], [0, 0, 1, 1], [], []>} : vector<16x16xbf16>, vector<16x16xbf16>, vector<16x16xf32> -> vector<16x16xf32>
    %c0_3 = arith.constant 0 : index
    %c0_4 = arith.constant 0 : index
    %5 = vector.load %arg3[%c0_3, %c0_4] : memref<1x16xf32, #tpu.memory_space<vmem>>, vector<1x16xf32>
    %6 = vector.broadcast %5 : vector<1x16xf32> to vector<16x16xf32>
    %7 = arith.addf %4, %6 : vector<16x16xf32>
    %cst_5 = arith.constant dense<0.000000e+00> : vector<16xf32>
    %8 = vector.multi_reduction <add>, %7, %cst_5 [0] : vector<16x16xf32> to vector<16xf32>
    %9 = vector.shape_cast %8 : vector<16xf32> to vector<1x16xf32>
    %cst_6 = arith.constant 1.600000e+01 : f32
    %10 = vector.broadcast %cst_6 : f32 to vector<1x16xf32>
    %11 = arith.divf %9, %10 : vector<1x16xf32>
    %12 = vector.broadcast %11 : vector<1x16xf32> to vector<16x16xf32>
    %13 = arith.subf %7, %12 : vector<16x16xf32>
    %14 = arith.mulf %13, %13 : vector<16x16xf32>
    %cst_7 = arith.constant dense<0.000000e+00> : vector<16xf32>
    %15 = vector.multi_reduction <add>, %14, %cst_7 [0] : vector<16x16xf32> to vector<16xf32>
    %16 = vector.shape_cast %15 : vector<16xf32> to vector<1x16xf32>
    %cst_8 = arith.constant 1.600000e+01 : f32
    %17 = vector.broadcast %cst_8 : f32 to vector<1x16xf32>
    %18 = arith.divf %16, %17 : vector<1x16xf32>
    %19 = vector.broadcast %11 : vector<1x16xf32> to vector<16x16xf32>
    %20 = arith.subf %7, %19 : vector<16x16xf32>
    %cst_9 = arith.constant 9.99999974E-6 : f32
    %21 = vector.broadcast %cst_9 : f32 to vector<1x16xf32>
    %22 = arith.addf %18, %21 : vector<1x16xf32>
    %23 = math.rsqrt %22 : vector<1x16xf32>
    %24 = vector.broadcast %23 : vector<1x16xf32> to vector<16x16xf32>
    %25 = arith.mulf %20, %24 : vector<16x16xf32>
    %cst_10 = arith.constant 0.000000e+00 : f32
    %26 = vector.broadcast %cst_10 : f32 to vector<16x16xf32>
    %27 = arith.maximumf %25, %26 : vector<16x16xf32>
    %28 = arith.truncf %27 : vector<16x16xf32> to vector<16x16xbf16>
    %c0_11 = arith.constant 0 : index
    %c0_12 = arith.constant 0 : index
    %29 = vector.load %arg4[%c0_11, %c0_12] : memref<16x16xf32, #tpu.memory_space<vmem>>, vector<16x16xf32>
    %30 = arith.truncf %29 : vector<16x16xf32> to vector<16x16xbf16>
    %cst_13 = arith.constant dense<0.000000e+00> : vector<16x16xf32>
    %31 = tpu.matmul %28, %30, %cst_13 {dimension_numbers = #tpu.dot_dimension_numbers<[1], [0], [0], [1], [0, 0, 1, 1], [], []>} : vector<16x16xbf16>, vector<16x16xbf16>, vector<16x16xf32> -> vector<16x16xf32>
    %c0_14 = arith.constant 0 : index
    %c0_15 = arith.constant 0 : index
    %32 = vector.load %arg5[%c0_14, %c0_15] : memref<1x16xf32, #tpu.memory_space<vmem>>, vector<1x16xf32>
    %33 = vector.broadcast %32 : vector<1x16xf32> to vector<16x16xf32>
    %34 = arith.addf %31, %33 : vector<16x16xf32>
    %c0_16 = arith.constant 0 : index
    %c0_17 = arith.constant 0 : index
    %35 = vector.load %arg6[%c0_16, %c0_17] : memref<16x16xf32, #tpu.memory_space<vmem>>, vector<16x16xf32>
    tpu.vector_store %arg6[%c0_16, %c0_17], %34 {strides = array<i32>} : memref<16x16xf32, #tpu.memory_space<vmem>>, vector<16x16xf32>,
    return
  }
  func.func @transform_0(%arg0: i32) -> (i32, i32) {
    %c0_i32 = arith.constant 0 : i32
    %c0_i32_0 = arith.constant 0 : i32
    return %arg0, %c0_i32 : i32, i32
  }
  func.func @transform_1(%arg0: i32) -> (i32, i32) {
    %c0_i32 = arith.constant 0 : i32
    %c0_i32_0 = arith.constant 0 : i32
    %c0_i32_1 = arith.constant 0 : i32
    return %c0_i32, %c0_i32_0 : i32, i32
  }
  func.func @transform_2(%arg0: i32) -> (i32, i32) {
    %c0_i32 = arith.constant 0 : i32
    %c0_i32_0 = arith.constant 0 : i32
    %c0_i32_1 = arith.constant 0 : i32
    return %c0_i32, %c0_i32_0 : i32, i32
  }
  func.func @transform_3(%arg0: i32) -> (i32, i32) {
    %c0_i32 = arith.constant 0 : i32
    %c0_i32_0 = arith.constant 0 : i32
    %c0_i32_1 = arith.constant 0 : i32
    return %c0_i32, %c0_i32_0 : i32, i32
  }
  func.func @transform_4(%arg0: i32) -> (i32, i32) {
    %c0_i32 = arith.constant 0 : i32
    %c0_i32_0 = arith.constant 0 : i32
    %c0_i32_1 = arith.constant 0 : i32
    return %c0_i32, %c0_i32_0 : i32, i32
  }
  func.func @transform_5(%arg0: i32) -> (i32, i32) {
    %c0_i32 = arith.constant 0 : i32
    %c0_i32_0 = arith.constant 0 : i32
    return %arg0, %c0_i32 : i32, i32
  }
}

module attributes {stable_mosaic.version = 11 : i64} {
  func.func @_gcn_layer_kernel(%arg0: i32, %arg1: memref<16x32xf32, #tpu.memory_space<vmem>>, %arg2: memref<32x32xf32, #tpu.memory_space<vmem>>, %arg3: memref<32x16xf32, #tpu.memory_space<vmem>>, %arg4: memref<1x16xf32, #tpu.memory_space<vmem>>, %arg5: memref<16x16xf32, #tpu.memory_space<vmem>>) attributes {dimension_semantics = [#tpu.dimension_semantics<parallel>], iteration_bounds = array<i64: 2>, scalar_prefetch = 0 : i64, scratch_operands = 0 : i64, tpu.core_type = #tpu.core_type<tc>, window_params = [{transform_indices = @transform_0, window_bounds = array<i64: 16, 32>}, {pipeline_mode = #tpu.pipeline_mode<synchronous>, transform_indices = @transform_1, window_bounds = array<i64: 32, 32>}, {pipeline_mode = #tpu.pipeline_mode<synchronous>, transform_indices = @transform_2, window_bounds = array<i64: 32, 16>}, {pipeline_mode = #tpu.pipeline_mode<synchronous>, transform_indices = @transform_3, window_bounds = array<i64: 1, 16>}, {transform_indices = @transform_4, window_bounds = array<i64: 16, 16>}]} {
    %c0 = arith.constant 0 : index
    %c0_0 = arith.constant 0 : index
    %0 = vector.load %arg2[%c0, %c0_0] : memref<32x32xf32, #tpu.memory_space<vmem>>, vector<32x32xf32>
    %1 = arith.truncf %0 : vector<32x32xf32> to vector<32x32xbf16>
    %c0_1 = arith.constant 0 : index
    %c0_2 = arith.constant 0 : index
    %2 = vector.load %arg3[%c0_1, %c0_2] : memref<32x16xf32, #tpu.memory_space<vmem>>, vector<32x16xf32>
    %3 = arith.truncf %2 : vector<32x16xf32> to vector<32x16xbf16>
    %cst = arith.constant dense<0.000000e+00> : vector<32x16xf32>
    %4 = tpu.matmul %1, %3, %cst {dimension_numbers = #tpu.dot_dimension_numbers<[1], [0], [0], [1], [0, 0, 1, 1], [], []>} : vector<32x32xbf16>, vector<32x16xbf16>, vector<32x16xf32> -> vector<32x16xf32>
    %c0_3 = arith.constant 0 : index
    %c0_4 = arith.constant 0 : index
    %5 = vector.load %arg1[%c0_3, %c0_4] : memref<16x32xf32, #tpu.memory_space<vmem>>, vector<16x32xf32>
    %6 = arith.truncf %5 : vector<16x32xf32> to vector<16x32xbf16>
    %7 = arith.truncf %4 : vector<32x16xf32> to vector<32x16xbf16>
    %cst_5 = arith.constant dense<0.000000e+00> : vector<16x16xf32>
    %8 = tpu.matmul %6, %7, %cst_5 {dimension_numbers = #tpu.dot_dimension_numbers<[1], [0], [0], [1], [0, 0, 1, 1], [], []>} : vector<16x32xbf16>, vector<32x16xbf16>, vector<16x16xf32> -> vector<16x16xf32>
    %c0_6 = arith.constant 0 : index
    %c0_7 = arith.constant 0 : index
    %9 = vector.load %arg4[%c0_6, %c0_7] : memref<1x16xf32, #tpu.memory_space<vmem>>, vector<1x16xf32>
    %10 = vector.broadcast %9 : vector<1x16xf32> to vector<16x16xf32>
    %11 = arith.addf %8, %10 : vector<16x16xf32>
    %cst_8 = arith.constant 0.000000e+00 : f32
    %12 = vector.broadcast %cst_8 : f32 to vector<16x16xf32>
    %13 = arith.maximumf %11, %12 : vector<16x16xf32>
    %c0_9 = arith.constant 0 : index
    %c0_10 = arith.constant 0 : index
    %14 = vector.load %arg5[%c0_9, %c0_10] : memref<16x16xf32, #tpu.memory_space<vmem>>, vector<16x16xf32>
    tpu.vector_store %arg5[%c0_9, %c0_10], %13 {strides = array<i32>} : memref<16x16xf32, #tpu.memory_space<vmem>>, vector<16x16xf32>,
    return
  }
  func.func @transform_0(%arg0: i32) -> (i32, i32) {
    %c0_i32 = arith.constant 0 : i32
    %c0_i32_0 = arith.constant 0 : i32
    return %arg0, %c0_i32 : i32, i32
  }
  func.func @transform_1(%arg0: i32) -> (i32, i32) {
    %c0_i32 = arith.constant 0 : i32
    %c0_i32_0 = arith.constant 0 : i32
    %c0_i32_1 = arith.constant 0 : i32
    return %c0_i32, %c0_i32_0 : i32, i32
  }
  func.func @transform_2(%arg0: i32) -> (i32, i32) {
    %c0_i32 = arith.constant 0 : i32
    %c0_i32_0 = arith.constant 0 : i32
    %c0_i32_1 = arith.constant 0 : i32
    return %c0_i32, %c0_i32_0 : i32, i32
  }
  func.func @transform_3(%arg0: i32) -> (i32, i32) {
    %c0_i32 = arith.constant 0 : i32
    %c0_i32_0 = arith.constant 0 : i32
    %c0_i32_1 = arith.constant 0 : i32
    return %c0_i32, %c0_i32_0 : i32, i32
  }
  func.func @transform_4(%arg0: i32) -> (i32, i32) {
    %c0_i32 = arith.constant 0 : i32
    %c0_i32_0 = arith.constant 0 : i32
    return %arg0, %c0_i32 : i32, i32
  }
}

module attributes {stable_mosaic.version = 11 : i64} {
  func.func @_rosa_loss_kernel(%arg0: i32, %arg1: i32, %arg2: memref<2x2xi32, #tpu.memory_space<smem>>, %arg3: memref<1x8x16xf32, #tpu.memory_space<vmem>>, %arg4: memref<1x1x16xf32, #tpu.memory_space<vmem>>, %arg5: memref<1x8x16xf32, #tpu.memory_space<vmem>>, %arg6: memref<1x1x16xf32, #tpu.memory_space<vmem>>, %arg7: memref<1x8x16xf32, #tpu.memory_space<vmem>>, %arg8: memref<1x1x16xf32, #tpu.memory_space<vmem>>, %arg9: memref<1x1x1xf32, #tpu.memory_space<vmem>>, %arg10: memref<1x1xf32, #tpu.memory_space<vmem>>, %arg11: memref<1x1xf32, #tpu.memory_space<vmem>>) attributes {dimension_semantics = [#tpu.dimension_semantics<parallel>, #tpu.dimension_semantics<arbitrary>], iteration_bounds = array<i64: 2, 2>, scalar_prefetch = 1 : i64, scratch_operands = 2 : i64, tpu.core_type = #tpu.core_type<tc>, window_params = [{transform_indices = @transform_0, window_bounds = array<i64: 1, 8, 16>}, {transform_indices = @transform_1, window_bounds = array<i64: 1, 1, 16>}, {transform_indices = @transform_2, window_bounds = array<i64: 1, 8, 16>}, {transform_indices = @transform_3, window_bounds = array<i64: 1, 1, 16>}, {transform_indices = @transform_4, window_bounds = array<i64: 1, 8, 16>}, {transform_indices = @transform_5, window_bounds = array<i64: 1, 1, 16>}, {transform_indices = @transform_6, window_bounds = array<i64: 1, 1, 1>}]} {
    %c0 = arith.constant 0 : index
    %c0_0 = arith.constant 0 : index
    %c0_1 = arith.constant 0 : index
    %0 = vector.load %arg3[%c0, %c0_0, %c0_1] : memref<1x8x16xf32, #tpu.memory_space<vmem>>, vector<1x8x16xf32>
    %1 = vector.shape_cast %0 : vector<1x8x16xf32> to vector<8x16xf32>
    %c0_2 = arith.constant 0 : index
    %c0_3 = arith.constant 0 : index
    %c0_4 = arith.constant 0 : index
    %2 = vector.load %arg4[%c0_2, %c0_3, %c0_4] : memref<1x1x16xf32, #tpu.memory_space<vmem>>, vector<1x1x16xf32>
    %3 = vector.shape_cast %2 : vector<1x1x16xf32> to vector<1x16xf32>
    %c0_5 = arith.constant 0 : index
    %c0_6 = arith.constant 0 : index
    %c0_7 = arith.constant 0 : index
    %4 = vector.load %arg7[%c0_5, %c0_6, %c0_7] : memref<1x8x16xf32, #tpu.memory_space<vmem>>, vector<1x8x16xf32>
    %5 = vector.shape_cast %4 : vector<1x8x16xf32> to vector<8x16xf32>
    %c0_8 = arith.constant 0 : index
    %c0_9 = arith.constant 0 : index
    %c0_10 = arith.constant 0 : index
    %6 = vector.load %arg8[%c0_8, %c0_9, %c0_10] : memref<1x1x16xf32, #tpu.memory_space<vmem>>, vector<1x1x16xf32>
    %7 = vector.shape_cast %6 : vector<1x1x16xf32> to vector<1x16xf32>
    %8 = arith.mulf %1, %1 : vector<8x16xf32>
    %cst = arith.constant dense<0.000000e+00> : vector<8xf32>
    %9 = vector.multi_reduction <add>, %8, %cst [1] : vector<8x16xf32> to vector<8xf32>
    %10 = vector.shape_cast %9 : vector<8xf32> to vector<8x1xf32>
    %cst_11 = arith.constant 1.000000e-24 : f32
    %11 = vector.broadcast %cst_11 : f32 to vector<8x1xf32>
    %12 = arith.maximumf %10, %11 : vector<8x1xf32>
    %13 = math.rsqrt %12 : vector<8x1xf32>
    %14 = arith.mulf %5, %5 : vector<8x16xf32>
    %cst_12 = arith.constant dense<0.000000e+00> : vector<8xf32>
    %15 = vector.multi_reduction <add>, %14, %cst_12 [1] : vector<8x16xf32> to vector<8xf32>
    %16 = vector.shape_cast %15 : vector<8xf32> to vector<8x1xf32>
    %cst_13 = arith.constant 1.000000e-24 : f32
    %17 = vector.broadcast %cst_13 : f32 to vector<8x1xf32>
    %18 = arith.maximumf %16, %17 : vector<8x1xf32>
    %19 = math.rsqrt %18 : vector<8x1xf32>
    %20 = vector.broadcast %13 : vector<8x1xf32> to vector<8x16xf32>
    %21 = arith.mulf %1, %20 : vector<8x16xf32>
    %22 = arith.truncf %21 : vector<8x16xf32> to vector<8x16xbf16>
    %23 = vector.broadcast %19 : vector<8x1xf32> to vector<8x16xf32>
    %24 = arith.mulf %5, %23 : vector<8x16xf32>
    %25 = arith.truncf %24 : vector<8x16xf32> to vector<8x16xbf16>
    %cst_14 = arith.constant dense<0.000000e+00> : vector<8x8xf32>
    %26 = tpu.matmul %22, %25, %cst_14 {dimension_numbers = #tpu.dot_dimension_numbers<[1], [1], [0], [0], [0, 0, 1, 0], [], []>} : vector<8x16xbf16>, vector<8x16xbf16>, vector<8x8xf32> -> vector<8x8xf32>
    %cst_15 = arith.constant 1.000000e+00 : f32
    %27 = vector.broadcast %cst_15 : f32 to vector<8x8xf32>
    %28 = arith.subf %27, %26 : vector<8x8xf32>
    %cst_16 = arith.constant dense<0.000000e+00> : vector<1x8xf32>
    %29 = tpu.matmul %7, %1, %cst_16 {dimension_numbers = #tpu.dot_dimension_numbers<[1], [1], [0], [0], [0, 0, 1, 0], [], []>} : vector<1x16xf32>, vector<8x16xf32>, vector<1x8xf32> -> vector<1x8xf32>
    %cst_17 = arith.constant 0.000000e+00 : f32
    %30 = vector.broadcast %cst_17 : f32 to vector<1x8xf32>
    %31 = arith.cmpf ole, %29, %30 : vector<1x8xf32>
    %cst_18 = arith.constant 9.99999993E-9 : f32
    %32 = vector.broadcast %cst_18 : f32 to vector<1x8xf32>
    %33 = arith.select %31, %32, %29 : vector<1x8xi1>, vector<1x8xf32>
    %cst_19 = arith.constant dense<0.000000e+00> : vector<1xf32>
    %34 = vector.multi_reduction <add>, %33, %cst_19 [1] : vector<1x8xf32> to vector<1xf32>
    %35 = vector.shape_cast %34 : vector<1xf32> to vector<1x1xf32>
    %36 = tpu.reciprocal %35 {approx = true} : vector<1x1xf32> -> vector<1x1xf32>
    %37 = vector.broadcast %36 : vector<1x1xf32> to vector<1x8xf32>
    %38 = arith.mulf %33, %37 : vector<1x8xf32>
    %cst_20 = arith.constant dense<0.000000e+00> : vector<1x8xf32>
    %39 = tpu.matmul %3, %5, %cst_20 {dimension_numbers = #tpu.dot_dimension_numbers<[1], [1], [0], [0], [0, 0, 1, 0], [], []>} : vector<1x16xf32>, vector<8x16xf32>, vector<1x8xf32> -> vector<1x8xf32>
    %cst_21 = arith.constant 0.000000e+00 : f32
    %40 = vector.broadcast %cst_21 : f32 to vector<1x8xf32>
    %41 = arith.cmpf ole, %39, %40 : vector<1x8xf32>
    %cst_22 = arith.constant 9.99999993E-9 : f32
    %42 = vector.broadcast %cst_22 : f32 to vector<1x8xf32>
    %43 = arith.select %41, %42, %39 : vector<1x8xi1>, vector<1x8xf32>
    %cst_23 = arith.constant dense<0.000000e+00> : vector<1xf32>
    %44 = vector.multi_reduction <add>, %43, %cst_23 [1] : vector<1x8xf32> to vector<1xf32>
    %45 = vector.shape_cast %44 : vector<1xf32> to vector<1x1xf32>
    %46 = tpu.reciprocal %45 {approx = true} : vector<1x1xf32> -> vector<1x1xf32>
    %47 = vector.broadcast %46 : vector<1x1xf32> to vector<1x8xf32>
    %48 = arith.mulf %43, %47 : vector<1x8xf32>
    %cst_24 = arith.constant -2.000000e+01 : f32
    %49 = vector.broadcast %cst_24 : f32 to vector<8x8xf32>
    %50 = arith.mulf %49, %28 : vector<8x8xf32>
    %51 = math.exp %50 : vector<8x8xf32>
    %cst_25 = arith.constant 1.250000e-01 : f32
    %52 = vector.broadcast %cst_25 : f32 to vector<1x8xf32>
    %cst_26 = arith.constant dense<0.000000e+00> : vector<1x8xf32>
    %53 = tpu.matmul %52, %51, %cst_26 {dimension_numbers = #tpu.dot_dimension_numbers<[1], [1], [0], [0], [0, 0, 1, 0], [], []>} : vector<1x8xf32>, vector<8x8xf32>, vector<1x8xf32> -> vector<1x8xf32>
    %cst_27 = arith.constant 1.000000e-30 : f32
    %54 = vector.broadcast %cst_27 : f32 to vector<1x8xf32>
    %55 = arith.maximumf %53, %54 : vector<1x8xf32>
    %56 = tpu.reciprocal %55 {approx = true} : vector<1x8xf32> -> vector<1x8xf32>
    %57 = arith.mulf %38, %56 : vector<1x8xf32>
    %cst_28 = arith.constant dense<0.000000e+00> : vector<1x8xf32>
    %58 = tpu.matmul %57, %51, %cst_28 {dimension_numbers = #tpu.dot_dimension_numbers<[1], [0], [0], [1], [0, 0, 1, 1], [], []>} : vector<1x8xf32>, vector<8x8xf32>, vector<1x8xf32> -> vector<1x8xf32>
    %cst_29 = arith.constant 1.000000e-30 : f32
    %59 = vector.broadcast %cst_29 : f32 to vector<1x8xf32>
    %60 = arith.maximumf %58, %59 : vector<1x8xf32>
    %61 = tpu.reciprocal %60 {approx = true} : vector<1x8xf32> -> vector<1x8xf32>
    %62 = arith.mulf %48, %61 : vector<1x8xf32>
    %cst_30 = arith.constant dense<0.000000e+00> : vector<1x8xf32>
    %63 = tpu.matmul %62, %51, %cst_30 {dimension_numbers = #tpu.dot_dimension_numbers<[1], [1], [0], [0], [0, 0, 1, 0], [], []>} : vector<1x8xf32>, vector<8x8xf32>, vector<1x8xf32> -> vector<1x8xf32>
    %cst_31 = arith.constant 1.000000e-30 : f32
    %64 = vector.broadcast %cst_31 : f32 to vector<1x8xf32>
    %65 = arith.maximumf %63, %64 : vector<1x8xf32>
    %66 = tpu.reciprocal %65 {approx = true} : vector<1x8xf32> -> vector<1x8xf32>
    %67 = arith.mulf %38, %66 : vector<1x8xf32>
    %cst_32 = arith.constant dense<0.000000e+00> : vector<1x8xf32>
    %68 = tpu.matmul %67, %51, %cst_32 {dimension_numbers = #tpu.dot_dimension_numbers<[1], [0], [0], [1], [0, 0, 1, 1], [], []>} : vector<1x8xf32>, vector<8x8xf32>, vector<1x8xf32> -> vector<1x8xf32>
    %cst_33 = arith.constant 1.000000e-30 : f32
    %69 = vector.broadcast %cst_33 : f32 to vector<1x8xf32>
    %70 = arith.maximumf %68, %69 : vector<1x8xf32>
    %71 = tpu.reciprocal %70 {approx = true} : vector<1x8xf32> -> vector<1x8xf32>
    %72 = arith.mulf %48, %71 : vector<1x8xf32>
    %cst_34 = arith.constant dense<0.000000e+00> : vector<1x8xf32>
    %73 = tpu.matmul %72, %51, %cst_34 {dimension_numbers = #tpu.dot_dimension_numbers<[1], [1], [0], [0], [0, 0, 1, 0], [], []>} : vector<1x8xf32>, vector<8x8xf32>, vector<1x8xf32> -> vector<1x8xf32>
    %cst_35 = arith.constant 1.000000e-30 : f32
    %74 = vector.broadcast %cst_35 : f32 to vector<1x8xf32>
    %75 = arith.maximumf %73, %74 : vector<1x8xf32>
    %76 = tpu.reciprocal %75 {approx = true} : vector<1x8xf32> -> vector<1x8xf32>
    %77 = arith.mulf %38, %76 : vector<1x8xf32>
    %cst_36 = arith.constant dense<0.000000e+00> : vector<1x8xf32>
    %78 = tpu.matmul %77, %51, %cst_36 {dimension_numbers = #tpu.dot_dimension_numbers<[1], [0], [0], [1], [0, 0, 1, 1], [], []>} : vector<1x8xf32>, vector<8x8xf32>, vector<1x8xf32> -> vector<1x8xf32>
    %cst_37 = arith.constant 1.000000e-30 : f32
    %79 = vector.broadcast %cst_37 : f32 to vector<1x8xf32>
    %80 = arith.maximumf %78, %79 : vector<1x8xf32>
    %81 = tpu.reciprocal %80 {approx = true} : vector<1x8xf32> -> vector<1x8xf32>
    %82 = arith.mulf %48, %81 : vector<1x8xf32>
    %cst_38 = arith.constant dense<0.000000e+00> : vector<1x8xf32>
    %83 = tpu.matmul %82, %51, %cst_38 {dimension_numbers = #tpu.dot_dimension_numbers<[1], [1], [0], [0], [0, 0, 1, 0], [], []>} : vector<1x8xf32>, vector<8x8xf32>, vector<1x8xf32> -> vector<1x8xf32>
    %cst_39 = arith.constant 1.000000e-30 : f32
    %84 = vector.broadcast %cst_39 : f32 to vector<1x8xf32>
    %85 = arith.maximumf %83, %84 : vector<1x8xf32>
    %86 = tpu.reciprocal %85 {approx = true} : vector<1x8xf32> -> vector<1x8xf32>
    %87 = arith.mulf %38, %86 : vector<1x8xf32>
    %cst_40 = arith.constant dense<0.000000e+00> : vector<1x8xf32>
    %88 = tpu.matmul %87, %51, %cst_40 {dimension_numbers = #tpu.dot_dimension_numbers<[1], [0], [0], [1], [0, 0, 1, 1], [], []>} : vector<1x8xf32>, vector<8x8xf32>, vector<1x8xf32> -> vector<1x8xf32>
    %cst_41 = arith.constant 1.000000e-30 : f32
    %89 = vector.broadcast %cst_41 : f32 to vector<1x8xf32>
    %90 = arith.maximumf %88, %89 : vector<1x8xf32>
    %91 = tpu.reciprocal %90 {approx = true} : vector<1x8xf32> -> vector<1x8xf32>
    %92 = arith.mulf %48, %91 : vector<1x8xf32>
    %cst_42 = arith.constant dense<0.000000e+00> : vector<1x8xf32>
    %93 = tpu.matmul %92, %51, %cst_42 {dimension_numbers = #tpu.dot_dimension_numbers<[1], [1], [0], [0], [0, 0, 1, 0], [], []>} : vector<1x8xf32>, vector<8x8xf32>, vector<1x8xf32> -> vector<1x8xf32>
    %cst_43 = arith.constant 1.000000e-30 : f32
    %94 = vector.broadcast %cst_43 : f32 to vector<1x8xf32>
    %95 = arith.maximumf %93, %94 : vector<1x8xf32>
    %96 = tpu.reciprocal %95 {approx = true} : vector<1x8xf32> -> vector<1x8xf32>
    %97 = arith.mulf %38, %96 : vector<1x8xf32>
    %cst_44 = arith.constant dense<0.000000e+00> : vector<1x8xf32>
    %98 = tpu.matmul %97, %51, %cst_44 {dimension_numbers = #tpu.dot_dimension_numbers<[1], [0], [0], [1], [0, 0, 1, 1], [], []>} : vector<1x8xf32>, vector<8x8xf32>, vector<1x8xf32> -> vector<1x8xf32>
    %cst_45 = arith.constant 1.000000e-30 : f32
    %99 = vector.broadcast %cst_45 : f32 to vector<1x8xf32>
    %100 = arith.maximumf %98, %99 : vector<1x8xf32>
    %101 = tpu.reciprocal %100 {approx = true} : vector<1x8xf32> -> vector<1x8xf32>
    %102 = arith.mulf %48, %101 : vector<1x8xf32>
    %103 = arith.mulf %51, %28 : vector<8x8xf32>
    %cst_46 = arith.constant dense<0.000000e+00> : vector<1x8xf32>
    %104 = tpu.matmul %97, %103, %cst_46 {dimension_numbers = #tpu.dot_dimension_numbers<[1], [0], [0], [1], [0, 0, 1, 1], [], []>} : vector<1x8xf32>, vector<8x8xf32>, vector<1x8xf32> -> vector<1x8xf32>
    %cst_47 = arith.constant dense<0.000000e+00> : vector<1x1xf32>
    %105 = tpu.matmul %104, %102, %cst_47 {dimension_numbers = #tpu.dot_dimension_numbers<[1], [1], [0], [0], [0, 0, 1, 0], [], []>} : vector<1x8xf32>, vector<1x8xf32>, vector<1x1xf32> -> vector<1x1xf32>
    %cst_48 = arith.constant 2.000000e+00 : f32
    %106 = vector.broadcast %cst_48 : f32 to vector<1x1xf32>
    %107 = arith.mulf %106, %105 : vector<1x1xf32>
    %cst_49 = arith.constant 2.000000e+00 : f32
    %108 = vector.broadcast %cst_49 : f32 to vector<1x1xf32>
    %109 = arith.subf %108, %107 : vector<1x1xf32>
    %c0_50 = arith.constant 0 : index
    %c0_51 = arith.constant 0 : index
    %c0_52 = arith.constant 0 : index
    %110 = vector.load %arg5[%c0_50, %c0_51, %c0_52] : memref<1x8x16xf32, #tpu.memory_space<vmem>>, vector<1x8x16xf32>
    %111 = vector.shape_cast %110 : vector<1x8x16xf32> to vector<8x16xf32>
    %c0_53 = arith.constant 0 : index
    %c0_54 = arith.constant 0 : index
    %c0_55 = arith.constant 0 : index
    %112 = vector.load %arg6[%c0_53, %c0_54, %c0_55] : memref<1x1x16xf32, #tpu.memory_space<vmem>>, vector<1x1x16xf32>
    %113 = vector.shape_cast %112 : vector<1x1x16xf32> to vector<1x16xf32>
    %114 = arith.mulf %1, %1 : vector<8x16xf32>
    %cst_56 = arith.constant dense<0.000000e+00> : vector<8xf32>
    %115 = vector.multi_reduction <add>, %114, %cst_56 [1] : vector<8x16xf32> to vector<8xf32>
    %116 = vector.shape_cast %115 : vector<8xf32> to vector<8x1xf32>
    %cst_57 = arith.constant 1.000000e-24 : f32
    %117 = vector.broadcast %cst_57 : f32 to vector<8x1xf32>
    %118 = arith.maximumf %116, %117 : vector<8x1xf32>
    %119 = math.rsqrt %118 : vector<8x1xf32>
    %120 = arith.mulf %111, %111 : vector<8x16xf32>
    %cst_58 = arith.constant dense<0.000000e+00> : vector<8xf32>
    %121 = vector.multi_reduction <add>, %120, %cst_58 [1] : vector<8x16xf32> to vector<8xf32>
    %122 = vector.shape_cast %121 : vector<8xf32> to vector<8x1xf32>
    %cst_59 = arith.constant 1.000000e-24 : f32
    %123 = vector.broadcast %cst_59 : f32 to vector<8x1xf32>
    %124 = arith.maximumf %122, %123 : vector<8x1xf32>
    %125 = math.rsqrt %124 : vector<8x1xf32>
    %126 = vector.broadcast %119 : vector<8x1xf32> to vector<8x16xf32>
    %127 = arith.mulf %1, %126 : vector<8x16xf32>
    %128 = arith.truncf %127 : vector<8x16xf32> to vector<8x16xbf16>
    %129 = vector.broadcast %125 : vector<8x1xf32> to vector<8x16xf32>
    %130 = arith.mulf %111, %129 : vector<8x16xf32>
    %131 = arith.truncf %130 : vector<8x16xf32> to vector<8x16xbf16>
    %cst_60 = arith.constant dense<0.000000e+00> : vector<8x8xf32>
    %132 = tpu.matmul %128, %131, %cst_60 {dimension_numbers = #tpu.dot_dimension_numbers<[1], [1], [0], [0], [0, 0, 1, 0], [], []>} : vector<8x16xbf16>, vector<8x16xbf16>, vector<8x8xf32> -> vector<8x8xf32>
    %cst_61 = arith.constant 1.000000e+00 : f32
    %133 = vector.broadcast %cst_61 : f32 to vector<8x8xf32>
    %134 = arith.subf %133, %132 : vector<8x8xf32>
    %cst_62 = arith.constant dense<0.000000e+00> : vector<1x8xf32>
    %135 = tpu.matmul %113, %1, %cst_62 {dimension_numbers = #tpu.dot_dimension_numbers<[1], [1], [0], [0], [0, 0, 1, 0], [], []>} : vector<1x16xf32>, vector<8x16xf32>, vector<1x8xf32> -> vector<1x8xf32>
    %cst_63 = arith.constant 0.000000e+00 : f32
    %136 = vector.broadcast %cst_63 : f32 to vector<1x8xf32>
    %137 = arith.cmpf ole, %135, %136 : vector<1x8xf32>
    %cst_64 = arith.constant 9.99999993E-9 : f32
    %138 = vector.broadcast %cst_64 : f32 to vector<1x8xf32>
    %139 = arith.select %137, %138, %135 : vector<1x8xi1>, vector<1x8xf32>
    %cst_65 = arith.constant dense<0.000000e+00> : vector<1xf32>
    %140 = vector.multi_reduction <add>, %139, %cst_65 [1] : vector<1x8xf32> to vector<1xf32>
    %141 = vector.shape_cast %140 : vector<1xf32> to vector<1x1xf32>
    %142 = tpu.reciprocal %141 {approx = true} : vector<1x1xf32> -> vector<1x1xf32>
    %143 = vector.broadcast %142 : vector<1x1xf32> to vector<1x8xf32>
    %144 = arith.mulf %139, %143 : vector<1x8xf32>
    %cst_66 = arith.constant dense<0.000000e+00> : vector<1x8xf32>
    %145 = tpu.matmul %3, %111, %cst_66 {dimension_numbers = #tpu.dot_dimension_numbers<[1], [1], [0], [0], [0, 0, 1, 0], [], []>} : vector<1x16xf32>, vector<8x16xf32>, vector<1x8xf32> -> vector<1x8xf32>
    %cst_67 = arith.constant 0.000000e+00 : f32
    %146 = vector.broadcast %cst_67 : f32 to vector<1x8xf32>
    %147 = arith.cmpf ole, %145, %146 : vector<1x8xf32>
    %cst_68 = arith.constant 9.99999993E-9 : f32
    %148 = vector.broadcast %cst_68 : f32 to vector<1x8xf32>
    %149 = arith.select %147, %148, %145 : vector<1x8xi1>, vector<1x8xf32>
    %cst_69 = arith.constant dense<0.000000e+00> : vector<1xf32>
    %150 = vector.multi_reduction <add>, %149, %cst_69 [1] : vector<1x8xf32> to vector<1xf32>
    %151 = vector.shape_cast %150 : vector<1xf32> to vector<1x1xf32>
    %152 = tpu.reciprocal %151 {approx = true} : vector<1x1xf32> -> vector<1x1xf32>
    %153 = vector.broadcast %152 : vector<1x1xf32> to vector<1x8xf32>
    %154 = arith.mulf %149, %153 : vector<1x8xf32>
    %cst_70 = arith.constant -2.000000e+01 : f32
    %155 = vector.broadcast %cst_70 : f32 to vector<8x8xf32>
    %156 = arith.mulf %155, %134 : vector<8x8xf32>
    %157 = math.exp %156 : vector<8x8xf32>
    %cst_71 = arith.constant 1.250000e-01 : f32
    %158 = vector.broadcast %cst_71 : f32 to vector<1x8xf32>
    %cst_72 = arith.constant dense<0.000000e+00> : vector<1x8xf32>
    %159 = tpu.matmul %158, %157, %cst_72 {dimension_numbers = #tpu.dot_dimension_numbers<[1], [1], [0], [0], [0, 0, 1, 0], [], []>} : vector<1x8xf32>, vector<8x8xf32>, vector<1x8xf32> -> vector<1x8xf32>
    %cst_73 = arith.constant 1.000000e-30 : f32
    %160 = vector.broadcast %cst_73 : f32 to vector<1x8xf32>
    %161 = arith.maximumf %159, %160 : vector<1x8xf32>
    %162 = tpu.reciprocal %161 {approx = true} : vector<1x8xf32> -> vector<1x8xf32>
    %163 = arith.mulf %144, %162 : vector<1x8xf32>
    %cst_74 = arith.constant dense<0.000000e+00> : vector<1x8xf32>
    %164 = tpu.matmul %163, %157, %cst_74 {dimension_numbers = #tpu.dot_dimension_numbers<[1], [0], [0], [1], [0, 0, 1, 1], [], []>} : vector<1x8xf32>, vector<8x8xf32>, vector<1x8xf32> -> vector<1x8xf32>
    %cst_75 = arith.constant 1.000000e-30 : f32
    %165 = vector.broadcast %cst_75 : f32 to vector<1x8xf32>
    %166 = arith.maximumf %164, %165 : vector<1x8xf32>
    %167 = tpu.reciprocal %166 {approx = true} : vector<1x8xf32> -> vector<1x8xf32>
    %168 = arith.mulf %154, %167 : vector<1x8xf32>
    %cst_76 = arith.constant dense<0.000000e+00> : vector<1x8xf32>
    %169 = tpu.matmul %168, %157, %cst_76 {dimension_numbers = #tpu.dot_dimension_numbers<[1], [1], [0], [0], [0, 0, 1, 0], [], []>} : vector<1x8xf32>, vector<8x8xf32>, vector<1x8xf32> -> vector<1x8xf32>
    %cst_77 = arith.constant 1.000000e-30 : f32
    %170 = vector.broadcast %cst_77 : f32 to vector<1x8xf32>
    %171 = arith.maximumf %169, %170 : vector<1x8xf32>
    %172 = tpu.reciprocal %171 {approx = true} : vector<1x8xf32> -> vector<1x8xf32>
    %173 = arith.mulf %144, %172 : vector<1x8xf32>
    %cst_78 = arith.constant dense<0.000000e+00> : vector<1x8xf32>
    %174 = tpu.matmul %173, %157, %cst_78 {dimension_numbers = #tpu.dot_dimension_numbers<[1], [0], [0], [1], [0, 0, 1, 1], [], []>} : vector<1x8xf32>, vector<8x8xf32>, vector<1x8xf32> -> vector<1x8xf32>
    %cst_79 = arith.constant 1.000000e-30 : f32
    %175 = vector.broadcast %cst_79 : f32 to vector<1x8xf32>
    %176 = arith.maximumf %174, %175 : vector<1x8xf32>
    %177 = tpu.reciprocal %176 {approx = true} : vector<1x8xf32> -> vector<1x8xf32>
    %178 = arith.mulf %154, %177 : vector<1x8xf32>
    %cst_80 = arith.constant dense<0.000000e+00> : vector<1x8xf32>
    %179 = tpu.matmul %178, %157, %cst_80 {dimension_numbers = #tpu.dot_dimension_numbers<[1], [1], [0], [0], [0, 0, 1, 0], [], []>} : vector<1x8xf32>, vector<8x8xf32>, vector<1x8xf32> -> vector<1x8xf32>
    %cst_81 = arith.constant 1.000000e-30 : f32
    %180 = vector.broadcast %cst_81 : f32 to vector<1x8xf32>
    %181 = arith.maximumf %179, %180 : vector<1x8xf32>
    %182 = tpu.reciprocal %181 {approx = true} : vector<1x8xf32> -> vector<1x8xf32>
    %183 = arith.mulf %144, %182 : vector<1x8xf32>
    %cst_82 = arith.constant dense<0.000000e+00> : vector<1x8xf32>
    %184 = tpu.matmul %183, %157, %cst_82 {dimension_numbers = #tpu.dot_dimension_numbers<[1], [0], [0], [1], [0, 0, 1, 1], [], []>} : vector<1x8xf32>, vector<8x8xf32>, vector<1x8xf32> -> vector<1x8xf32>
    %cst_83 = arith.constant 1.000000e-30 : f32
    %185 = vector.broadcast %cst_83 : f32 to vector<1x8xf32>
    %186 = arith.maximumf %184, %185 : vector<1x8xf32>
    %187 = tpu.reciprocal %186 {approx = true} : vector<1x8xf32> -> vector<1x8xf32>
    %188 = arith.mulf %154, %187 : vector<1x8xf32>
    %cst_84 = arith.constant dense<0.000000e+00> : vector<1x8xf32>
    %189 = tpu.matmul %188, %157, %cst_84 {dimension_numbers = #tpu.dot_dimension_numbers<[1], [1], [0], [0], [0, 0, 1, 0], [], []>} : vector<1x8xf32>, vector<8x8xf32>, vector<1x8xf32> -> vector<1x8xf32>
    %cst_85 = arith.constant 1.000000e-30 : f32
    %190 = vector.broadcast %cst_85 : f32 to vector<1x8xf32>
    %191 = arith.maximumf %189, %190 : vector<1x8xf32>
    %192 = tpu.reciprocal %191 {approx = true} : vector<1x8xf32> -> vector<1x8xf32>
    %193 = arith.mulf %144, %192 : vector<1x8xf32>
    %cst_86 = arith.constant dense<0.000000e+00> : vector<1x8xf32>
    %194 = tpu.matmul %193, %157, %cst_86 {dimension_numbers = #tpu.dot_dimension_numbers<[1], [0], [0], [1], [0, 0, 1, 1], [], []>} : vector<1x8xf32>, vector<8x8xf32>, vector<1x8xf32> -> vector<1x8xf32>
    %cst_87 = arith.constant 1.000000e-30 : f32
    %195 = vector.broadcast %cst_87 : f32 to vector<1x8xf32>
    %196 = arith.maximumf %194, %195 : vector<1x8xf32>
    %197 = tpu.reciprocal %196 {approx = true} : vector<1x8xf32> -> vector<1x8xf32>
    %198 = arith.mulf %154, %197 : vector<1x8xf32>
    %cst_88 = arith.constant dense<0.000000e+00> : vector<1x8xf32>
    %199 = tpu.matmul %198, %157, %cst_88 {dimension_numbers = #tpu.dot_dimension_numbers<[1], [1], [0], [0], [0, 0, 1, 0], [], []>} : vector<1x8xf32>, vector<8x8xf32>, vector<1x8xf32> -> vector<1x8xf32>
    %cst_89 = arith.constant 1.000000e-30 : f32
    %200 = vector.broadcast %cst_89 : f32 to vector<1x8xf32>
    %201 = arith.maximumf %199, %200 : vector<1x8xf32>
    %202 = tpu.reciprocal %201 {approx = true} : vector<1x8xf32> -> vector<1x8xf32>
    %203 = arith.mulf %144, %202 : vector<1x8xf32>
    %cst_90 = arith.constant dense<0.000000e+00> : vector<1x8xf32>
    %204 = tpu.matmul %203, %157, %cst_90 {dimension_numbers = #tpu.dot_dimension_numbers<[1], [0], [0], [1], [0, 0, 1, 1], [], []>} : vector<1x8xf32>, vector<8x8xf32>, vector<1x8xf32> -> vector<1x8xf32>
    %cst_91 = arith.constant 1.000000e-30 : f32
    %205 = vector.broadcast %cst_91 : f32 to vector<1x8xf32>
    %206 = arith.maximumf %204, %205 : vector<1x8xf32>
    %207 = tpu.reciprocal %206 {approx = true} : vector<1x8xf32> -> vector<1x8xf32>
    %208 = arith.mulf %154, %207 : vector<1x8xf32>
    %209 = arith.mulf %157, %134 : vector<8x8xf32>
    %cst_92 = arith.constant dense<0.000000e+00> : vector<1x8xf32>
    %210 = tpu.matmul %203, %209, %cst_92 {dimension_numbers = #tpu.dot_dimension_numbers<[1], [0], [0], [1], [0, 0, 1, 1], [], []>} : vector<1x8xf32>, vector<8x8xf32>, vector<1x8xf32> -> vector<1x8xf32>
    %cst_93 = arith.constant dense<0.000000e+00> : vector<1x1xf32>
    %211 = tpu.matmul %210, %208, %cst_93 {dimension_numbers = #tpu.dot_dimension_numbers<[1], [1], [0], [0], [0, 0, 1, 0], [], []>} : vector<1x8xf32>, vector<1x8xf32>, vector<1x1xf32> -> vector<1x1xf32>
    %cst_94 = arith.constant 2.000000e+00 : f32
    %212 = vector.broadcast %cst_94 : f32 to vector<1x1xf32>
    %213 = arith.mulf %212, %211 : vector<1x1xf32>
    %cst_95 = arith.constant 2.000000e+00 : f32
    %214 = vector.broadcast %cst_95 : f32 to vector<1x1xf32>
    %215 = arith.subf %214, %213 : vector<1x1xf32>
    %c0_i32 = arith.constant 0 : i32
    %216 = arith.cmpi eq, %arg1, %c0_i32 : i32
    %217 = arith.extui %216 : i1 to i32
    %c0_i32_96 = arith.constant 0 : i32
    %218 = arith.cmpi ne, %217, %c0_i32_96 : i32
    scf.if %218 {
      %c0_100 = arith.constant 0 : index
      %c0_101 = arith.constant 0 : index
      %225 = vector.load %arg10[%c0_100, %c0_101] : memref<1x1xf32, #tpu.memory_space<vmem>>, vector<1x1xf32>
      tpu.vector_store %arg10[%c0_100, %c0_101], %109 {strides = array<i32>} : memref<1x1xf32, #tpu.memory_space<vmem>>, vector<1x1xf32>,
      %cst_102 = arith.constant 0.000000e+00 : f32
      %226 = vector.broadcast %cst_102 : f32 to vector<1x1xf32>
      %c0_103 = arith.constant 0 : index
      %c0_104 = arith.constant 0 : index
      %227 = vector.load %arg11[%c0_103, %c0_104] : memref<1x1xf32, #tpu.memory_space<vmem>>, vector<1x1xf32>
      tpu.vector_store %arg11[%c0_103, %c0_104], %226 {strides = array<i32>} : memref<1x1xf32, #tpu.memory_space<vmem>>, vector<1x1xf32>,
    } else {
    }
    %c0_i32_97 = arith.constant 0 : i32
    %219 = arith.cmpi sgt, %arg1, %c0_i32_97 : i32
    %220 = arith.extui %219 : i1 to i32
    %c0_i32_98 = arith.constant 0 : i32
    %221 = arith.cmpi ne, %220, %c0_i32_98 : i32
    scf.if %221 {
      %c0_100 = arith.constant 0 : index
      %c0_101 = arith.constant 0 : index
      %225 = vector.load %arg11[%c0_100, %c0_101] : memref<1x1xf32, #tpu.memory_space<vmem>>, vector<1x1xf32>
      %cst_102 = arith.constant 2.500000e+00 : f32
      %226 = vector.broadcast %cst_102 : f32 to vector<1x1xf32>
      %227 = arith.mulf %109, %226 : vector<1x1xf32>
      %228 = math.exp %227 : vector<1x1xf32>
      %cst_103 = arith.constant 2.500000e+00 : f32
      %229 = vector.broadcast %cst_103 : f32 to vector<1x1xf32>
      %230 = arith.mulf %215, %229 : vector<1x1xf32>
      %231 = math.exp %230 : vector<1x1xf32>
      %232 = arith.addf %228, %231 : vector<1x1xf32>
      %233 = arith.addf %225, %232 : vector<1x1xf32>
      %c0_104 = arith.constant 0 : index
      %c0_105 = arith.constant 0 : index
      %234 = vector.load %arg11[%c0_104, %c0_105] : memref<1x1xf32, #tpu.memory_space<vmem>>, vector<1x1xf32>
      tpu.vector_store %arg11[%c0_104, %c0_105], %233 {strides = array<i32>} : memref<1x1xf32, #tpu.memory_space<vmem>>, vector<1x1xf32>,
    } else {
    }
    %c1_i32 = arith.constant 1 : i32
    %222 = arith.cmpi eq, %arg1, %c1_i32 : i32
    %223 = arith.extui %222 : i1 to i32
    %c0_i32_99 = arith.constant 0 : i32
    %224 = arith.cmpi ne, %223, %c0_i32_99 : i32
    scf.if %224 {
      %c0_100 = arith.constant 0 : index
      %c0_101 = arith.constant 0 : index
      %225 = vector.load %arg11[%c0_100, %c0_101] : memref<1x1xf32, #tpu.memory_space<vmem>>, vector<1x1xf32>
      %226 = math.log %225 : vector<1x1xf32>
      %c0_102 = arith.constant 0 : index
      %c0_103 = arith.constant 0 : index
      %227 = vector.load %arg10[%c0_102, %c0_103] : memref<1x1xf32, #tpu.memory_space<vmem>>, vector<1x1xf32>
      %cst_104 = arith.constant 2.500000e+00 : f32
      %228 = vector.broadcast %cst_104 : f32 to vector<1x1xf32>
      %229 = arith.mulf %227, %228 : vector<1x1xf32>
      %230 = arith.subf %226, %229 : vector<1x1xf32>
      %c0_105 = arith.constant 0 : index
      %c0_106 = arith.constant 0 : index
      %c0_107 = arith.constant 0 : index
      %231 = vector.load %arg9[%c0_105, %c0_106, %c0_107] : memref<1x1x1xf32, #tpu.memory_space<vmem>>, vector<1x1x1xf32>
      %232 = vector.shape_cast %231 : vector<1x1x1xf32> to vector<1x1xf32>
      %233 = vector.shape_cast %230 : vector<1x1xf32> to vector<1x1x1xf32>
      tpu.vector_store %arg9[%c0_105, %c0_106, %c0_107], %233 {strides = array<i32>} : memref<1x1x1xf32, #tpu.memory_space<vmem>>, vector<1x1x1xf32>,
    } else {
    }
    return
  }
  func.func @transform_0(%arg0: i32, %arg1: i32, %arg2: memref<2x2xi32, #tpu.memory_space<smem>>) -> (i32, i32, i32) {
    %c0_i32 = arith.constant 0 : i32
    %c0_i32_0 = arith.constant 0 : i32
    %c0_i32_1 = arith.constant 0 : i32
    return %arg0, %c0_i32, %c0_i32_0 : i32, i32, i32
  }
  func.func @transform_1(%arg0: i32, %arg1: i32, %arg2: memref<2x2xi32, #tpu.memory_space<smem>>) -> (i32, i32, i32) {
    %c0_i32 = arith.constant 0 : i32
    %c0_i32_0 = arith.constant 0 : i32
    %c0_i32_1 = arith.constant 0 : i32
    return %arg0, %c0_i32, %c0_i32_0 : i32, i32, i32
  }
  func.func @transform_2(%arg0: i32, %arg1: i32, %arg2: memref<2x2xi32, #tpu.memory_space<smem>>) -> (i32, i32, i32) {
    %0 = arith.index_cast %arg1 : i32 to index
    %1 = arith.index_cast %arg0 : i32 to index
    %2 = memref.load %arg2[%0, %1] : memref<2x2xi32, #tpu.memory_space<smem>>
    %c0_i32 = arith.constant 0 : i32
    %c0_i32_0 = arith.constant 0 : i32
    %c0_i32_1 = arith.constant 0 : i32
    return %2, %c0_i32, %c0_i32_0 : i32, i32, i32
  }
  func.func @transform_3(%arg0: i32, %arg1: i32, %arg2: memref<2x2xi32, #tpu.memory_space<smem>>) -> (i32, i32, i32) {
    %0 = arith.index_cast %arg1 : i32 to index
    %1 = arith.index_cast %arg0 : i32 to index
    %2 = memref.load %arg2[%0, %1] : memref<2x2xi32, #tpu.memory_space<smem>>
    %c0_i32 = arith.constant 0 : i32
    %c0_i32_0 = arith.constant 0 : i32
    %c0_i32_1 = arith.constant 0 : i32
    return %2, %c0_i32, %c0_i32_0 : i32, i32, i32
  }
  func.func @transform_4(%arg0: i32, %arg1: i32, %arg2: memref<2x2xi32, #tpu.memory_space<smem>>) -> (i32, i32, i32) {
    %0 = arith.index_cast %arg1 : i32 to index
    %1 = arith.index_cast %arg0 : i32 to index
    %2 = memref.load %arg2[%0, %1] : memref<2x2xi32, #tpu.memory_space<smem>>
    %c0_i32 = arith.constant 0 : i32
    %c0_i32_0 = arith.constant 0 : i32
    %c0_i32_1 = arith.constant 0 : i32
    return %2, %c0_i32, %c0_i32_0 : i32, i32, i32
  }
  func.func @transform_5(%arg0: i32, %arg1: i32, %arg2: memref<2x2xi32, #tpu.memory_space<smem>>) -> (i32, i32, i32) {
    %0 = arith.index_cast %arg1 : i32 to index
    %1 = arith.index_cast %arg0 : i32 to index
    %2 = memref.load %arg2[%0, %1] : memref<2x2xi32, #tpu.memory_space<smem>>
    %c0_i32 = arith.constant 0 : i32
    %c0_i32_0 = arith.constant 0 : i32
    %c0_i32_1 = arith.constant 0 : i32
    return %2, %c0_i32, %c0_i32_0 : i32, i32, i32
  }
  func.func @transform_6(%arg0: i32, %arg1: i32, %arg2: memref<2x2xi32, #tpu.memory_space<smem>>) -> (i32, i32, i32) {
    %c0_i32 = arith.constant 0 : i32
    %c0_i32_0 = arith.constant 0 : i32
    %c0_i32_1 = arith.constant 0 : i32
    return %arg0, %c0_i32, %c0_i32_0 : i32, i32, i32
  }
}

</mosaic_0001>

<llo_original>
// kernel: rosa_forward.5
$region0: #{rosa_forward.5}
  #allocation0 [shape = 'u32[]', space=smem, size = 0x4, offset = 0x4, fixed_abs, tag = 'smem constant byte address 0x4 - core index']
  #allocation1 [shape = 'u32[144,128]{1,0:T(1,128)}', space=vmem, size = 0x12000, scoped, tag = 'internal scratch']
  %s0 = inlined_call_operand.vmem [shape: f32[32,32], index: 0, kind: input, shape index: {}]
  %s1 = inlined_call_operand.vmem [shape: f32[32,32], index: 1, kind: input, shape index: {}]
  %s2 = inlined_call_operand.vmem [shape: f32[32,32], index: 2, kind: input, shape index: {}]
  %s3 = inlined_call_operand.vmem [shape: f32[1,32], index: 3, kind: input, shape index: {}]
  %s4 = inlined_call_operand.vmem [shape: f32[32,32], index: 4, kind: output, shape index: {}]
  %s5 = sld [smem:[#allocation0]]
  $region49: #{rosa_forward.5} parent=0
    _
  %s7 = ssub.s32 1, %s5
  %s8 = scalar_select 0, %s7, %s5
  loop: start=0, step=1, limit=4
  $region2: #{rosa_forward.5} parent=0 // loop_pre_header
    _
  $region3: #{rosa_forward.5} parent=0 // loop_header
    %s10 = sphi 0, %s14
    %p11 = scmp.ge.s32.totalorder %s10, 4
    %s20 = sphi 0, %s22
    %s23 = sphi 0, %s20
    %s24 = sphi 0, %s23
    %s40 = sphi 0, %s24
    %s44 = sphi 0, %s44
    %s46 = sphi 0, %s44
    %s47 = sphi 0, %s46
    %s61 = sphi 0, %s47
    %s65 = sphi 0, %s65
    %s67 = sphi 0, %s65
    %s68 = sphi 0, %s67
    %s82 = sphi 0, %s68
    %s86 = sphi 0, %s86
    %s88 = sphi 0, %s86
    %s89 = sphi 0, %s88
    %s103 = sphi 0, %s89
    %s109 = sphi 0, %s111
    %s112 = sphi 0, %s109
    %s113 = sphi 0, %s112
    %s129 = sphi 0, %s113
  $region4: #{rosa_forward.5} parent=0 // loop_header_branch
    %13 = sbr.rel (%p11) target = $region8
  $region5: #{rosa_forward.5} parent=0 // loop_body
    %s15 = ssub.s32 %s10, 1
    %s16 = ssub.s32 %s10, 2
    %s17 = sadd.s32 %s10, 1
    %s18 = ssub.s32 %s10, %s17
    %p19 = scmp.eq.s32.totalorder %s18, 0
    %s21 = sadd.s32 %s20, 1
    %s22 = scalar_select %p19, %s20, %s21
    %p25 = pneg %p19
    %p26 = scmp.eq.s32.totalorder %s10, 1
    %p27 = por %p25, %p26
    %p28 = scmp.ne.s32.totalorder %s20, %s23
    %p29 = scmp.eq.s32.totalorder %s10, 0
    %p30 = por %p28, %p29
    %p31 = scmp.ne.s32.totalorder %s20, %s23
    %p32 = scmp.eq.s32.totalorder %s15, 1
    %p33 = por %p31, %p32
    %p34 = scmp.ne.s32.totalorder %s23, %s24
    %p35 = scmp.eq.s32.totalorder %s15, 0
    %p36 = por %p34, %p35
    %p37 = scmp.ne.s32.totalorder %s23, %s24
    %p38 = scmp.eq.s32.totalorder %s16, 1
    %p39 = por %p37, %p38
    %p41 = scmp.ne.s32.totalorder %s24, %s40
    %p42 = scmp.eq.s32.totalorder %s16, 0
    %p43 = por %p41, %p42
    %s45 = sadd.s32 %s44, 1
    %p48 = scmp.eq.s32.totalorder %s10, 1
    %p49 = scmp.ne.s32.totalorder %s44, %s46
    %p50 = scmp.eq.s32.totalorder %s10, 0
    %p51 = por %p49, %p50
    %p52 = scmp.ne.s32.totalorder %s44, %s46
    %p53 = scmp.eq.s32.totalorder %s15, 1
    %p54 = por %p52, %p53
    %p55 = scmp.ne.s32.totalorder %s46, %s47
    %p56 = scmp.eq.s32.totalorder %s15, 0
    %p57 = por %p55, %p56
    %p58 = scmp.ne.s32.totalorder %s46, %s47
    %p59 = scmp.eq.s32.totalorder %s16, 1
    %p60 = por %p58, %p59
    %p62 = scmp.ne.s32.totalorder %s47, %s61
    %p63 = scmp.eq.s32.totalorder %s16, 0
    %p64 = por %p62, %p63
    %s66 = sadd.s32 %s65, 1
    %p69 = scmp.eq.s32.totalorder %s10, 1
    %p70 = scmp.ne.s32.totalorder %s65, %s67
    %p71 = scmp.eq.s32.totalorder %s10, 0
    %p72 = por %p70, %p71
    %p73 = scmp.ne.s32.totalorder %s65, %s67
    %p74 = scmp.eq.s32.totalorder %s15, 1
    %p75 = por %p73, %p74
    %p76 = scmp.ne.s32.totalorder %s67, %s68
    %p77 = scmp.eq.s32.totalorder %s15, 0
    %p78 = por %p76, %p77
    %p79 = scmp.ne.s32.totalorder %s67, %s68
    %p80 = scmp.eq.s32.totalorder %s16, 1
    %p81 = por %p79, %p80
    %p83 = scmp.ne.s32.totalorder %s68, %s82
    %p84 = scmp.eq.s32.totalorder %s16, 0
    %p85 = por %p83, %p84
    %s87 = sadd.s32 %s86, 1
    %p90 = scmp.eq.s32.totalorder %s10, 1
    %p91 = scmp.ne.s32.totalorder %s86, %s88
    %p92 = scmp.eq.s32.totalorder %s10, 0
    %p93 = por %p91, %p92
    %p94 = scmp.ne.s32.totalorder %s86, %s88
    %p95 = scmp.eq.s32.totalorder %s15, 1
    %p96 = por %p94, %p95
    %p97 = scmp.ne.s32.totalorder %s88, %s89
    %p98 = scmp.eq.s32.totalorder %s15, 0
    %p99 = por %p97, %p98
    %p100 = scmp.ne.s32.totalorder %s88, %s89
    %p101 = scmp.eq.s32.totalorder %s16, 1
    %p102 = por %p100, %p101
    %p104 = scmp.ne.s32.totalorder %s89, %s103
    %p105 = scmp.eq.s32.totalorder %s16, 0
    %p106 = por %p104, %p105
    %s107 = ssub.s32 %s10, %s17
    %p108 = scmp.eq.s32.totalorder %s107, 0
    %s110 = sadd.s32 %s109, 1
    %s111 = scalar_select %p108, %s109, %s110
    %p114 = pneg %p108
    %p115 = scmp.eq.s32.totalorder %s10, 1
    %p116 = por %p114, %p115
    %p117 = scmp.ne.s32.totalorder %s109, %s112
    %p118 = scmp.eq.s32.totalorder %s10, 0
    %p119 = por %p117, %p118
    %p120 = scmp.ne.s32.totalorder %s109, %s112
    %p121 = scmp.eq.s32.totalorder %s15, 1
    %p122 = por %p120, %p121
    %p123 = scmp.ne.s32.totalorder %s112, %s113
    %p124 = scmp.eq.s32.totalorder %s15, 0
    %p125 = por %p123, %p124
    %p126 = scmp.ne.s32.totalorder %s112, %s113
    %p127 = scmp.eq.s32.totalorder %s16, 1
    %p128 = por %p126, %p127
    %p130 = scmp.ne.s32.totalorder %s113, %s129
    %p131 = scmp.eq.s32.totalorder %s16, 0
    %p132 = por %p130, %p131
    %p133 = scmp.le.s32.totalorder 1, %s10
    %p134 = scmp.lt.s32.totalorder %s10, 3
    %p135 = pnand %p133, %p134
    %p136 = pneg %p135
    // Predicated region
    $region9: #{rosa_forward.5} parent=5 // pred_check
      _
    $region10: #{rosa_forward.5} parent=5 // pred_check_branch
      %138 = sbr.rel (%p135) target = $region12
    $region11: #{rosa_forward.5} parent=5 // pred_region
      %s139 = ssub.s32 %s10, 1
      // Predicated region
      $region13: #{rosa_forward.5} parent=11 // pred_check
        %p140 = pneg %p57
      $region14: #{rosa_forward.5} parent=11 // pred_check_branch
        %142 = sbr.rel (%p140) target = $region16
      $region15: #{rosa_forward.5} parent=11 // pred_region
        _
      $region16: #{rosa_forward.5} parent=11 // pred_fallthru
        _
      // Predicated region
      $region17: #{rosa_forward.5} parent=11 // pred_check
        %p143 = pneg %p78
      $region18: #{rosa_forward.5} parent=11 // pred_check_branch
        %145 = sbr.rel (%p143) target = $region20
      $region19: #{rosa_forward.5} parent=11 // pred_region
        _
      $region20: #{rosa_forward.5} parent=11 // pred_fallthru
        _
      // Predicated region
      $region21: #{rosa_forward.5} parent=11 // pred_check
        %p146 = pneg %p99
      $region22: #{rosa_forward.5} parent=11 // pred_check_branch
        %148 = sbr.rel (%p146) target = $region24
      $region23: #{rosa_forward.5} parent=11 // pred_region
        _
      $region24: #{rosa_forward.5} parent=11 // pred_fallthru
        _
    $region12: #{rosa_forward.5} parent=5 // pred_fallthru
      _
    %p149 = scmp.lt.s32.totalorder %s10, 2
    // Predicated region
    $region25: #{rosa_forward.5} parent=5 // pred_check
      %p150 = pneg %p149
    $region26: #{rosa_forward.5} parent=5 // pred_check_branch
      %152 = sbr.rel (%p150) target = $region28
    $region27: #{rosa_forward.5} parent=5 // pred_region
      // Predicated region
      $region29: #{rosa_forward.5} parent=27 // pred_check
        %p153 = pneg %p30
      $region30: #{rosa_forward.5} parent=27 // pred_check_branch
        %155 = sbr.rel (%p153) target = $region32
      $region31: #{rosa_forward.5} parent=27 // pred_region
        %s156 = smul.u32 2, %s10
        %p157 = scmp.lt.s32.totalorder %s156, 3
        %s158 = scalar_select %p157, %s156, 3
        %s159 = smul.addr %s158, 8
        %s160 = scalar_lea.vmem %s0, %s159
        %s161 = smul.u32 2, %s10
      $region32: #{rosa_forward.5} parent=27 // pred_fallthru
        _
    $region28: #{rosa_forward.5} parent=5 // pred_fallthru
      _
    %p162 = scmp.le.s32.totalorder 1, %s10
    %p163 = scmp.lt.s32.totalorder %s10, 3
    %p164 = pnand %p162, %p163
    %p165 = pneg %p164
    // Predicated region
    $region33: #{rosa_forward.5} parent=5 // pred_check
      _
    $region34: #{rosa_forward.5} parent=5 // pred_check_branch
      %167 = sbr.rel (%p164) target = $region36
    $region35: #{rosa_forward.5} parent=5 // pred_region
      %s168 = ssub.s32 %s10, 1
      %s169 = smul.u32 2, %s15
      %p170 = scmp.lt.s32.totalorder %s169, 3
      %s171 = scalar_select %p170, %s169, 3
      %s172 = smul.addr %s171, 8
      %s173 = scalar_lea.vmem %s0, %s172
      %p174 = pneg %p36
      %p175 = pneg %p33
      %p176 = pneg %p57
      %p177 = pneg %p54
      %p178 = pneg %p78
      %p179 = pneg %p75
      %p180 = pneg %p99
      %p181 = pneg %p96
      %p182 = pneg %p125
      %p183 = pneg %p122
      %s184 = smul.u32 2, %s15
      %p185 = scmp.lt.s32.totalorder %s184, 3
      %s186 = scalar_select %p185, %s184, 3
      %s187 = smul.addr %s186, 8
      %s188 = scalar_lea.vmem %s4, %s187
      %s189 = smul.u32 2, %s15
      %p190 = scmp.lt.s32.totalorder %s189, 3
      %s191 = scalar_select %p190, %s189, 3
      %s192 = smul.addr %s191, 8
      %s193 = scalar_lea.vmem %s0, %s192
      %s194 = smul.u32 2, %s15
      %s195 = smul.u32 2, %s15
      %p196 = scmp.lt.s32.totalorder %s195, 3
      %s197 = scalar_select %p196, %s195, 3
      %s198 = smul.addr %s197, 8
      %s199 = scalar_lea.vmem %s4, %s198
      %s200 = smul.u32 2, %s15
      %v202 = vld [vmem:[%s1] sm:$0xff]
      %v203 = vld [vmem:[%s1 + $0x8] sm:$0xff]
      %v204 = vld [vmem:[%s1 + $0x10] sm:$0xff]
      %v205 = vld [vmem:[%s1 + $0x18] sm:$0xff]
      %v206 = vpack.c.bf16 %v203, %v202
      %v207 = vpack.c.bf16 %v205, %v204
      %v208 = vld [vmem:[%s2] sm:$0xff]
      %v209 = vld [vmem:[%s2 + $0x8] sm:$0xff]
      %v210 = vld [vmem:[%s2 + $0x10] sm:$0xff]
      %v211 = vld [vmem:[%s2 + $0x18] sm:$0xff]
      %v212 = vpack.c.bf16 %v209, %v208
      %v213 = vpack.c.bf16 %v211, %v210
      %vm214 = vcmask 261120
      %v216 = vsel %vm214, %v206, 0
      %v219 = vsel %vm214, %v207, 0
      %221 = vmatprep.subr.bf16.mxu0 0
      %222 = vmatpush1.bf16.msra.mxu0 %v212
      %223 = vmatprep.subr.bf16.mxu0 0
      %224 = vmatpush1.bf16.msra.mxu0 %v213
      %225 = vmatprep.subr.bf16.mxu0 0
      %226 = vmatpush1.bf16.msra.mxu0 0
      %227 = vmatprep.subr.bf16.mxu0 0
      %228 = vmatpush1.bf16.msra.mxu0 0
      %229 = vmatprep.subr.bf16.mxu0 0
      %230 = vmatpush1.bf16.msra.mxu0 0
      %231 = vmatprep.subr.bf16.mxu0 0
      %232 = vmatpush1.bf16.msra.mxu0 0
      %233 = vmatprep.subr.bf16.mxu0 0
      %234 = vmatpush1.bf16.msra.mxu0 0
      %235 = vmatprep.subr.bf16.mxu0 0
      %236 = vmatpush1.bf16.msra.mxu0 0
      %237 = vmatprep.subr.bf16.mxu0 0
      %238 = vmatpush1.bf16.msra.mxu0 0
      %239 = vmatprep.subr.bf16.mxu0 0
      %240 = vmatpush1.bf16.msra.mxu0 0
      %241 = vmatprep.subr.bf16.mxu0 0
      %242 = vmatpush1.bf16.msra.mxu0 0
      %243 = vmatprep.subr.bf16.mxu0 0
      %244 = vmatpush1.bf16.msra.mxu0 0
      %245 = vmatprep.subr.bf16.mxu0 0
      %246 = vmatpush1.bf16.msra.mxu0 0
      %247 = vmatprep.subr.bf16.mxu0 0
      %248 = vmatpush1.bf16.msra.mxu0 0
      %249 = vmatprep.subr.bf16.mxu0 0
      %250 = vmatpush1.bf16.msra.mxu0 0
      %251 = vmatprep.subr.bf16.mxu0 0
      %252 = vmatpush1.bf16.msra.mxu0 0
      %253 = vmatprep.mubr.bf16.mxu0 0
      %254 = vmatmul.mubr.bf16.gmra.mrb[0].mxu0 %v216
      %v255 = vpop.f32.mrb[0].mxu0
      %v256 = vadd.f32 0.0, %v255
      %v257 = vpop.f32.mrb[0].mxu0
      %v258 = vpop.f32.mrb[0].mxu0
      %v259 = vadd.f32 0.0, %v258
      %v260 = vpop.f32.mrb[0].mxu0
      %261 = vmatprep.mubr.bf16.mxu0 0
      %262 = vmatmul.mubr.bf16.gmra.mrb[0].mxu0 %v219
      %v263 = vpop.f32.mrb[0].mxu0
      %v264 = vadd.f32 0.0, %v263
      %v265 = vpop.f32.mrb[0].mxu0
      %v266 = vpop.f32.mrb[0].mxu0
      %v267 = vadd.f32 0.0, %v266
      %v268 = vpop.f32.mrb[0].mxu0
      %269 = vdwg.mxu0
      %v270 = vld [vmem:[%s193] sm:$0xff]
      %v271 = vld [vmem:[%s193 + $0x8] sm:$0xff]
      %v272 = vpack.c.bf16 %v271, %v270
      %v273 = vpack.c.bf16 %v259, %v256
      %v274 = vpack.c.bf16 %v267, %v264
      %v275 = vld [vmem:[%s3] sm:$0x1]
      %v277 = vlaneseq
      %v278 = vshrl.u32 %v277, 7
      %v279 = vsub.s32 0, %v278
      %v280 = vrot.slane %v275, %v279
      %v283 = vsel %vm214, %v272, 0
      %285 = vmatprep.subr.bf16.mxu0 0
      %286 = vmatpush1.bf16.msra.mxu0 %v273
      %287 = vmatprep.subr.bf16.mxu0 0
      %288 = vmatpush1.bf16.msra.mxu0 %v274
      %289 = vmatprep.subr.bf16.mxu0 0
      %290 = vmatpush1.bf16.msra.mxu0 0
      %291 = vmatprep.subr.bf16.mxu0 0
      %292 = vmatpush1.bf16.msra.mxu0 0
      %293 = vmatprep.subr.bf16.mxu0 0
      %294 = vmatpush1.bf16.msra.mxu0 0
      %295 = vmatprep.subr.bf16.mxu0 0
      %296 = vmatpush1.bf16.msra.mxu0 0
      %297 = vmatprep.subr.bf16.mxu0 0
      %298 = vmatpush1.bf16.msra.mxu0 0
      %299 = vmatprep.subr.bf16.mxu0 0
      %300 = vmatpush1.bf16.msra.mxu0 0
      %301 = vmatprep.subr.bf16.mxu0 0
      %302 = vmatpush1.bf16.msra.mxu0 0
      %303 = vmatprep.subr.bf16.mxu0 0
      %304 = vmatpush1.bf16.msra.mxu0 0
      %305 = vmatprep.subr.bf16.mxu0 0
      %306 = vmatpush1.bf16.msra.mxu0 0
      %307 = vmatprep.subr.bf16.mxu0 0
      %308 = vmatpush1.bf16.msra.mxu0 0
      %309 = vmatprep.subr.bf16.mxu0 0
      %310 = vmatpush1.bf16.msra.mxu0 0
      %311 = vmatprep.subr.bf16.mxu0 0
      %312 = vmatpush1.bf16.msra.mxu0 0
      %313 = vmatprep.subr.bf16.mxu0 0
      %314 = vmatpush1.bf16.msra.mxu0 0
      %315 = vmatprep.subr.bf16.mxu0 0
      %316 = vmatpush1.bf16.msra.mxu0 0
      %317 = vmatprep.mubr.bf16.mxu0 0
      %318 = vmatmul.mubr.bf16.gmra.mrb[0].mxu0 %v283
      %v319 = vpop.f32.mrb[0].mxu0
      %v320 = vadd.f32 %v280, %v319
      %v321 = vpop.f32.mrb[0].mxu0
      %v322 = vpop.f32.mrb[0].mxu0
      %v323 = vadd.f32 %v280, %v322
      %v324 = vpop.f32.mrb[0].mxu0
      %325 = vdwg.mxu0
      %v326 = vmax.f32 %v320, 0.0
      %v327 = vmax.f32 %v323, 0.0
      %328 = vst.msk [vmem:[%s199] sm:$0xff] %vm214, %v326
      %329 = vst.msk [vmem:[%s199 + $0x8] sm:$0xff] %vm214, %v327
      %s330 = smul.u32 2, %s15
      %p331 = scmp.lt.s32.totalorder %s330, 3
      %s332 = scalar_select %p331, %s330, 3
      %s333 = smul.addr %s332, 8
      %s334 = scalar_lea.vmem %s4, %s333
      // Predicated region
      $region37: #{rosa_forward.5} parent=35 // pred_check
        %p335 = pneg %p122
      $region38: #{rosa_forward.5} parent=35 // pred_check_branch
        %337 = sbr.rel (%p335) target = $region40
      $region39: #{rosa_forward.5} parent=35 // pred_region
        %s338 = smul.u32 2, %s15
      $region40: #{rosa_forward.5} parent=35 // pred_fallthru
        _
    $region36: #{rosa_forward.5} parent=5 // pred_fallthru
      _
    %p339 = scmp.le.s32.totalorder 2, %s10
    // Predicated region
    $region41: #{rosa_forward.5} parent=5 // pred_check
      %p340 = pneg %p339
    $region42: #{rosa_forward.5} parent=5 // pred_check_branch
      %342 = sbr.rel (%p340) target = $region44
    $region43: #{rosa_forward.5} parent=5 // pred_region
      %s343 = ssub.s32 %s10, 2
      // Predicated region
      $region45: #{rosa_forward.5} parent=43 // pred_check
        %p344 = pneg %p128
      $region46: #{rosa_forward.5} parent=43 // pred_check_branch
        %346 = sbr.rel (%p344) target = $region48
      $region47: #{rosa_forward.5} parent=43 // pred_region
        %s347 = smul.u32 2, %s16
        %p348 = scmp.lt.s32.totalorder %s347, 3
        %s349 = scalar_select %p348, %s347, 3
        %s350 = smul.addr %s349, 8
        %s351 = scalar_lea.vmem %s4, %s350
      $region48: #{rosa_forward.5} parent=43 // pred_fallthru
        _
    $region44: #{rosa_forward.5} parent=5 // pred_fallthru
      _
  $region6: #{rosa_forward.5} parent=0 // loop_footer
    %s14 = sadd.s32 1, %s10
  $region7: #{rosa_forward.5} parent=0 // loop_footer_branch
    %9 = sbr.rel target = $region3
  $region8: #{rosa_forward.5} parent=0 // loop_exit
    _

// kernel: rosa_forward.7
$region0: #{rosa_forward.7}
  #allocation0 [shape = 'u32[]', space=smem, size = 0x4, offset = 0x4, fixed_abs, tag = 'smem constant byte address 0x4 - core index']
  #allocation1 [shape = 'u32[144,128]{1,0:T(1,128)}', space=vmem, size = 0x12000, scoped, tag = 'internal scratch']
  %s0 = inlined_call_operand.vmem [shape: f32[32,16], index: 0, kind: input, shape index: {}]
  %s1 = inlined_call_operand.vmem [shape: f32[16,16], index: 1, kind: input, shape index: {}]
  %s2 = inlined_call_operand.vmem [shape: f32[1,16], index: 2, kind: input, shape index: {}]
  %s3 = inlined_call_operand.vmem [shape: f32[16,16], index: 3, kind: input, shape index: {}]
  %s4 = inlined_call_operand.vmem [shape: f32[1,16], index: 4, kind: input, shape index: {}]
  %s5 = inlined_call_operand.vmem [shape: f32[32,16], index: 5, kind: output, shape index: {}]
  %s6 = sld [smem:[#allocation0]]
  $region53: #{rosa_forward.7} parent=0
    _
  %s8 = ssub.s32 1, %s6
  %s9 = scalar_select 0, %s8, %s6
  loop: start=0, step=1, limit=4
  $region2: #{rosa_forward.7} parent=0 // loop_pre_header
    _
  $region3: #{rosa_forward.7} parent=0 // loop_header
    %s11 = sphi 0, %s15
    %p12 = scmp.ge.s32.totalorder %s11, 4
    %s21 = sphi 0, %s23
    %s24 = sphi 0, %s21
    %s25 = sphi 0, %s24
    %s41 = sphi 0, %s25
    %s45 = sphi 0, %s45
    %s47 = sphi 0, %s45
    %s48 = sphi 0, %s47
    %s62 = sphi 0, %s48
    %s66 = sphi 0, %s66
    %s68 = sphi 0, %s66
    %s69 = sphi 0, %s68
    %s83 = sphi 0, %s69
    %s87 = sphi 0, %s87
    %s89 = sphi 0, %s87
    %s90 = sphi 0, %s89
    %s104 = sphi 0, %s90
    %s108 = sphi 0, %s108
    %s110 = sphi 0, %s108
    %s111 = sphi 0, %s110
    %s125 = sphi 0, %s111
    %s131 = sphi 0, %s133
    %s134 = sphi 0, %s131
    %s135 = sphi 0, %s134
    %s151 = sphi 0, %s135
  $region4: #{rosa_forward.7} parent=0 // loop_header_branch
    %14 = sbr.rel (%p12) target = $region8
  $region5: #{rosa_forward.7} parent=0 // loop_body
    %s16 = ssub.s32 %s11, 1
    %s17 = ssub.s32 %s11, 2
    %s18 = sadd.s32 %s11, 1
    %s19 = ssub.s32 %s11, %s18
    %p20 = scmp.eq.s32.totalorder %s19, 0
    %s22 = sadd.s32 %s21, 1
    %s23 = scalar_select %p20, %s21, %s22
    %p26 = pneg %p20
    %p27 = scmp.eq.s32.totalorder %s11, 1
    %p28 = por %p26, %p27
    %p29 = scmp.ne.s32.totalorder %s21, %s24
    %p30 = scmp.eq.s32.totalorder %s11, 0
    %p31 = por %p29, %p30
    %p32 = scmp.ne.s32.totalorder %s21, %s24
    %p33 = scmp.eq.s32.totalorder %s16, 1
    %p34 = por %p32, %p33
    %p35 = scmp.ne.s32.totalorder %s24, %s25
    %p36 = scmp.eq.s32.totalorder %s16, 0
    %p37 = por %p35, %p36
    %p38 = scmp.ne.s32.totalorder %s24, %s25
    %p39 = scmp.eq.s32.totalorder %s17, 1
    %p40 = por %p38, %p39
    %p42 = scmp.ne.s32.totalorder %s25, %s41
    %p43 = scmp.eq.s32.totalorder %s17, 0
    %p44 = por %p42, %p43
    %s46 = sadd.s32 %s45, 1
    %p49 = scmp.eq.s32.totalorder %s11, 1
    %p50 = scmp.ne.s32.totalorder %s45, %s47
    %p51 = scmp.eq.s32.totalorder %s11, 0
    %p52 = por %p50, %p51
    %p53 = scmp.ne.s32.totalorder %s45, %s47
    %p54 = scmp.eq.s32.totalorder %s16, 1
    %p55 = por %p53, %p54
    %p56 = scmp.ne.s32.totalorder %s47, %s48
    %p57 = scmp.eq.s32.totalorder %s16, 0
    %p58 = por %p56, %p57
    %p59 = scmp.ne.s32.totalorder %s47, %s48
    %p60 = scmp.eq.s32.totalorder %s17, 1
    %p61 = por %p59, %p60
    %p63 = scmp.ne.s32.totalorder %s48, %s62
    %p64 = scmp.eq.s32.totalorder %s17, 0
    %p65 = por %p63, %p64
    %s67 = sadd.s32 %s66, 1
    %p70 = scmp.eq.s32.totalorder %s11, 1
    %p71 = scmp.ne.s32.totalorder %s66, %s68
    %p72 = scmp.eq.s32.totalorder %s11, 0
    %p73 = por %p71, %p72
    %p74 = scmp.ne.s32.totalorder %s66, %s68
    %p75 = scmp.eq.s32.totalorder %s16, 1
    %p76 = por %p74, %p75
    %p77 = scmp.ne.s32.totalorder %s68, %s69
    %p78 = scmp.eq.s32.totalorder %s16, 0
    %p79 = por %p77, %p78
    %p80 = scmp.ne.s32.totalorder %s68, %s69
    %p81 = scmp.eq.s32.totalorder %s17, 1
    %p82 = por %p80, %p81
    %p84 = scmp.ne.s32.totalorder %s69, %s83
    %p85 = scmp.eq.s32.totalorder %s17, 0
    %p86 = por %p84, %p85
    %s88 = sadd.s32 %s87, 1
    %p91 = scmp.eq.s32.totalorder %s11, 1
    %p92 = scmp.ne.s32.totalorder %s87, %s89
    %p93 = scmp.eq.s32.totalorder %s11, 0
    %p94 = por %p92, %p93
    %p95 = scmp.ne.s32.totalorder %s87, %s89
    %p96 = scmp.eq.s32.totalorder %s16, 1
    %p97 = por %p95, %p96
    %p98 = scmp.ne.s32.totalorder %s89, %s90
    %p99 = scmp.eq.s32.totalorder %s16, 0
    %p100 = por %p98, %p99
    %p101 = scmp.ne.s32.totalorder %s89, %s90
    %p102 = scmp.eq.s32.totalorder %s17, 1
    %p103 = por %p101, %p102
    %p105 = scmp.ne.s32.totalorder %s90, %s104
    %p106 = scmp.eq.s32.totalorder %s17, 0
    %p107 = por %p105, %p106
    %s109 = sadd.s32 %s108, 1
    %p112 = scmp.eq.s32.totalorder %s11, 1
    %p113 = scmp.ne.s32.totalorder %s108, %s110
    %p114 = scmp.eq.s32.totalorder %s11, 0
    %p115 = por %p113, %p114
    %p116 = scmp.ne.s32.totalorder %s108, %s110
    %p117 = scmp.eq.s32.totalorder %s16, 1
    %p118 = por %p116, %p117
    %p119 = scmp.ne.s32.totalorder %s110, %s111
    %p120 = scmp.eq.s32.totalorder %s16, 0
    %p121 = por %p119, %p120
    %p122 = scmp.ne.s32.totalorder %s110, %s111
    %p123 = scmp.eq.s32.totalorder %s17, 1
    %p124 = por %p122, %p123
    %p126 = scmp.ne.s32.totalorder %s111, %s125
    %p127 = scmp.eq.s32.totalorder %s17, 0
    %p128 = por %p126, %p127
    %s129 = ssub.s32 %s11, %s18
    %p130 = scmp.eq.s32.totalorder %s129, 0
    %s132 = sadd.s32 %s131, 1
    %s133 = scalar_select %p130, %s131, %s132
    %p136 = pneg %p130
    %p137 = scmp.eq.s32.totalorder %s11, 1
    %p138 = por %p136, %p137
    %p139 = scmp.ne.s32.totalorder %s131, %s134
    %p140 = scmp.eq.s32.totalorder %s11, 0
    %p141 = por %p139, %p140
    %p142 = scmp.ne.s32.totalorder %s131, %s134
    %p143 = scmp.eq.s32.totalorder %s16, 1
    %p144 = por %p142, %p143
    %p145 = scmp.ne.s32.totalorder %s134, %s135
    %p146 = scmp.eq.s32.totalorder %s16, 0
    %p147 = por %p145, %p146
    %p148 = scmp.ne.s32.totalorder %s134, %s135
    %p149 = scmp.eq.s32.totalorder %s17, 1
    %p150 = por %p148, %p149
    %p152 = scmp.ne.s32.totalorder %s135, %s151
    %p153 = scmp.eq.s32.totalorder %s17, 0
    %p154 = por %p152, %p153
    %p155 = scmp.le.s32.totalorder 1, %s11
    %p156 = scmp.lt.s32.totalorder %s11, 3
    %p157 = pnand %p155, %p156
    %p158 = pneg %p157
    // Predicated region
    $region9: #{rosa_forward.7} parent=5 // pred_check
      _
    $region10: #{rosa_forward.7} parent=5 // pred_check_branch
      %160 = sbr.rel (%p157) target = $region12
    $region11: #{rosa_forward.7} parent=5 // pred_region
      %s161 = ssub.s32 %s11, 1
      // Predicated region
      $region13: #{rosa_forward.7} parent=11 // pred_check
        %p162 = pneg %p58
      $region14: #{rosa_forward.7} parent=11 // pred_check_branch
        %164 = sbr.rel (%p162) target = $region16
      $region15: #{rosa_forward.7} parent=11 // pred_region
        _
      $region16: #{rosa_forward.7} parent=11 // pred_fallthru
        _
      // Predicated region
      $region17: #{rosa_forward.7} parent=11 // pred_check
        %p165 = pneg %p79
      $region18: #{rosa_forward.7} parent=11 // pred_check_branch
        %167 = sbr.rel (%p165) target = $region20
      $region19: #{rosa_forward.7} parent=11 // pred_region
        _
      $region20: #{rosa_forward.7} parent=11 // pred_fallthru
        _
      // Predicated region
      $region21: #{rosa_forward.7} parent=11 // pred_check
        %p168 = pneg %p100
      $region22: #{rosa_forward.7} parent=11 // pred_check_branch
        %170 = sbr.rel (%p168) target = $region24
      $region23: #{rosa_forward.7} parent=11 // pred_region
        _
      $region24: #{rosa_forward.7} parent=11 // pred_fallthru
        _
      // Predicated region
      $region25: #{rosa_forward.7} parent=11 // pred_check
        %p171 = pneg %p121
      $region26: #{rosa_forward.7} parent=11 // pred_check_branch
        %173 = sbr.rel (%p171) target = $region28
      $region27: #{rosa_forward.7} parent=11 // pred_region
        _
      $region28: #{rosa_forward.7} parent=11 // pred_fallthru
        _
    $region12: #{rosa_forward.7} parent=5 // pred_fallthru
      _
    %p174 = scmp.lt.s32.totalorder %s11, 2
    // Predicated region
    $region29: #{rosa_forward.7} parent=5 // pred_check
      %p175 = pneg %p174
    $region30: #{rosa_forward.7} parent=5 // pred_check_branch
      %177 = sbr.rel (%p175) target = $region32
    $region31: #{rosa_forward.7} parent=5 // pred_region
      // Predicated region
      $region33: #{rosa_forward.7} parent=31 // pred_check
        %p178 = pneg %p31
      $region34: #{rosa_forward.7} parent=31 // pred_check_branch
        %180 = sbr.rel (%p178) target = $region36
      $region35: #{rosa_forward.7} parent=31 // pred_region
        %s181 = smul.u32 2, %s11
        %p182 = scmp.lt.s32.totalorder %s181, 3
        %s183 = scalar_select %p182, %s181, 3
        %s184 = smul.addr %s183, 8
        %s185 = scalar_lea.vmem %s0, %s184
        %s186 = smul.u32 2, %s11
      $region36: #{rosa_forward.7} parent=31 // pred_fallthru
        _
    $region32: #{rosa_forward.7} parent=5 // pred_fallthru
      _
    %p187 = scmp.le.s32.totalorder 1, %s11
    %p188 = scmp.lt.s32.totalorder %s11, 3
    %p189 = pnand %p187, %p188
    %p190 = pneg %p189
    // Predicated region
    $region37: #{rosa_forward.7} parent=5 // pred_check
      _
    $region38: #{rosa_forward.7} parent=5 // pred_check_branch
      %192 = sbr.rel (%p189) target = $region40
    $region39: #{rosa_forward.7} parent=5 // pred_region
      %s193 = ssub.s32 %s11, 1
      %s194 = smul.u32 2, %s16
      %p195 = scmp.lt.s32.totalorder %s194, 3
      %s196 = scalar_select %p195, %s194, 3
      %s197 = smul.addr %s196, 8
      %s198 = scalar_lea.vmem %s0, %s197
      %p199 = pneg %p37
      %p200 = pneg %p34
      %p201 = pneg %p58
      %p202 = pneg %p55
      %p203 = pneg %p79
      %p204 = pneg %p76
      %p205 = pneg %p100
      %p206 = pneg %p97
      %p207 = pneg %p121
      %p208 = pneg %p118
      %p209 = pneg %p147
      %p210 = pneg %p144
      %s211 = smul.u32 2, %s16
      %p212 = scmp.lt.s32.totalorder %s211, 3
      %s213 = scalar_select %p212, %s211, 3
      %s214 = smul.addr %s213, 8
      %s215 = scalar_lea.vmem %s5, %s214
      %s216 = smul.u32 2, %s16
      %p217 = scmp.lt.s32.totalorder %s216, 3
      %s218 = scalar_select %p217, %s216, 3
      %s219 = smul.addr %s218, 8
      %s220 = scalar_lea.vmem %s0, %s219
      %s221 = smul.u32 2, %s16
      %s222 = smul.u32 2, %s16
      %p223 = scmp.lt.s32.totalorder %s222, 3
      %s224 = scalar_select %p223, %s222, 3
      %s225 = smul.addr %s224, 8
      %s226 = scalar_lea.vmem %s5, %s225
      %s227 = smul.u32 2, %s16
      %v229 = vld [vmem:[%s220] sm:$0xff]
      %v230 = vld [vmem:[%s220 + $0x8] sm:$0xff]
      %v231 = vpack.c.bf16 %v230, %v229
      %v232 = vld [vmem:[%s1] sm:$0xff]
      %v233 = vld [vmem:[%s1 + $0x8] sm:$0xff]
      %v234 = vpack.c.bf16 %v233, %v232
      %v235 = vld [vmem:[%s2] sm:$0x1]
      %v237 = vlaneseq
      %v238 = vshrl.u32 %v237, 7
      %v239 = vsub.s32 0, %v238
      %v240 = vrot.slane %v235, %v239
      %vm242 = vcmask 130048
      %v244 = vsel %vm242, %v231, 0
      %246 = vmatprep.subr.bf16.mxu0 0
      %247 = vmatpush1.bf16.msra.mxu0 %v234
      %248 = vmatprep.subr.bf16.mxu0 0
      %249 = vmatpush1.bf16.msra.mxu0 0
      %250 = vmatprep.subr.bf16.mxu0 0
      %251 = vmatpush1.bf16.msra.mxu0 0
      %252 = vmatprep.subr.bf16.mxu0 0
      %253 = vmatpush1.bf16.msra.mxu0 0
      %254 = vmatprep.subr.bf16.mxu0 0
      %255 = vmatpush1.bf16.msra.mxu0 0
      %256 = vmatprep.subr.bf16.mxu0 0
      %257 = vmatpush1.bf16.msra.mxu0 0
      %258 = vmatprep.subr.bf16.mxu0 0
      %259 = vmatpush1.bf16.msra.mxu0 0
      %260 = vmatprep.subr.bf16.mxu0 0
      %261 = vmatpush1.bf16.msra.mxu0 0
      %262 = vmatprep.subr.bf16.mxu0 0
      %263 = vmatpush1.bf16.msra.mxu0 0
      %264 = vmatprep.subr.bf16.mxu0 0
      %265 = vmatpush1.bf16.msra.mxu0 0
      %266 = vmatprep.subr.bf16.mxu0 0
      %267 = vmatpush1.bf16.msra.mxu0 0
      %268 = vmatprep.subr.bf16.mxu0 0
      %269 = vmatpush1.bf16.msra.mxu0 0
      %270 = vmatprep.subr.bf16.mxu0 0
      %271 = vmatpush1.bf16.msra.mxu0 0
      %272 = vmatprep.subr.bf16.mxu0 0
      %273 = vmatpush1.bf16.msra.mxu0 0
      %274 = vmatprep.subr.bf16.mxu0 0
      %275 = vmatpush1.bf16.msra.mxu0 0
      %276 = vmatprep.subr.bf16.mxu0 0
      %277 = vmatpush1.bf16.msra.mxu0 0
      %278 = vmatprep.mubr.bf16.mxu0 0
      %279 = vmatmul.mubr.bf16.gmra.mrb[0].mxu0 %v244
      %v280 = vpop.f32.mrb[0].mxu0
      %v281 = vadd.f32 %v240, %v280
      %v282 = vpop.f32.mrb[0].mxu0
      %v283 = vpop.f32.mrb[0].mxu0
      %v284 = vadd.f32 %v240, %v283
      %v285 = vpop.f32.mrb[0].mxu0
      %286 = vdwg.mxu0
      %v287 = vsel %vm242, %v281, 0.0
      %v288 = vsel %vm242, %v284, 0.0
      %v289 = vadd.f32 %v287, %v288
      %v290 = vrot.slane %v289, 4
      %v291 = vadd.f32 %v289, %v290
      %v292 = vrot.slane %v291, 2
      %v293 = vadd.f32 %v291, %v292
      %v294 = vrot.slane %v293, 1
      %v295 = vadd.f32 %v293, %v294
      %v296 = vrcp.pop 16.0
      %v297 = vmul.f32 %v295, %v296
      %v298 = vsub.f32 %v281, %v297
      %v299 = vsub.f32 %v284, %v297
      %v300 = vmul.f32 %v298, %v298
      %v301 = vmul.f32 %v299, %v299
      %v302 = vsel %vm242, %v300, 0.0
      %v303 = vsel %vm242, %v301, 0.0
      %v304 = vadd.f32 %v302, %v303
      %v305 = vrot.slane %v304, 4
      %v306 = vadd.f32 %v304, %v305
      %v307 = vrot.slane %v306, 2
      %v308 = vadd.f32 %v306, %v307
      %v309 = vrot.slane %v308, 1
      %v310 = vadd.f32 %v308, %v309
      %v311 = vmul.f32 %v310, %v296
      %v312 = vadd.f32 %v311, 1e-05
      %v313 = vrsqrt.pop %v312
      %v314 = vmul.f32 %v298, %v313
      %v315 = vmul.f32 %v299, %v313
      %v316 = vmax.f32 %v314, 0.0
      %v317 = vmax.f32 %v315, 0.0
      %v318 = vpack.c.bf16 %v317, %v316
      %v319 = vld [vmem:[%s3] sm:$0xff]
      %v320 = vld [vmem:[%s3 + $0x8] sm:$0xff]
      %v321 = vpack.c.bf16 %v320, %v319
      %v322 = vld [vmem:[%s4] sm:$0x1]
      %v324 = vlaneseq
      %v325 = vshrl.u32 %v324, 7
      %v326 = vsub.s32 0, %v325
      %v327 = vrot.slane %v322, %v326
      %v330 = vsel %vm242, %v318, 0
      %332 = vmatprep.subr.bf16.mxu0 0
      %333 = vmatpush1.bf16.msra.mxu0 %v321
      %334 = vmatprep.subr.bf16.mxu0 0
      %335 = vmatpush1.bf16.msra.mxu0 0
      %336 = vmatprep.subr.bf16.mxu0 0
      %337 = vmatpush1.bf16.msra.mxu0 0
      %338 = vmatprep.subr.bf16.mxu0 0
      %339 = vmatpush1.bf16.msra.mxu0 0
      %340 = vmatprep.subr.bf16.mxu0 0
      %341 = vmatpush1.bf16.msra.mxu0 0
      %342 = vmatprep.subr.bf16.mxu0 0
      %343 = vmatpush1.bf16.msra.mxu0 0
      %344 = vmatprep.subr.bf16.mxu0 0
      %345 = vmatpush1.bf16.msra.mxu0 0
      %346 = vmatprep.subr.bf16.mxu0 0
      %347 = vmatpush1.bf16.msra.mxu0 0
      %348 = vmatprep.subr.bf16.mxu0 0
      %349 = vmatpush1.bf16.msra.mxu0 0
      %350 = vmatprep.subr.bf16.mxu0 0
      %351 = vmatpush1.bf16.msra.mxu0 0
      %352 = vmatprep.subr.bf16.mxu0 0
      %353 = vmatpush1.bf16.msra.mxu0 0
      %354 = vmatprep.subr.bf16.mxu0 0
      %355 = vmatpush1.bf16.msra.mxu0 0
      %356 = vmatprep.subr.bf16.mxu0 0
      %357 = vmatpush1.bf16.msra.mxu0 0
      %358 = vmatprep.subr.bf16.mxu0 0
      %359 = vmatpush1.bf16.msra.mxu0 0
      %360 = vmatprep.subr.bf16.mxu0 0
      %361 = vmatpush1.bf16.msra.mxu0 0
      %362 = vmatprep.subr.bf16.mxu0 0
      %363 = vmatpush1.bf16.msra.mxu0 0
      %364 = vmatprep.mubr.bf16.mxu0 0
      %365 = vmatmul.mubr.bf16.gmra.mrb[0].mxu0 %v330
      %v366 = vpop.f32.mrb[0].mxu0
      %v367 = vadd.f32 %v327, %v366
      %v368 = vpop.f32.mrb[0].mxu0
      %v369 = vpop.f32.mrb[0].mxu0
      %v370 = vadd.f32 %v327, %v369
      %v371 = vpop.f32.mrb[0].mxu0
      %372 = vdwg.mxu0
      %373 = vst.msk [vmem:[%s226] sm:$0xff] %vm242, %v367
      %374 = vst.msk [vmem:[%s226 + $0x8] sm:$0xff] %vm242, %v370
      %s375 = smul.u32 2, %s16
      %p376 = scmp.lt.s32.totalorder %s375, 3
      %s377 = scalar_select %p376, %s375, 3
      %s378 = smul.addr %s377, 8
      %s379 = scalar_lea.vmem %s5, %s378
      // Predicated region
      $region41: #{rosa_forward.7} parent=39 // pred_check
        %p380 = pneg %p144
      $region42: #{rosa_forward.7} parent=39 // pred_check_branch
        %382 = sbr.rel (%p380) target = $region44
      $region43: #{rosa_forward.7} parent=39 // pred_region
        %s383 = smul.u32 2, %s16
      $region44: #{rosa_forward.7} parent=39 // pred_fallthru
        _
    $region40: #{rosa_forward.7} parent=5 // pred_fallthru
      _
    %p384 = scmp.le.s32.totalorder 2, %s11
    // Predicated region
    $region45: #{rosa_forward.7} parent=5 // pred_check
      %p385 = pneg %p384
    $region46: #{rosa_forward.7} parent=5 // pred_check_branch
      %387 = sbr.rel (%p385) target = $region48
    $region47: #{rosa_forward.7} parent=5 // pred_region
      %s388 = ssub.s32 %s11, 2
      // Predicated region
      $region49: #{rosa_forward.7} parent=47 // pred_check
        %p389 = pneg %p150
      $region50: #{rosa_forward.7} parent=47 // pred_check_branch
        %391 = sbr.rel (%p389) target = $region52
      $region51: #{rosa_forward.7} parent=47 // pred_region
        %s392 = smul.u32 2, %s17
        %p393 = scmp.lt.s32.totalorder %s392, 3
        %s394 = scalar_select %p393, %s392, 3
        %s395 = smul.addr %s394, 8
        %s396 = scalar_lea.vmem %s5, %s395
      $region52: #{rosa_forward.7} parent=47 // pred_fallthru
        _
    $region48: #{rosa_forward.7} parent=5 // pred_fallthru
      _
  $region6: #{rosa_forward.7} parent=0 // loop_footer
    %s15 = sadd.s32 1, %s11
  $region7: #{rosa_forward.7} parent=0 // loop_footer_branch
    %10 = sbr.rel target = $region3
  $region8: #{rosa_forward.7} parent=0 // loop_exit
    _

// kernel: rosa_forward.6
$region0: #{rosa_forward.6}
  #allocation0 [shape = 'u32[]', space=smem, size = 0x4, offset = 0x4, fixed_abs, tag = 'smem constant byte address 0x4 - core index']
  #allocation1 [shape = 'u32[144,128]{1,0:T(1,128)}', space=vmem, size = 0x12000, scoped, tag = 'internal scratch']
  %s0 = inlined_call_operand.vmem [shape: f32[32,32], index: 0, kind: input, shape index: {}]
  %s1 = inlined_call_operand.vmem [shape: f32[32,32], index: 1, kind: input, shape index: {}]
  %s2 = inlined_call_operand.vmem [shape: f32[32,16], index: 2, kind: input, shape index: {}]
  %s3 = inlined_call_operand.vmem [shape: f32[1,16], index: 3, kind: input, shape index: {}]
  %s4 = inlined_call_operand.vmem [shape: f32[32,16], index: 4, kind: output, shape index: {}]
  %s5 = sld [smem:[#allocation0]]
  $region49: #{rosa_forward.6} parent=0
    _
  %s7 = ssub.s32 1, %s5
  %s8 = scalar_select 0, %s7, %s5
  loop: start=0, step=1, limit=4
  $region2: #{rosa_forward.6} parent=0 // loop_pre_header
    _
  $region3: #{rosa_forward.6} parent=0 // loop_header
    %s10 = sphi 0, %s14
    %p11 = scmp.ge.s32.totalorder %s10, 4
    %s20 = sphi 0, %s22
    %s23 = sphi 0, %s20
    %s24 = sphi 0, %s23
    %s40 = sphi 0, %s24
    %s44 = sphi 0, %s44
    %s46 = sphi 0, %s44
    %s47 = sphi 0, %s46
    %s61 = sphi 0, %s47
    %s65 = sphi 0, %s65
    %s67 = sphi 0, %s65
    %s68 = sphi 0, %s67
    %s82 = sphi 0, %s68
    %s86 = sphi 0, %s86
    %s88 = sphi 0, %s86
    %s89 = sphi 0, %s88
    %s103 = sphi 0, %s89
    %s109 = sphi 0, %s111
    %s112 = sphi 0, %s109
    %s113 = sphi 0, %s112
    %s129 = sphi 0, %s113
  $region4: #{rosa_forward.6} parent=0 // loop_header_branch
    %13 = sbr.rel (%p11) target = $region8
  $region5: #{rosa_forward.6} parent=0 // loop_body
    %s15 = ssub.s32 %s10, 1
    %s16 = ssub.s32 %s10, 2
    %s17 = sadd.s32 %s10, 1
    %s18 = ssub.s32 %s10, %s17
    %p19 = scmp.eq.s32.totalorder %s18, 0
    %s21 = sadd.s32 %s20, 1
    %s22 = scalar_select %p19, %s20, %s21
    %p25 = pneg %p19
    %p26 = scmp.eq.s32.totalorder %s10, 1
    %p27 = por %p25, %p26
    %p28 = scmp.ne.s32.totalorder %s20, %s23
    %p29 = scmp.eq.s32.totalorder %s10, 0
    %p30 = por %p28, %p29
    %p31 = scmp.ne.s32.totalorder %s20, %s23
    %p32 = scmp.eq.s32.totalorder %s15, 1
    %p33 = por %p31, %p32
    %p34 = scmp.ne.s32.totalorder %s23, %s24
    %p35 = scmp.eq.s32.totalorder %s15, 0
    %p36 = por %p34, %p35
    %p37 = scmp.ne.s32.totalorder %s23, %s24
    %p38 = scmp.eq.s32.totalorder %s16, 1
    %p39 = por %p37, %p38
    %p41 = scmp.ne.s32.totalorder %s24, %s40
    %p42 = scmp.eq.s32.totalorder %s16, 0
    %p43 = por %p41, %p42
    %s45 = sadd.s32 %s44, 1
    %p48 = scmp.eq.s32.totalorder %s10, 1
    %p49 = scmp.ne.s32.totalorder %s44, %s46
    %p50 = scmp.eq.s32.totalorder %s10, 0
    %p51 = por %p49, %p50
    %p52 = scmp.ne.s32.totalorder %s44, %s46
    %p53 = scmp.eq.s32.totalorder %s15, 1
    %p54 = por %p52, %p53
    %p55 = scmp.ne.s32.totalorder %s46, %s47
    %p56 = scmp.eq.s32.totalorder %s15, 0
    %p57 = por %p55, %p56
    %p58 = scmp.ne.s32.totalorder %s46, %s47
    %p59 = scmp.eq.s32.totalorder %s16, 1
    %p60 = por %p58, %p59
    %p62 = scmp.ne.s32.totalorder %s47, %s61
    %p63 = scmp.eq.s32.totalorder %s16, 0
    %p64 = por %p62, %p63
    %s66 = sadd.s32 %s65, 1
    %p69 = scmp.eq.s32.totalorder %s10, 1
    %p70 = scmp.ne.s32.totalorder %s65, %s67
    %p71 = scmp.eq.s32.totalorder %s10, 0
    %p72 = por %p70, %p71
    %p73 = scmp.ne.s32.totalorder %s65, %s67
    %p74 = scmp.eq.s32.totalorder %s15, 1
    %p75 = por %p73, %p74
    %p76 = scmp.ne.s32.totalorder %s67, %s68
    %p77 = scmp.eq.s32.totalorder %s15, 0
    %p78 = por %p76, %p77
    %p79 = scmp.ne.s32.totalorder %s67, %s68
    %p80 = scmp.eq.s32.totalorder %s16, 1
    %p81 = por %p79, %p80
    %p83 = scmp.ne.s32.totalorder %s68, %s82
    %p84 = scmp.eq.s32.totalorder %s16, 0
    %p85 = por %p83, %p84
    %s87 = sadd.s32 %s86, 1
    %p90 = scmp.eq.s32.totalorder %s10, 1
    %p91 = scmp.ne.s32.totalorder %s86, %s88
    %p92 = scmp.eq.s32.totalorder %s10, 0
    %p93 = por %p91, %p92
    %p94 = scmp.ne.s32.totalorder %s86, %s88
    %p95 = scmp.eq.s32.totalorder %s15, 1
    %p96 = por %p94, %p95
    %p97 = scmp.ne.s32.totalorder %s88, %s89
    %p98 = scmp.eq.s32.totalorder %s15, 0
    %p99 = por %p97, %p98
    %p100 = scmp.ne.s32.totalorder %s88, %s89
    %p101 = scmp.eq.s32.totalorder %s16, 1
    %p102 = por %p100, %p101
    %p104 = scmp.ne.s32.totalorder %s89, %s103
    %p105 = scmp.eq.s32.totalorder %s16, 0
    %p106 = por %p104, %p105
    %s107 = ssub.s32 %s10, %s17
    %p108 = scmp.eq.s32.totalorder %s107, 0
    %s110 = sadd.s32 %s109, 1
    %s111 = scalar_select %p108, %s109, %s110
    %p114 = pneg %p108
    %p115 = scmp.eq.s32.totalorder %s10, 1
    %p116 = por %p114, %p115
    %p117 = scmp.ne.s32.totalorder %s109, %s112
    %p118 = scmp.eq.s32.totalorder %s10, 0
    %p119 = por %p117, %p118
    %p120 = scmp.ne.s32.totalorder %s109, %s112
    %p121 = scmp.eq.s32.totalorder %s15, 1
    %p122 = por %p120, %p121
    %p123 = scmp.ne.s32.totalorder %s112, %s113
    %p124 = scmp.eq.s32.totalorder %s15, 0
    %p125 = por %p123, %p124
    %p126 = scmp.ne.s32.totalorder %s112, %s113
    %p127 = scmp.eq.s32.totalorder %s16, 1
    %p128 = por %p126, %p127
    %p130 = scmp.ne.s32.totalorder %s113, %s129
    %p131 = scmp.eq.s32.totalorder %s16, 0
    %p132 = por %p130, %p131
    %p133 = scmp.le.s32.totalorder 1, %s10
    %p134 = scmp.lt.s32.totalorder %s10, 3
    %p135 = pnand %p133, %p134
    %p136 = pneg %p135
    // Predicated region
    $region9: #{rosa_forward.6} parent=5 // pred_check
      _
    $region10: #{rosa_forward.6} parent=5 // pred_check_branch
      %138 = sbr.rel (%p135) target = $region12
    $region11: #{rosa_forward.6} parent=5 // pred_region
      %s139 = ssub.s32 %s10, 1
      // Predicated region
      $region13: #{rosa_forward.6} parent=11 // pred_check
        %p140 = pneg %p57
      $region14: #{rosa_forward.6} parent=11 // pred_check_branch
        %142 = sbr.rel (%p140) target = $region16
      $region15: #{rosa_forward.6} parent=11 // pred_region
        _
      $region16: #{rosa_forward.6} parent=11 // pred_fallthru
        _
      // Predicated region
      $region17: #{rosa_forward.6} parent=11 // pred_check
        %p143 = pneg %p78
      $region18: #{rosa_forward.6} parent=11 // pred_check_branch
        %145 = sbr.rel (%p143) target = $region20
      $region19: #{rosa_forward.6} parent=11 // pred_region
        _
      $region20: #{rosa_forward.6} parent=11 // pred_fallthru
        _
      // Predicated region
      $region21: #{rosa_forward.6} parent=11 // pred_check
        %p146 = pneg %p99
      $region22: #{rosa_forward.6} parent=11 // pred_check_branch
        %148 = sbr.rel (%p146) target = $region24
      $region23: #{rosa_forward.6} parent=11 // pred_region
        _
      $region24: #{rosa_forward.6} parent=11 // pred_fallthru
        _
    $region12: #{rosa_forward.6} parent=5 // pred_fallthru
      _
    %p149 = scmp.lt.s32.totalorder %s10, 2
    // Predicated region
    $region25: #{rosa_forward.6} parent=5 // pred_check
      %p150 = pneg %p149
    $region26: #{rosa_forward.6} parent=5 // pred_check_branch
      %152 = sbr.rel (%p150) target = $region28
    $region27: #{rosa_forward.6} parent=5 // pred_region
      // Predicated region
      $region29: #{rosa_forward.6} parent=27 // pred_check
        %p153 = pneg %p30
      $region30: #{rosa_forward.6} parent=27 // pred_check_branch
        %155 = sbr.rel (%p153) target = $region32
      $region31: #{rosa_forward.6} parent=27 // pred_region
        %s156 = smul.u32 2, %s10
        %p157 = scmp.lt.s32.totalorder %s156, 3
        %s158 = scalar_select %p157, %s156, 3
        %s159 = smul.addr %s158, 8
        %s160 = scalar_lea.vmem %s0, %s159
        %s161 = smul.u32 2, %s10
      $region32: #{rosa_forward.6} parent=27 // pred_fallthru
        _
    $region28: #{rosa_forward.6} parent=5 // pred_fallthru
      _
    %p162 = scmp.le.s32.totalorder 1, %s10
    %p163 = scmp.lt.s32.totalorder %s10, 3
    %p164 = pnand %p162, %p163
    %p165 = pneg %p164
    // Predicated region
    $region33: #{rosa_forward.6} parent=5 // pred_check
      _
    $region34: #{rosa_forward.6} parent=5 // pred_check_branch
      %167 = sbr.rel (%p164) target = $region36
    $region35: #{rosa_forward.6} parent=5 // pred_region
      %s168 = ssub.s32 %s10, 1
      %s169 = smul.u32 2, %s15
      %p170 = scmp.lt.s32.totalorder %s169, 3
      %s171 = scalar_select %p170, %s169, 3
      %s172 = smul.addr %s171, 8
      %s173 = scalar_lea.vmem %s0, %s172
      %p174 = pneg %p36
      %p175 = pneg %p33
      %p176 = pneg %p57
      %p177 = pneg %p54
      %p178 = pneg %p78
      %p179 = pneg %p75
      %p180 = pneg %p99
      %p181 = pneg %p96
      %p182 = pneg %p125
      %p183 = pneg %p122
      %s184 = smul.u32 2, %s15
      %p185 = scmp.lt.s32.totalorder %s184, 3
      %s186 = scalar_select %p185, %s184, 3
      %s187 = smul.addr %s186, 8
      %s188 = scalar_lea.vmem %s4, %s187
      %s189 = smul.u32 2, %s15
      %p190 = scmp.lt.s32.totalorder %s189, 3
      %s191 = scalar_select %p190, %s189, 3
      %s192 = smul.addr %s191, 8
      %s193 = scalar_lea.vmem %s0, %s192
      %s194 = smul.u32 2, %s15
      %s195 = smul.u32 2, %s15
      %p196 = scmp.lt.s32.totalorder %s195, 3
      %s197 = scalar_select %p196, %s195, 3
      %s198 = smul.addr %s197, 8
      %s199 = scalar_lea.vmem %s4, %s198
      %s200 = smul.u32 2, %s15
      %v202 = vld [vmem:[%s1] sm:$0xff]
      %v203 = vld [vmem:[%s1 + $0x8] sm:$0xff]
      %v204 = vld [vmem:[%s1 + $0x10] sm:$0xff]
      %v205 = vld [vmem:[%s1 + $0x18] sm:$0xff]
      %v206 = vpack.c.bf16 %v203, %v202
      %v207 = vpack.c.bf16 %v205, %v204
      %v208 = vld [vmem:[%s2] sm:$0xff]
      %v209 = vld [vmem:[%s2 + $0x8] sm:$0xff]
      %v210 = vld [vmem:[%s2 + $0x10] sm:$0xff]
      %v211 = vld [vmem:[%s2 + $0x18] sm:$0xff]
      %v212 = vpack.c.bf16 %v209, %v208
      %v213 = vpack.c.bf16 %v211, %v210
      %vm214 = vcmask 261120
      %v216 = vsel %vm214, %v206, 0
      %v219 = vsel %vm214, %v207, 0
      %221 = vmatprep.subr.bf16.mxu0 0
      %222 = vmatpush1.bf16.msra.mxu0 %v212
      %223 = vmatprep.subr.bf16.mxu0 0
      %224 = vmatpush1.bf16.msra.mxu0 %v213
      %225 = vmatprep.subr.bf16.mxu0 0
      %226 = vmatpush1.bf16.msra.mxu0 0
      %227 = vmatprep.subr.bf16.mxu0 0
      %228 = vmatpush1.bf16.msra.mxu0 0
      %229 = vmatprep.subr.bf16.mxu0 0
      %230 = vmatpush1.bf16.msra.mxu0 0
      %231 = vmatprep.subr.bf16.mxu0 0
      %232 = vmatpush1.bf16.msra.mxu0 0
      %233 = vmatprep.subr.bf16.mxu0 0
      %234 = vmatpush1.bf16.msra.mxu0 0
      %235 = vmatprep.subr.bf16.mxu0 0
      %236 = vmatpush1.bf16.msra.mxu0 0
      %237 = vmatprep.subr.bf16.mxu0 0
      %238 = vmatpush1.bf16.msra.mxu0 0
      %239 = vmatprep.subr.bf16.mxu0 0
      %240 = vmatpush1.bf16.msra.mxu0 0
      %241 = vmatprep.subr.bf16.mxu0 0
      %242 = vmatpush1.bf16.msra.mxu0 0
      %243 = vmatprep.subr.bf16.mxu0 0
      %244 = vmatpush1.bf16.msra.mxu0 0
      %245 = vmatprep.subr.bf16.mxu0 0
      %246 = vmatpush1.bf16.msra.mxu0 0
      %247 = vmatprep.subr.bf16.mxu0 0
      %248 = vmatpush1.bf16.msra.mxu0 0
      %249 = vmatprep.subr.bf16.mxu0 0
      %250 = vmatpush1.bf16.msra.mxu0 0
      %251 = vmatprep.subr.bf16.mxu0 0
      %252 = vmatpush1.bf16.msra.mxu0 0
      %253 = vmatprep.mubr.bf16.mxu0 0
      %254 = vmatmul.mubr.bf16.gmra.mrb[0].mxu0 %v216
      %v255 = vpop.f32.mrb[0].mxu0
      %v256 = vadd.f32 0.0, %v255
      %v257 = vpop.f32.mrb[0].mxu0
      %v258 = vpop.f32.mrb[0].mxu0
      %v259 = vadd.f32 0.0, %v258
      %v260 = vpop.f32.mrb[0].mxu0
      %261 = vmatprep.mubr.bf16.mxu0 0
      %262 = vmatmul.mubr.bf16.gmra.mrb[0].mxu0 %v219
      %v263 = vpop.f32.mrb[0].mxu0
      %v264 = vadd.f32 0.0, %v263
      %v265 = vpop.f32.mrb[0].mxu0
      %v266 = vpop.f32.mrb[0].mxu0
      %v267 = vadd.f32 0.0, %v266
      %v268 = vpop.f32.mrb[0].mxu0
      %269 = vdwg.mxu0
      %v270 = vld [vmem:[%s193] sm:$0xff]
      %v271 = vld [vmem:[%s193 + $0x8] sm:$0xff]
      %v272 = vpack.c.bf16 %v271, %v270
      %v273 = vpack.c.bf16 %v259, %v256
      %v274 = vpack.c.bf16 %v267, %v264
      %v275 = vld [vmem:[%s3] sm:$0x1]
      %v277 = vlaneseq
      %v278 = vshrl.u32 %v277, 7
      %v279 = vsub.s32 0, %v278
      %v280 = vrot.slane %v275, %v279
      %v283 = vsel %vm214, %v272, 0
      %285 = vmatprep.subr.bf16.mxu0 0
      %286 = vmatpush1.bf16.msra.mxu0 %v273
      %287 = vmatprep.subr.bf16.mxu0 0
      %288 = vmatpush1.bf16.msra.mxu0 %v274
      %289 = vmatprep.subr.bf16.mxu0 0
      %290 = vmatpush1.bf16.msra.mxu0 0
      %291 = vmatprep.subr.bf16.mxu0 0
      %292 = vmatpush1.bf16.msra.mxu0 0
      %293 = vmatprep.subr.bf16.mxu0 0
      %294 = vmatpush1.bf16.msra.mxu0 0
      %295 = vmatprep.subr.bf16.mxu0 0
      %296 = vmatpush1.bf16.msra.mxu0 0
      %297 = vmatprep.subr.bf16.mxu0 0
      %298 = vmatpush1.bf16.msra.mxu0 0
      %299 = vmatprep.subr.bf16.mxu0 0
      %300 = vmatpush1.bf16.msra.mxu0 0
      %301 = vmatprep.subr.bf16.mxu0 0
      %302 = vmatpush1.bf16.msra.mxu0 0
      %303 = vmatprep.subr.bf16.mxu0 0
      %304 = vmatpush1.bf16.msra.mxu0 0
      %305 = vmatprep.subr.bf16.mxu0 0
      %306 = vmatpush1.bf16.msra.mxu0 0
      %307 = vmatprep.subr.bf16.mxu0 0
      %308 = vmatpush1.bf16.msra.mxu0 0
      %309 = vmatprep.subr.bf16.mxu0 0
      %310 = vmatpush1.bf16.msra.mxu0 0
      %311 = vmatprep.subr.bf16.mxu0 0
      %312 = vmatpush1.bf16.msra.mxu0 0
      %313 = vmatprep.subr.bf16.mxu0 0
      %314 = vmatpush1.bf16.msra.mxu0 0
      %315 = vmatprep.subr.bf16.mxu0 0
      %316 = vmatpush1.bf16.msra.mxu0 0
      %317 = vmatprep.mubr.bf16.mxu0 0
      %318 = vmatmul.mubr.bf16.gmra.mrb[0].mxu0 %v283
      %v319 = vpop.f32.mrb[0].mxu0
      %v320 = vadd.f32 %v280, %v319
      %v321 = vpop.f32.mrb[0].mxu0
      %v322 = vpop.f32.mrb[0].mxu0
      %v323 = vadd.f32 %v280, %v322
      %v324 = vpop.f32.mrb[0].mxu0
      %325 = vdwg.mxu0
      %v326 = vmax.f32 %v320, 0.0
      %v327 = vmax.f32 %v323, 0.0
      %vm328 = vcmask 130048
      %329 = vst.msk [vmem:[%s199] sm:$0xff] %vm328, %v326
      %330 = vst.msk [vmem:[%s199 + $0x8] sm:$0xff] %vm328, %v327
      %s331 = smul.u32 2, %s15
      %p332 = scmp.lt.s32.totalorder %s331, 3
      %s333 = scalar_select %p332, %s331, 3
      %s334 = smul.addr %s333, 8
      %s335 = scalar_lea.vmem %s4, %s334
      // Predicated region
      $region37: #{rosa_forward.6} parent=35 // pred_check
        %p336 = pneg %p122
      $region38: #{rosa_forward.6} parent=35 // pred_check_branch
        %338 = sbr.rel (%p336) target = $region40
      $region39: #{rosa_forward.6} parent=35 // pred_region
        %s339 = smul.u32 2, %s15
      $region40: #{rosa_forward.6} parent=35 // pred_fallthru
        _
    $region36: #{rosa_forward.6} parent=5 // pred_fallthru
      _
    %p340 = scmp.le.s32.totalorder 2, %s10
    // Predicated region
    $region41: #{rosa_forward.6} parent=5 // pred_check
      %p341 = pneg %p340
    $region42: #{rosa_forward.6} parent=5 // pred_check_branch
      %343 = sbr.rel (%p341) target = $region44
    $region43: #{rosa_forward.6} parent=5 // pred_region
      %s344 = ssub.s32 %s10, 2
      // Predicated region
      $region45: #{rosa_forward.6} parent=43 // pred_check
        %p345 = pneg %p128
      $region46: #{rosa_forward.6} parent=43 // pred_check_branch
        %347 = sbr.rel (%p345) target = $region48
      $region47: #{rosa_forward.6} parent=43 // pred_region
        %s348 = smul.u32 2, %s16
        %p349 = scmp.lt.s32.totalorder %s348, 3
        %s350 = scalar_select %p349, %s348, 3
        %s351 = smul.addr %s350, 8
        %s352 = scalar_lea.vmem %s4, %s351
      $region48: #{rosa_forward.6} parent=43 // pred_fallthru
        _
    $region44: #{rosa_forward.6} parent=5 // pred_fallthru
      _
  $region6: #{rosa_forward.6} parent=0 // loop_footer
    %s14 = sadd.s32 1, %s10
  $region7: #{rosa_forward.6} parent=0 // loop_footer_branch
    %9 = sbr.rel target = $region3
  $region8: #{rosa_forward.6} parent=0 // loop_exit
    _

// kernel: rosa_forward.9
$region0: #{rosa_forward.9}
  #allocation0 [shape = 'u32[]', space=smem, size = 0x4, offset = 0x4, fixed_abs, tag = 'smem constant byte address 0x4 - core index']
  #allocation1 [shape = 'u32[144,128]{1,0:T(1,128)}', space=vmem, size = 0x12000, scoped, tag = 'internal scratch']
  #allocation2 [shape = 'f32[1,1]{1,0:T(1,128)}', space=vmem, size = 0x200, scoped, tag = 'scratch operand']
  #allocation3 [shape = 'f32[1,1]{1,0:T(1,128)}', space=vmem, size = 0x200, scoped, tag = 'scratch operand']
  #allocation4 [shape = 's32[1]{0}', space=sflag, size = 0x4, scoped, tag = 'scoped memory for rosa_forward.9']
  #allocation5 [shape = 'u8[1024]{0}', space=smem, size = 0x400, scoped, tag = 'prefetched SMEM operand 0']
  %s0 = inlined_call_operand.vmem [shape: s32[2,2], index: 0, kind: input, shape index: {}]
  %s1 = inlined_call_operand.vmem [shape: f32[2,8,16], index: 1, kind: input, shape index: {}, may-alias: {1,3}]
  %s2 = inlined_call_operand.vmem [shape: f32[2,1,16], index: 2, kind: input, shape index: {}, may-alias: {2,4}]
  %s3 = inlined_call_operand.vmem [shape: f32[2,8,16], index: 3, kind: input, shape index: {}, may-alias: {1,3}]
  %s4 = inlined_call_operand.vmem [shape: f32[2,1,16], index: 4, kind: input, shape index: {}, may-alias: {2,4}]
  %s5 = inlined_call_operand.vmem [shape: f32[2,8,16], index: 5, kind: input, shape index: {}]
  %s6 = inlined_call_operand.vmem [shape: f32[2,1,16], index: 6, kind: input, shape index: {}]
  %s7 = inlined_call_operand.vmem [shape: f32[2,1,1], index: 7, kind: output, shape index: {}]
  %s8 = sld [smem:[#allocation0]]
  $region69: #{rosa_forward.9} parent=0
    _
  %s10 = ssub.s32 1, %s8
  %s11 = scalar_select 0, %s10, %s8
  %s12 = sshll.u32 %s0, 4
  %s13 = int_to_ptr.vmem [resolvable:$true] %s12
  %15 = dma.vmem_to_smem %s13, 32, [#allocation5], [#allocation4]
  %16 = dma.done [#allocation4], 32
  %17 = sfence
  loop: start=0, step=1, limit=6
  $region2: #{rosa_forward.9} parent=0 // loop_pre_header
    _
  $region3: #{rosa_forward.9} parent=0 // loop_header
    %s19 = sphi 0, %s23
    %p20 = scmp.ge.s32.totalorder %s19, 6
    %s26 = sphi 0, %s38
    %s27 = sphi 0, %s34
    %s28 = sphi 0, %s26
    %s29 = sphi 0, %s27
    %s30 = sphi 0, %s28
    %s31 = sphi 0, %s29
    %s41 = sphi 0, %s43
    %s44 = sphi 0, %s41
    %s45 = sphi 0, %s44
    %s61 = sphi 0, %s45
    %s67 = sphi 0, %s69
    %s70 = sphi 0, %s67
    %s71 = sphi 0, %s70
    %s87 = sphi 0, %s71
    %s109 = sphi 0, %s111
    %s112 = sphi 0, %s109
    %s113 = sphi 0, %s112
    %s129 = sphi 0, %s113
    %s151 = sphi 0, %s153
    %s154 = sphi 0, %s151
    %s155 = sphi 0, %s154
    %s171 = sphi 0, %s155
    %s193 = sphi 0, %s195
    %s196 = sphi 0, %s193
    %s197 = sphi 0, %s196
    %s213 = sphi 0, %s197
    %s235 = sphi 0, %s237
    %s238 = sphi 0, %s235
    %s239 = sphi 0, %s238
    %s255 = sphi 0, %s239
    %s261 = sphi 0, %s263
    %s264 = sphi 0, %s261
    %s265 = sphi 0, %s264
    %s281 = sphi 0, %s265
  $region4: #{rosa_forward.9} parent=0 // loop_header_branch
    %22 = sbr.rel (%p20) target = $region8
  $region5: #{rosa_forward.9} parent=0 // loop_body
    %s24 = ssub.s32 %s19, 1
    %s25 = ssub.s32 %s19, 2
    %s32 = sadd.s32 1, %s27
    %p33 = scmp.ge.s32.totalorder %s32, 2
    %s34 = scalar_select %p33, 0, %s32
    %s35 = sadd.s32 1, %s26
    %s36 = scalar_select %p33, %s35, %s26
    %p37 = scmp.ge.s32.totalorder %s36, 2
    %s38 = scalar_select %p37, 0, %s36
    %s39 = ssub.s32 %s26, %s38
    %p40 = scmp.eq.s32.totalorder %s39, 0
    %s42 = sadd.s32 %s41, 1
    %s43 = scalar_select %p40, %s41, %s42
    %p46 = pneg %p40
    %p47 = scmp.eq.s32.totalorder %s19, 3
    %p48 = por %p46, %p47
    %p49 = scmp.ne.s32.totalorder %s41, %s44
    %p50 = scmp.eq.s32.totalorder %s19, 0
    %p51 = por %p49, %p50
    %p52 = scmp.ne.s32.totalorder %s41, %s44
    %p53 = scmp.eq.s32.totalorder %s24, 3
    %p54 = por %p52, %p53
    %p55 = scmp.ne.s32.totalorder %s44, %s45
    %p56 = scmp.eq.s32.totalorder %s24, 0
    %p57 = por %p55, %p56
    %p58 = scmp.ne.s32.totalorder %s44, %s45
    %p59 = scmp.eq.s32.totalorder %s25, 3
    %p60 = por %p58, %p59
    %p62 = scmp.ne.s32.totalorder %s45, %s61
    %p63 = scmp.eq.s32.totalorder %s25, 0
    %p64 = por %p62, %p63
    %s65 = ssub.s32 %s26, %s38
    %p66 = scmp.eq.s32.totalorder %s65, 0
    %s68 = sadd.s32 %s67, 1
    %s69 = scalar_select %p66, %s67, %s68
    %p72 = pneg %p66
    %p73 = scmp.eq.s32.totalorder %s19, 3
    %p74 = por %p72, %p73
    %p75 = scmp.ne.s32.totalorder %s67, %s70
    %p76 = scmp.eq.s32.totalorder %s19, 0
    %p77 = por %p75, %p76
    %p78 = scmp.ne.s32.totalorder %s67, %s70
    %p79 = scmp.eq.s32.totalorder %s24, 3
    %p80 = por %p78, %p79
    %p81 = scmp.ne.s32.totalorder %s70, %s71
    %p82 = scmp.eq.s32.totalorder %s24, 0
    %p83 = por %p81, %p82
    %p84 = scmp.ne.s32.totalorder %s70, %s71
    %p85 = scmp.eq.s32.totalorder %s25, 3
    %p86 = por %p84, %p85
    %p88 = scmp.ne.s32.totalorder %s71, %s87
    %p89 = scmp.eq.s32.totalorder %s25, 0
    %p90 = por %p88, %p89
    %s91 = sshra.s32 %s26, 7
    %s92 = sand.u32 %s26, 127
    %s93 = sadd.s32 %s91, %s27
    %s94 = smul.u32 %s93, 128
    %s95 = sshra.s32 %s26, 7
    %s96 = sand.u32 %s26, 127
    %s97 = sadd.s32 %s94, %s96
    %s98 = sld [smem:[#allocation5 + %s97]]
    %s99 = sshra.s32 %s38, 7
    %s100 = sand.u32 %s38, 127
    %s101 = sadd.s32 %s99, %s34
    %s102 = smul.u32 %s101, 128
    %s103 = sshra.s32 %s38, 7
    %s104 = sand.u32 %s38, 127
    %s105 = sadd.s32 %s102, %s104
    %s106 = sld [smem:[#allocation5 + %s105]]
    %s107 = ssub.s32 %s98, %s106
    %p108 = scmp.eq.s32.totalorder %s107, 0
    %s110 = sadd.s32 %s109, 1
    %s111 = scalar_select %p108, %s109, %s110
    %p114 = pneg %p108
    %p115 = scmp.eq.s32.totalorder %s19, 3
    %p116 = por %p114, %p115
    %p117 = scmp.ne.s32.totalorder %s109, %s112
    %p118 = scmp.eq.s32.totalorder %s19, 0
    %p119 = por %p117, %p118
    %p120 = scmp.ne.s32.totalorder %s109, %s112
    %p121 = scmp.eq.s32.totalorder %s24, 3
    %p122 = por %p120, %p121
    %p123 = scmp.ne.s32.totalorder %s112, %s113
    %p124 = scmp.eq.s32.totalorder %s24, 0
    %p125 = por %p123, %p124
    %p126 = scmp.ne.s32.totalorder %s112, %s113
    %p127 = scmp.eq.s32.totalorder %s25, 3
    %p128 = por %p126, %p127
    %p130 = scmp.ne.s32.totalorder %s113, %s129
    %p131 = scmp.eq.s32.totalorder %s25, 0
    %p132 = por %p130, %p131
    %s133 = sshra.s32 %s26, 7
    %s134 = sand.u32 %s26, 127
    %s135 = sadd.s32 %s133, %s27
    %s136 = smul.u32 %s135, 128
    %s137 = sshra.s32 %s26, 7
    %s138 = sand.u32 %s26, 127
    %s139 = sadd.s32 %s136, %s138
    %s140 = sld [smem:[#allocation5 + %s139]]
    %s141 = sshra.s32 %s38, 7
    %s142 = sand.u32 %s38, 127
    %s143 = sadd.s32 %s141, %s34
    %s144 = smul.u32 %s143, 128
    %s145 = sshra.s32 %s38, 7
    %s146 = sand.u32 %s38, 127
    %s147 = sadd.s32 %s144, %s146
    %s148 = sld [smem:[#allocation5 + %s147]]
    %s149 = ssub.s32 %s140, %s148
    %p150 = scmp.eq.s32.totalorder %s149, 0
    %s152 = sadd.s32 %s151, 1
    %s153 = scalar_select %p150, %s151, %s152
    %p156 = pneg %p150
    %p157 = scmp.eq.s32.totalorder %s19, 3
    %p158 = por %p156, %p157
    %p159 = scmp.ne.s32.totalorder %s151, %s154
    %p160 = scmp.eq.s32.totalorder %s19, 0
    %p161 = por %p159, %p160
    %p162 = scmp.ne.s32.totalorder %s151, %s154
    %p163 = scmp.eq.s32.totalorder %s24, 3
    %p164 = por %p162, %p163
    %p165 = scmp.ne.s32.totalorder %s154, %s155
    %p166 = scmp.eq.s32.totalorder %s24, 0
    %p167 = por %p165, %p166
    %p168 = scmp.ne.s32.totalorder %s154, %s155
    %p169 = scmp.eq.s32.totalorder %s25, 3
    %p170 = por %p168, %p169
    %p172 = scmp.ne.s32.totalorder %s155, %s171
    %p173 = scmp.eq.s32.totalorder %s25, 0
    %p174 = por %p172, %p173
    %s175 = sshra.s32 %s26, 7
    %s176 = sand.u32 %s26, 127
    %s177 = sadd.s32 %s175, %s27
    %s178 = smul.u32 %s177, 128
    %s179 = sshra.s32 %s26, 7
    %s180 = sand.u32 %s26, 127
    %s181 = sadd.s32 %s178, %s180
    %s182 = sld [smem:[#allocation5 + %s181]]
    %s183 = sshra.s32 %s38, 7
    %s184 = sand.u32 %s38, 127
    %s185 = sadd.s32 %s183, %s34
    %s186 = smul.u32 %s185, 128
    %s187 = sshra.s32 %s38, 7
    %s188 = sand.u32 %s38, 127
    %s189 = sadd.s32 %s186, %s188
    %s190 = sld [smem:[#allocation5 + %s189]]
    %s191 = ssub.s32 %s182, %s190
    %p192 = scmp.eq.s32.totalorder %s191, 0
    %s194 = sadd.s32 %s193, 1
    %s195 = scalar_select %p192, %s193, %s194
    %p198 = pneg %p192
    %p199 = scmp.eq.s32.totalorder %s19, 3
    %p200 = por %p198, %p199
    %p201 = scmp.ne.s32.totalorder %s193, %s196
    %p202 = scmp.eq.s32.totalorder %s19, 0
    %p203 = por %p201, %p202
    %p204 = scmp.ne.s32.totalorder %s193, %s196
    %p205 = scmp.eq.s32.totalorder %s24, 3
    %p206 = por %p204, %p205
    %p207 = scmp.ne.s32.totalorder %s196, %s197
    %p208 = scmp.eq.s32.totalorder %s24, 0
    %p209 = por %p207, %p208
    %p210 = scmp.ne.s32.totalorder %s196, %s197
    %p211 = scmp.eq.s32.totalorder %s25, 3
    %p212 = por %p210, %p211
    %p214 = scmp.ne.s32.totalorder %s197, %s213
    %p215 = scmp.eq.s32.totalorder %s25, 0
    %p216 = por %p214, %p215
    %s217 = sshra.s32 %s26, 7
    %s218 = sand.u32 %s26, 127
    %s219 = sadd.s32 %s217, %s27
    %s220 = smul.u32 %s219, 128
    %s221 = sshra.s32 %s26, 7
    %s222 = sand.u32 %s26, 127
    %s223 = sadd.s32 %s220, %s222
    %s224 = sld [smem:[#allocation5 + %s223]]
    %s225 = sshra.s32 %s38, 7
    %s226 = sand.u32 %s38, 127
    %s227 = sadd.s32 %s225, %s34
    %s228 = smul.u32 %s227, 128
    %s229 = sshra.s32 %s38, 7
    %s230 = sand.u32 %s38, 127
    %s231 = sadd.s32 %s228, %s230
    %s232 = sld [smem:[#allocation5 + %s231]]
    %s233 = ssub.s32 %s224, %s232
    %p234 = scmp.eq.s32.totalorder %s233, 0
    %s236 = sadd.s32 %s235, 1
    %s237 = scalar_select %p234, %s235, %s236
    %p240 = pneg %p234
    %p241 = scmp.eq.s32.totalorder %s19, 3
    %p242 = por %p240, %p241
    %p243 = scmp.ne.s32.totalorder %s235, %s238
    %p244 = scmp.eq.s32.totalorder %s19, 0
    %p245 = por %p243, %p244
    %p246 = scmp.ne.s32.totalorder %s235, %s238
    %p247 = scmp.eq.s32.totalorder %s24, 3
    %p248 = por %p246, %p247
    %p249 = scmp.ne.s32.totalorder %s238, %s239
    %p250 = scmp.eq.s32.totalorder %s24, 0
    %p251 = por %p249, %p250
    %p252 = scmp.ne.s32.totalorder %s238, %s239
    %p253 = scmp.eq.s32.totalorder %s25, 3
    %p254 = por %p252, %p253
    %p256 = scmp.ne.s32.totalorder %s239, %s255
    %p257 = scmp.eq.s32.totalorder %s25, 0
    %p258 = por %p256, %p257
    %s259 = ssub.s32 %s26, %s38
    %p260 = scmp.eq.s32.totalorder %s259, 0
    %s262 = sadd.s32 %s261, 1
    %s263 = scalar_select %p260, %s261, %s262
    %p266 = pneg %p260
    %p267 = scmp.eq.s32.totalorder %s19, 3
    %p268 = por %p266, %p267
    %p269 = scmp.ne.s32.totalorder %s261, %s264
    %p270 = scmp.eq.s32.totalorder %s19, 0
    %p271 = por %p269, %p270
    %p272 = scmp.ne.s32.totalorder %s261, %s264
    %p273 = scmp.eq.s32.totalorder %s24, 3
    %p274 = por %p272, %p273
    %p275 = scmp.ne.s32.totalorder %s264, %s265
    %p276 = scmp.eq.s32.totalorder %s24, 0
    %p277 = por %p275, %p276
    %p278 = scmp.ne.s32.totalorder %s264, %s265
    %p279 = scmp.eq.s32.totalorder %s25, 3
    %p280 = por %p278, %p279
    %p282 = scmp.ne.s32.totalorder %s265, %s281
    %p283 = scmp.eq.s32.totalorder %s25, 0
    %p284 = por %p282, %p283
    %p285 = scmp.le.s32.totalorder 1, %s19
    %p286 = scmp.lt.s32.totalorder %s19, 5
    %p287 = pnand %p285, %p286
    %p288 = pneg %p287
    // Predicated region
    $region9: #{rosa_forward.9} parent=5 // pred_check
      _
    $region10: #{rosa_forward.9} parent=5 // pred_check_branch
      %290 = sbr.rel (%p287) target = $region12
    $region11: #{rosa_forward.9} parent=5 // pred_region
      %s291 = ssub.s32 %s19, 1
    $region12: #{rosa_forward.9} parent=5 // pred_fallthru
      _
    %p292 = scmp.lt.s32.totalorder %s19, 4
    // Predicated region
    $region13: #{rosa_forward.9} parent=5 // pred_check
      %p293 = pneg %p292
    $region14: #{rosa_forward.9} parent=5 // pred_check_branch
      %295 = sbr.rel (%p293) target = $region16
    $region15: #{rosa_forward.9} parent=5 // pred_region
      // Predicated region
      $region17: #{rosa_forward.9} parent=15 // pred_check
        %p296 = pneg %p51
      $region18: #{rosa_forward.9} parent=15 // pred_check_branch
        %298 = sbr.rel (%p296) target = $region20
      $region19: #{rosa_forward.9} parent=15 // pred_region
        %p299 = scmp.lt.s32.totalorder %s26, 1
        %s300 = scalar_select %p299, %s26, 1
        %s301 = smul.addr %s300, 8
        %s302 = scalar_lea.vmem %s1, %s301
      $region20: #{rosa_forward.9} parent=15 // pred_fallthru
        _
      // Predicated region
      $region21: #{rosa_forward.9} parent=15 // pred_check
        %p303 = pneg %p77
      $region22: #{rosa_forward.9} parent=15 // pred_check_branch
        %305 = sbr.rel (%p303) target = $region24
      $region23: #{rosa_forward.9} parent=15 // pred_region
        %p306 = scmp.lt.s32.totalorder %s26, 1
        %s307 = scalar_select %p306, %s26, 1
        %s308 = scalar_lea.vmem %s2, %s307
      $region24: #{rosa_forward.9} parent=15 // pred_fallthru
        _
      // Predicated region
      $region25: #{rosa_forward.9} parent=15 // pred_check
        %p309 = pneg %p119
      $region26: #{rosa_forward.9} parent=15 // pred_check_branch
        %311 = sbr.rel (%p309) target = $region28
      $region27: #{rosa_forward.9} parent=15 // pred_region
        %s312 = sshra.s32 %s26, 7
        %s313 = sand.u32 %s26, 127
        %s314 = sadd.s32 %s312, %s27
        %s315 = smul.u32 %s314, 128
        %s316 = sshra.s32 %s26, 7
        %s317 = sand.u32 %s26, 127
        %s318 = sadd.s32 %s315, %s317
        %s319 = sld [smem:[#allocation5 + %s318]]
        %p320 = scmp.lt.s32.totalorder %s319, 1
        %s321 = scalar_select %p320, %s319, 1
        %s322 = smul.addr %s321, 8
        %s323 = scalar_lea.vmem %s3, %s322
        %s324 = sshra.s32 %s26, 7
        %s325 = sand.u32 %s26, 127
        %s326 = sadd.s32 %s324, %s27
        %s327 = smul.u32 %s326, 128
        %s328 = sshra.s32 %s26, 7
        %s329 = sand.u32 %s26, 127
        %s330 = sadd.s32 %s327, %s329
        %s331 = sld [smem:[#allocation5 + %s330]]
      $region28: #{rosa_forward.9} parent=15 // pred_fallthru
        _
      // Predicated region
      $region29: #{rosa_forward.9} parent=15 // pred_check
        %p332 = pneg %p161
      $region30: #{rosa_forward.9} parent=15 // pred_check_branch
        %334 = sbr.rel (%p332) target = $region32
      $region31: #{rosa_forward.9} parent=15 // pred_region
        %s335 = sshra.s32 %s26, 7
        %s336 = sand.u32 %s26, 127
        %s337 = sadd.s32 %s335, %s27
        %s338 = smul.u32 %s337, 128
        %s339 = sshra.s32 %s26, 7
        %s340 = sand.u32 %s26, 127
        %s341 = sadd.s32 %s338, %s340
        %s342 = sld [smem:[#allocation5 + %s341]]
        %p343 = scmp.lt.s32.totalorder %s342, 1
        %s344 = scalar_select %p343, %s342, 1
        %s345 = scalar_lea.vmem %s4, %s344
        %s346 = sshra.s32 %s26, 7
        %s347 = sand.u32 %s26, 127
        %s348 = sadd.s32 %s346, %s27
        %s349 = smul.u32 %s348, 128
        %s350 = sshra.s32 %s26, 7
        %s351 = sand.u32 %s26, 127
        %s352 = sadd.s32 %s349, %s351
        %s353 = sld [smem:[#allocation5 + %s352]]
      $region32: #{rosa_forward.9} parent=15 // pred_fallthru
        _
      // Predicated region
      $region33: #{rosa_forward.9} parent=15 // pred_check
        %p354 = pneg %p203
      $region34: #{rosa_forward.9} parent=15 // pred_check_branch
        %356 = sbr.rel (%p354) target = $region36
      $region35: #{rosa_forward.9} parent=15 // pred_region
        %s357 = sshra.s32 %s26, 7
        %s358 = sand.u32 %s26, 127
        %s359 = sadd.s32 %s357, %s27
        %s360 = smul.u32 %s359, 128
        %s361 = sshra.s32 %s26, 7
        %s362 = sand.u32 %s26, 127
        %s363 = sadd.s32 %s360, %s362
        %s364 = sld [smem:[#allocation5 + %s363]]
        %p365 = scmp.lt.s32.totalorder %s364, 1
        %s366 = scalar_select %p365, %s364, 1
        %s367 = smul.addr %s366, 8
        %s368 = scalar_lea.vmem %s5, %s367
        %s369 = sshra.s32 %s26, 7
        %s370 = sand.u32 %s26, 127
        %s371 = sadd.s32 %s369, %s27
        %s372 = smul.u32 %s371, 128
        %s373 = sshra.s32 %s26, 7
        %s374 = sand.u32 %s26, 127
        %s375 = sadd.s32 %s372, %s374
        %s376 = sld [smem:[#allocation5 + %s375]]
      $region36: #{rosa_forward.9} parent=15 // pred_fallthru
        _
      // Predicated region
      $region37: #{rosa_forward.9} parent=15 // pred_check
        %p377 = pneg %p245
      $region38: #{rosa_forward.9} parent=15 // pred_check_branch
        %379 = sbr.rel (%p377) target = $region40
      $region39: #{rosa_forward.9} parent=15 // pred_region
        %s380 = sshra.s32 %s26, 7
        %s381 = sand.u32 %s26, 127
        %s382 = sadd.s32 %s380, %s27
        %s383 = smul.u32 %s382, 128
        %s384 = sshra.s32 %s26, 7
        %s385 = sand.u32 %s26, 127
        %s386 = sadd.s32 %s383, %s385
        %s387 = sld [smem:[#allocation5 + %s386]]
        %p388 = scmp.lt.s32.totalorder %s387, 1
        %s389 = scalar_select %p388, %s387, 1
        %s390 = scalar_lea.vmem %s6, %s389
        %s391 = sshra.s32 %s26, 7
        %s392 = sand.u32 %s26, 127
        %s393 = sadd.s32 %s391, %s27
        %s394 = smul.u32 %s393, 128
        %s395 = sshra.s32 %s26, 7
        %s396 = sand.u32 %s26, 127
        %s397 = sadd.s32 %s394, %s396
        %s398 = sld [smem:[#allocation5 + %s397]]
      $region40: #{rosa_forward.9} parent=15 // pred_fallthru
        _
    $region16: #{rosa_forward.9} parent=5 // pred_fallthru
      _
    %p399 = scmp.le.s32.totalorder 1, %s19
    %p400 = scmp.lt.s32.totalorder %s19, 5
    %p401 = pnand %p399, %p400
    %p402 = pneg %p401
    // Predicated region
    $region41: #{rosa_forward.9} parent=5 // pred_check
      _
    $region42: #{rosa_forward.9} parent=5 // pred_check_branch
      %404 = sbr.rel (%p401) target = $region44
    $region43: #{rosa_forward.9} parent=5 // pred_region
      %s405 = ssub.s32 %s19, 1
      %p406 = scmp.lt.s32.totalorder %s28, 1
      %s407 = scalar_select %p406, %s28, 1
      %s408 = smul.addr %s407, 8
      %s409 = scalar_lea.vmem %s1, %s408
      %p410 = pneg %p57
      %p411 = pneg %p54
      %p412 = scmp.lt.s32.totalorder %s28, 1
      %s413 = scalar_select %p412, %s28, 1
      %s414 = scalar_lea.vmem %s2, %s413
      %p415 = pneg %p83
      %p416 = pneg %p80
      %s417 = sshra.s32 %s28, 7
      %s418 = sand.u32 %s28, 127
      %s419 = sadd.s32 %s417, %s29
      %s420 = smul.u32 %s419, 128
      %s421 = sshra.s32 %s28, 7
      %s422 = sand.u32 %s28, 127
      %s423 = sadd.s32 %s420, %s422
      %s424 = sld [smem:[#allocation5 + %s423]]
      %p425 = scmp.lt.s32.totalorder %s424, 1
      %s426 = scalar_select %p425, %s424, 1
      %s427 = smul.addr %s426, 8
      %s428 = scalar_lea.vmem %s3, %s427
      %p429 = pneg %p125
      %p430 = pneg %p122
      %s431 = sshra.s32 %s28, 7
      %s432 = sand.u32 %s28, 127
      %s433 = sadd.s32 %s431, %s29
      %s434 = smul.u32 %s433, 128
      %s435 = sshra.s32 %s28, 7
      %s436 = sand.u32 %s28, 127
      %s437 = sadd.s32 %s434, %s436
      %s438 = sld [smem:[#allocation5 + %s437]]
      %p439 = scmp.lt.s32.totalorder %s438, 1
      %s440 = scalar_select %p439, %s438, 1
      %s441 = scalar_lea.vmem %s4, %s440
      %p442 = pneg %p167
      %p443 = pneg %p164
      %s444 = sshra.s32 %s28, 7
      %s445 = sand.u32 %s28, 127
      %s446 = sadd.s32 %s444, %s29
      %s447 = smul.u32 %s446, 128
      %s448 = sshra.s32 %s28, 7
      %s449 = sand.u32 %s28, 127
      %s450 = sadd.s32 %s447, %s449
      %s451 = sld [smem:[#allocation5 + %s450]]
      %p452 = scmp.lt.s32.totalorder %s451, 1
      %s453 = scalar_select %p452, %s451, 1
      %s454 = smul.addr %s453, 8
      %s455 = scalar_lea.vmem %s5, %s454
      %p456 = pneg %p209
      %p457 = pneg %p206
      %s458 = sshra.s32 %s28, 7
      %s459 = sand.u32 %s28, 127
      %s460 = sadd.s32 %s458, %s29
      %s461 = smul.u32 %s460, 128
      %s462 = sshra.s32 %s28, 7
      %s463 = sand.u32 %s28, 127
      %s464 = sadd.s32 %s461, %s463
      %s465 = sld [smem:[#allocation5 + %s464]]
      %p466 = scmp.lt.s32.totalorder %s465, 1
      %s467 = scalar_select %p466, %s465, 1
      %s468 = scalar_lea.vmem %s6, %s467
      %p469 = pneg %p251
      %p470 = pneg %p248
      %p471 = pneg %p277
      %p472 = pneg %p274
      %p473 = scmp.lt.s32.totalorder %s28, 1
      %s474 = scalar_select %p473, %s28, 1
      %s475 = scalar_lea.vmem %s7, %s474
      %p476 = scmp.lt.s32.totalorder %s28, 1
      %s477 = scalar_select %p476, %s28, 1
      %s478 = smul.addr %s477, 8
      %s479 = scalar_lea.vmem %s1, %s478
      %p480 = scmp.lt.s32.totalorder %s28, 1
      %s481 = scalar_select %p480, %s28, 1
      %s482 = scalar_lea.vmem %s2, %s481
      %s483 = sshra.s32 %s28, 7
      %s484 = sand.u32 %s28, 127
      %s485 = sadd.s32 %s483, %s29
      %s486 = smul.u32 %s485, 128
      %s487 = sshra.s32 %s28, 7
      %s488 = sand.u32 %s28, 127
      %s489 = sadd.s32 %s486, %s488
      %s490 = sld [smem:[#allocation5 + %s489]]
      %p491 = scmp.lt.s32.totalorder %s490, 1
      %s492 = scalar_select %p491, %s490, 1
      %s493 = smul.addr %s492, 8
      %s494 = scalar_lea.vmem %s3, %s493
      %s495 = sshra.s32 %s28, 7
      %s496 = sand.u32 %s28, 127
      %s497 = sadd.s32 %s495, %s29
      %s498 = smul.u32 %s497, 128
      %s499 = sshra.s32 %s28, 7
      %s500 = sand.u32 %s28, 127
      %s501 = sadd.s32 %s498, %s500
      %s502 = sld [smem:[#allocation5 + %s501]]
      %s503 = sshra.s32 %s28, 7
      %s504 = sand.u32 %s28, 127
      %s505 = sadd.s32 %s503, %s29
      %s506 = smul.u32 %s505, 128
      %s507 = sshra.s32 %s28, 7
      %s508 = sand.u32 %s28, 127
      %s509 = sadd.s32 %s506, %s508
      %s510 = sld [smem:[#allocation5 + %s509]]
      %p511 = scmp.lt.s32.totalorder %s510, 1
      %s512 = scalar_select %p511, %s510, 1
      %s513 = scalar_lea.vmem %s4, %s512
      %s514 = sshra.s32 %s28, 7
      %s515 = sand.u32 %s28, 127
      %s516 = sadd.s32 %s514, %s29
      %s517 = smul.u32 %s516, 128
      %s518 = sshra.s32 %s28, 7
      %s519 = sand.u32 %s28, 127
      %s520 = sadd.s32 %s517, %s519
      %s521 = sld [smem:[#allocation5 + %s520]]
      %s522 = sshra.s32 %s28, 7
      %s523 = sand.u32 %s28, 127
      %s524 = sadd.s32 %s522, %s29
      %s525 = smul.u32 %s524, 128
      %s526 = sshra.s32 %s28, 7
      %s527 = sand.u32 %s28, 127
      %s528 = sadd.s32 %s525, %s527
      %s529 = sld [smem:[#allocation5 + %s528]]
      %p530 = scmp.lt.s32.totalorder %s529, 1
      %s531 = scalar_select %p530, %s529, 1
      %s532 = smul.addr %s531, 8
      %s533 = scalar_lea.vmem %s5, %s532
      %s534 = sshra.s32 %s28, 7
      %s535 = sand.u32 %s28, 127
      %s536 = sadd.s32 %s534, %s29
      %s537 = smul.u32 %s536, 128
      %s538 = sshra.s32 %s28, 7
      %s539 = sand.u32 %s28, 127
      %s540 = sadd.s32 %s537, %s539
      %s541 = sld [smem:[#allocation5 + %s540]]
      %s542 = sshra.s32 %s28, 7
      %s543 = sand.u32 %s28, 127
      %s544 = sadd.s32 %s542, %s29
      %s545 = smul.u32 %s544, 128
      %s546 = sshra.s32 %s28, 7
      %s547 = sand.u32 %s28, 127
      %s548 = sadd.s32 %s545, %s547
      %s549 = sld [smem:[#allocation5 + %s548]]
      %p550 = scmp.lt.s32.totalorder %s549, 1
      %s551 = scalar_select %p550, %s549, 1
      %s552 = scalar_lea.vmem %s6, %s551
      %s553 = sshra.s32 %s28, 7
      %s554 = sand.u32 %s28, 127
      %s555 = sadd.s32 %s553, %s29
      %s556 = smul.u32 %s555, 128
      %s557 = sshra.s32 %s28, 7
      %s558 = sand.u32 %s28, 127
      %s559 = sadd.s32 %s556, %s558
      %s560 = sld [smem:[#allocation5 + %s559]]
      %p561 = scmp.lt.s32.totalorder %s28, 1
      %s562 = scalar_select %p561, %s28, 1
      %s563 = scalar_lea.vmem %s7, %s562
      %v565 = vld [vmem:[%s479] sm:$0xff]
      %v566 = vld [vmem:[%s482] sm:$0x1]
      %v567 = vld [vmem:[%s533] sm:$0xff]
      %v568 = vld [vmem:[%s552] sm:$0x1]
      %v569 = vmul.f32 %v565, %v565
      %vm570 = vcmask 130048
      %v571 = vsel %vm570, %v569, 0.0
      %572 = vadd.xlane.f32.xlu0 %v571
      %v573 = vpop.xlane.xlu0 %572
      %v574 = vmax.f32 %v573, 1e-24
      %v575 = vrsqrt.pop %v574
      %v576 = vmul.f32 %v567, %v567
      %v577 = vsel %vm570, %v576, 0.0
      %578 = vadd.xlane.f32.xlu0 %v577
      %v579 = vpop.xlane.xlu0 %578
      %v580 = vmax.f32 %v579, 1e-24
      %v581 = vrsqrt.pop %v580
      %v582 = vmul.f32 %v565, %v575
      %v583 = vpack.c.bf16 %v582, %v582
      %v584 = vmul.f32 %v567, %v581
      %v585 = vpack.c.bf16 %v584, %v584
      %v587 = vsel %vm570, %v583, 0
      %v590 = vsel %vm570, %v585, 0
      %592 = vmatprep.subr.bf16.mxu0 0
      %593 = vmatpush1.bf16.xpose.msra.mxu0 %v590
      %594 = vmatprep.subr.bf16.mxu0 0
      %595 = vmatpush1.bf16.xpose.msra.mxu0 0
      %596 = vmatprep.subr.bf16.mxu0 0
      %597 = vmatpush1.bf16.xpose.msra.mxu0 0
      %598 = vmatprep.subr.bf16.mxu0 0
      %599 = vmatpush1.bf16.xpose.msra.mxu0 0
      %600 = vmatprep.subr.bf16.mxu0 0
      %601 = vmatpush1.bf16.xpose.msra.mxu0 0
      %602 = vmatprep.subr.bf16.mxu0 0
      %603 = vmatpush1.bf16.xpose.msra.mxu0 0
      %604 = vmatprep.subr.bf16.mxu0 0
      %605 = vmatpush1.bf16.xpose.msra.mxu0 0
      %606 = vmatprep.subr.bf16.mxu0 0
      %607 = vmatpush1.bf16.xpose.msra.mxu0 0
      %608 = vmatprep.subr.bf16.mxu0 0
      %609 = vmatpush1.bf16.xpose.msra.mxu0 0
      %610 = vmatprep.subr.bf16.mxu0 0
      %611 = vmatpush1.bf16.xpose.msra.mxu0 0
      %612 = vmatprep.subr.bf16.mxu0 0
      %613 = vmatpush1.bf16.xpose.msra.mxu0 0
      %614 = vmatprep.subr.bf16.mxu0 0
      %615 = vmatpush1.bf16.xpose.msra.mxu0 0
      %616 = vmatprep.subr.bf16.mxu0 0
      %617 = vmatpush1.bf16.xpose.msra.mxu0 0
      %618 = vmatprep.subr.bf16.mxu0 0
      %619 = vmatpush1.bf16.xpose.msra.mxu0 0
      %620 = vmatprep.subr.bf16.mxu0 0
      %621 = vmatpush1.bf16.xpose.msra.mxu0 0
      %622 = vmatprep.subr.bf16.mxu0 0
      %623 = vmatpush1.bf16.xpose.msra.mxu0 0
      %624 = vmatprep.mubr.bf16.mxu0 0
      %625 = vmatmul.mubr.bf16.gmra.mrb[0].mxu0 %v587
      %v626 = vpop.f32.mrb[0].mxu0
      %v627 = vadd.f32 0.0, %v626
      %v628 = vpop.f32.mrb[0].mxu0
      %v629 = vpop.f32.mrb[0].mxu0
      %v630 = vpop.f32.mrb[0].mxu0
      %631 = vdwg.mxu0
      %v632 = vsub.f32 1.0, %v627
      %v634 = vsel %vm570, %v568, 0
      %v637 = vsel %vm570, %v565, 0
      %639 = vmatprep.subr.mxu0 0.0
      %640 = vmatpush1.xpose.msra.mxu0 %v637
      %641 = vmatprep.subr.mxu0 0.0
      %642 = vmatpush1.xpose.msra.mxu0 0.0
      %643 = vmatprep.subr.mxu0 0.0
      %644 = vmatpush1.xpose.msra.mxu0 0.0
      %645 = vmatprep.subr.mxu0 0.0
      %646 = vmatpush1.xpose.msra.mxu0 0.0
      %647 = vmatprep.subr.mxu0 0.0
      %648 = vmatpush1.xpose.msra.mxu0 0.0
      %649 = vmatprep.subr.mxu0 0.0
      %650 = vmatpush1.xpose.msra.mxu0 0.0
      %651 = vmatprep.subr.mxu0 0.0
      %652 = vmatpush1.xpose.msra.mxu0 0.0
      %653 = vmatprep.subr.mxu0 0.0
      %654 = vmatpush1.xpose.msra.mxu0 0.0
      %655 = vmatprep.subr.mxu0 0.0
      %656 = vmatpush1.xpose.msra.mxu0 0.0
      %657 = vmatprep.subr.mxu0 0.0
      %658 = vmatpush1.xpose.msra.mxu0 0.0
      %659 = vmatprep.subr.mxu0 0.0
      %660 = vmatpush1.xpose.msra.mxu0 0.0
      %661 = vmatprep.subr.mxu0 0.0
      %662 = vmatpush1.xpose.msra.mxu0 0.0
      %663 = vmatprep.subr.mxu0 0.0
      %664 = vmatpush1.xpose.msra.mxu0 0.0
      %665 = vmatprep.subr.mxu0 0.0
      %666 = vmatpush1.xpose.msra.mxu0 0.0
      %667 = vmatprep.subr.mxu0 0.0
      %668 = vmatpush1.xpose.msra.mxu0 0.0
      %669 = vmatprep.subr.mxu0 0.0
      %670 = vmatpush1.xpose.msra.mxu0 0.0
      %671 = vmatprep.subr.mxu0 0.0
      %672 = vmatpush1.xpose.msra.mxu0 0.0
      %673 = vmatprep.subr.mxu0 0.0
      %674 = vmatpush1.xpose.msra.mxu0 0.0
      %675 = vmatprep.subr.mxu0 0.0
      %676 = vmatpush1.xpose.msra.mxu0 0.0
      %677 = vmatprep.subr.mxu0 0.0
      %678 = vmatpush1.xpose.msra.mxu0 0.0
      %679 = vmatprep.subr.mxu0 0.0
      %680 = vmatpush1.xpose.msra.mxu0 0.0
      %681 = vmatprep.subr.mxu0 0.0
      %682 = vmatpush1.xpose.msra.mxu0 0.0
      %683 = vmatprep.subr.mxu0 0.0
      %684 = vmatpush1.xpose.msra.mxu0 0.0
      %685 = vmatprep.subr.mxu0 0.0
      %686 = vmatpush1.xpose.msra.mxu0 0.0
      %687 = vmatprep.subr.mxu0 0.0
      %688 = vmatpush1.xpose.msra.mxu0 0.0
      %689 = vmatprep.subr.mxu0 0.0
      %690 = vmatpush1.xpose.msra.mxu0 0.0
      %691 = vmatprep.subr.mxu0 0.0
      %692 = vmatpush1.xpose.msra.mxu0 0.0
      %693 = vmatprep.subr.mxu0 0.0
      %694 = vmatpush1.xpose.msra.mxu0 0.0
      %695 = vmatprep.subr.mxu0 0.0
      %696 = vmatpush1.xpose.msra.mxu0 0.0
      %697 = vmatprep.subr.mxu0 0.0
      %698 = vmatpush1.xpose.msra.mxu0 0.0
      %699 = vmatprep.subr.mxu0 0.0
      %700 = vmatpush1.xpose.msra.mxu0 0.0
      %701 = vmatprep.subr.mxu0 0.0
      %702 = vmatpush1.xpose.msra.mxu0 0.0
      %703 = vmatprep.mubr.f32.mxu0 0.0
      %704 = vmatmul.mubr.f32.gmra.mrb[0].mxu0 %v634
      %v705 = vpop.f32.mrb[0].mxu0
      %v706 = vadd.f32 0.0, %v705
      %v707 = vpop.f32.mrb[0].mxu0
      %708 = vdwg.mxu0
      %vm709 = vcmp.le.f32.partialorder %v706, 0.0
      %v710 = vsel %vm709, 1e-08, %v706
      %vm711 = vcmask 57344
      %v712 = vsel %vm711, %v710, 0.0
      %713 = vadd.xlane.f32.xlu0 %v712
      %v714 = vpop.xlane.xlu0 %713
      %v715 = vrcp.pop %v714
      %v716 = vmul.f32 %v710, %v715
      %v718 = vsel %vm570, %v566, 0
      %v721 = vsel %vm570, %v567, 0
      %723 = vmatprep.subr.mxu0 0.0
      %724 = vmatpush1.xpose.msra.mxu0 %v721
      %725 = vmatprep.subr.mxu0 0.0
      %726 = vmatpush1.xpose.msra.mxu0 0.0
      %727 = vmatprep.subr.mxu0 0.0
      %728 = vmatpush1.xpose.msra.mxu0 0.0
      %729 = vmatprep.subr.mxu0 0.0
      %730 = vmatpush1.xpose.msra.mxu0 0.0
      %731 = vmatprep.subr.mxu0 0.0
      %732 = vmatpush1.xpose.msra.mxu0 0.0
      %733 = vmatprep.subr.mxu0 0.0
      %734 = vmatpush1.xpose.msra.mxu0 0.0
      %735 = vmatprep.subr.mxu0 0.0
      %736 = vmatpush1.xpose.msra.mxu0 0.0
      %737 = vmatprep.subr.mxu0 0.0
      %738 = vmatpush1.xpose.msra.mxu0 0.0
      %739 = vmatprep.subr.mxu0 0.0
      %740 = vmatpush1.xpose.msra.mxu0 0.0
      %741 = vmatprep.subr.mxu0 0.0
      %742 = vmatpush1.xpose.msra.mxu0 0.0
      %743 = vmatprep.subr.mxu0 0.0
      %744 = vmatpush1.xpose.msra.mxu0 0.0
      %745 = vmatprep.subr.mxu0 0.0
      %746 = vmatpush1.xpose.msra.mxu0 0.0
      %747 = vmatprep.subr.mxu0 0.0
      %748 = vmatpush1.xpose.msra.mxu0 0.0
      %749 = vmatprep.subr.mxu0 0.0
      %750 = vmatpush1.xpose.msra.mxu0 0.0
      %751 = vmatprep.subr.mxu0 0.0
      %752 = vmatpush1.xpose.msra.mxu0 0.0
      %753 = vmatprep.subr.mxu0 0.0
      %754 = vmatpush1.xpose.msra.mxu0 0.0
      %755 = vmatprep.subr.mxu0 0.0
      %756 = vmatpush1.xpose.msra.mxu0 0.0
      %757 = vmatprep.subr.mxu0 0.0
      %758 = vmatpush1.xpose.msra.mxu0 0.0
      %759 = vmatprep.subr.mxu0 0.0
      %760 = vmatpush1.xpose.msra.mxu0 0.0
      %761 = vmatprep.subr.mxu0 0.0
      %762 = vmatpush1.xpose.msra.mxu0 0.0
      %763 = vmatprep.subr.mxu0 0.0
      %764 = vmatpush1.xpose.msra.mxu0 0.0
      %765 = vmatprep.subr.mxu0 0.0
      %766 = vmatpush1.xpose.msra.mxu0 0.0
      %767 = vmatprep.subr.mxu0 0.0
      %768 = vmatpush1.xpose.msra.mxu0 0.0
      %769 = vmatprep.subr.mxu0 0.0
      %770 = vmatpush1.xpose.msra.mxu0 0.0
      %771 = vmatprep.subr.mxu0 0.0
      %772 = vmatpush1.xpose.msra.mxu0 0.0
      %773 = vmatprep.subr.mxu0 0.0
      %774 = vmatpush1.xpose.msra.mxu0 0.0
      %775 = vmatprep.subr.mxu0 0.0
      %776 = vmatpush1.xpose.msra.mxu0 0.0
      %777 = vmatprep.subr.mxu0 0.0
      %778 = vmatpush1.xpose.msra.mxu0 0.0
      %779 = vmatprep.subr.mxu0 0.0
      %780 = vmatpush1.xpose.msra.mxu0 0.0
      %781 = vmatprep.subr.mxu0 0.0
      %782 = vmatpush1.xpose.msra.mxu0 0.0
      %783 = vmatprep.subr.mxu0 0.0
      %784 = vmatpush1.xpose.msra.mxu0 0.0
      %785 = vmatprep.subr.mxu0 0.0
      %786 = vmatpush1.xpose.msra.mxu0 0.0
      %787 = vmatprep.mubr.f32.mxu0 0.0
      %788 = vmatmul.mubr.f32.gmra.mrb[0].mxu0 %v718
      %v789 = vpop.f32.mrb[0].mxu0
      %v790 = vadd.f32 0.0, %v789
      %v791 = vpop.f32.mrb[0].mxu0
      %792 = vdwg.mxu0
      %vm793 = vcmp.le.f32.partialorder %v790, 0.0
      %v794 = vsel %vm793, 1e-08, %v790
      %v795 = vsel %vm711, %v794, 0.0
      %796 = vadd.xlane.f32.xlu0 %v795
      %v797 = vpop.xlane.xlu0 %796
      %v798 = vrcp.pop %v797
      %v799 = vmul.f32 %v794, %v798
      %v800 = vmul.f32 %v632, -20.0
      %v801 = vmul.f32 %v800, 1.442695
      %v802 = vpow.pop %v801
      %vm803 = vcmask 64512
      %v805 = vsel %vm803, 0.125, 0
      %v808 = vsel %vm803, %v802, 0
      %810 = vmatprep.subr.mxu0 0.0
      %811 = vmatpush1.xpose.msra.mxu0 %v808
      %812 = vmatprep.subr.mxu0 0.0
      %813 = vmatpush1.xpose.msra.mxu0 0.0
      %814 = vmatprep.subr.mxu0 0.0
      %815 = vmatpush1.xpose.msra.mxu0 0.0
      %816 = vmatprep.subr.mxu0 0.0
      %817 = vmatpush1.xpose.msra.mxu0 0.0
      %818 = vmatprep.subr.mxu0 0.0
      %819 = vmatpush1.xpose.msra.mxu0 0.0
      %820 = vmatprep.subr.mxu0 0.0
      %821 = vmatpush1.xpose.msra.mxu0 0.0
      %822 = vmatprep.subr.mxu0 0.0
      %823 = vmatpush1.xpose.msra.mxu0 0.0
      %824 = vmatprep.subr.mxu0 0.0
      %825 = vmatpush1.xpose.msra.mxu0 0.0
      %826 = vmatprep.subr.mxu0 0.0
      %827 = vmatpush1.xpose.msra.mxu0 0.0
      %828 = vmatprep.subr.mxu0 0.0
      %829 = vmatpush1.xpose.msra.mxu0 0.0
      %830 = vmatprep.subr.mxu0 0.0
      %831 = vmatpush1.xpose.msra.mxu0 0.0
      %832 = vmatprep.subr.mxu0 0.0
      %833 = vmatpush1.xpose.msra.mxu0 0.0
      %834 = vmatprep.subr.mxu0 0.0
      %835 = vmatpush1.xpose.msra.mxu0 0.0
      %836 = vmatprep.subr.mxu0 0.0
      %837 = vmatpush1.xpose.msra.mxu0 0.0
      %838 = vmatprep.subr.mxu0 0.0
      %839 = vmatpush1.xpose.msra.mxu0 0.0
      %840 = vmatprep.subr.mxu0 0.0
      %841 = vmatpush1.xpose.msra.mxu0 0.0
      %842 = vmatprep.subr.mxu0 0.0
      %843 = vmatpush1.xpose.msra.mxu0 0.0
      %844 = vmatprep.subr.mxu0 0.0
      %845 = vmatpush1.xpose.msra.mxu0 0.0
      %846 = vmatprep.subr.mxu0 0.0
      %847 = vmatpush1.xpose.msra.mxu0 0.0
      %848 = vmatprep.subr.mxu0 0.0
      %849 = vmatpush1.xpose.msra.mxu0 0.0
      %850 = vmatprep.subr.mxu0 0.0
      %851 = vmatpush1.xpose.msra.mxu0 0.0
      %852 = vmatprep.subr.mxu0 0.0
      %853 = vmatpush1.xpose.msra.mxu0 0.0
      %854 = vmatprep.subr.mxu0 0.0
      %855 = vmatpush1.xpose.msra.mxu0 0.0
      %856 = vmatprep.subr.mxu0 0.0
      %857 = vmatpush1.xpose.msra.mxu0 0.0
      %858 = vmatprep.subr.mxu0 0.0
      %859 = vmatpush1.xpose.msra.mxu0 0.0
      %860 = vmatprep.subr.mxu0 0.0
      %861 = vmatpush1.xpose.msra.mxu0 0.0
      %862 = vmatprep.subr.mxu0 0.0
      %863 = vmatpush1.xpose.msra.mxu0 0.0
      %864 = vmatprep.subr.mxu0 0.0
      %865 = vmatpush1.xpose.msra.mxu0 0.0
      %866 = vmatprep.subr.mxu0 0.0
      %867 = vmatpush1.xpose.msra.mxu0 0.0
      %868 = vmatprep.subr.mxu0 0.0
      %869 = vmatpush1.xpose.msra.mxu0 0.0
      %870 = vmatprep.subr.mxu0 0.0
      %871 = vmatpush1.xpose.msra.mxu0 0.0
      %872 = vmatprep.subr.mxu0 0.0
      %873 = vmatpush1.xpose.msra.mxu0 0.0
      %874 = vmatprep.mubr.f32.mxu0 0.0
      %875 = vmatmul.mubr.f32.gmra.mrb[0].mxu0 %v805
      %v876 = vpop.f32.mrb[0].mxu0
      %v877 = vadd.f32 0.0, %v876
      %v878 = vpop.f32.mrb[0].mxu0
      %879 = vdwg.mxu0
      %v880 = vmax.f32 %v877, 1e-30
      %v881 = vrcp.pop %v880
      %v882 = vmul.f32 %v716, %v881
      %v884 = vsel %vm803, %v882, 0
      %886 = vmatprep.subr.mxu0 0.0
      %887 = vmatpush1.msra.mxu0 %v802
      %888 = vmatprep.subr.mxu0 0.0
      %889 = vmatpush1.msra.mxu0 0.0
      %890 = vmatprep.subr.mxu0 0.0
      %891 = vmatpush1.msra.mxu0 0.0
      %892 = vmatprep.subr.mxu0 0.0
      %893 = vmatpush1.msra.mxu0 0.0
      %894 = vmatprep.subr.mxu0 0.0
      %895 = vmatpush1.msra.mxu0 0.0
      %896 = vmatprep.subr.mxu0 0.0
      %897 = vmatpush1.msra.mxu0 0.0
      %898 = vmatprep.subr.mxu0 0.0
      %899 = vmatpush1.msra.mxu0 0.0
      %900 = vmatprep.subr.mxu0 0.0
      %901 = vmatpush1.msra.mxu0 0.0
      %902 = vmatprep.subr.mxu0 0.0
      %903 = vmatpush1.msra.mxu0 0.0
      %904 = vmatprep.subr.mxu0 0.0
      %905 = vmatpush1.msra.mxu0 0.0
      %906 = vmatprep.subr.mxu0 0.0
      %907 = vmatpush1.msra.mxu0 0.0
      %908 = vmatprep.subr.mxu0 0.0
      %909 = vmatpush1.msra.mxu0 0.0
      %910 = vmatprep.subr.mxu0 0.0
      %911 = vmatpush1.msra.mxu0 0.0
      %912 = vmatprep.subr.mxu0 0.0
      %913 = vmatpush1.msra.mxu0 0.0
      %914 = vmatprep.subr.mxu0 0.0
      %915 = vmatpush1.msra.mxu0 0.0
      %916 = vmatprep.subr.mxu0 0.0
      %917 = vmatpush1.msra.mxu0 0.0
      %918 = vmatprep.subr.mxu0 0.0
      %919 = vmatpush1.msra.mxu0 0.0
      %920 = vmatprep.subr.mxu0 0.0
      %921 = vmatpush1.msra.mxu0 0.0
      %922 = vmatprep.subr.mxu0 0.0
      %923 = vmatpush1.msra.mxu0 0.0
      %924 = vmatprep.subr.mxu0 0.0
      %925 = vmatpush1.msra.mxu0 0.0
      %926 = vmatprep.subr.mxu0 0.0
      %927 = vmatpush1.msra.mxu0 0.0
      %928 = vmatprep.subr.mxu0 0.0
      %929 = vmatpush1.msra.mxu0 0.0
      %930 = vmatprep.subr.mxu0 0.0
      %931 = vmatpush1.msra.mxu0 0.0
      %932 = vmatprep.subr.mxu0 0.0
      %933 = vmatpush1.msra.mxu0 0.0
      %934 = vmatprep.subr.mxu0 0.0
      %935 = vmatpush1.msra.mxu0 0.0
      %936 = vmatprep.subr.mxu0 0.0
      %937 = vmatpush1.msra.mxu0 0.0
      %938 = vmatprep.subr.mxu0 0.0
      %939 = vmatpush1.msra.mxu0 0.0
      %940 = vmatprep.subr.mxu0 0.0
      %941 = vmatpush1.msra.mxu0 0.0
      %942 = vmatprep.subr.mxu0 0.0
      %943 = vmatpush1.msra.mxu0 0.0
      %944 = vmatprep.subr.mxu0 0.0
      %945 = vmatpush1.msra.mxu0 0.0
      %946 = vmatprep.subr.mxu0 0.0
      %947 = vmatpush1.msra.mxu0 0.0
      %948 = vmatprep.subr.mxu0 0.0
      %949 = vmatpush1.msra.mxu0 0.0
      %950 = vmatprep.mubr.f32.mxu0 0.0
      %951 = vmatmul.mubr.f32.gmra.mrb[0].mxu0 %v884
      %v952 = vpop.f32.mrb[0].mxu0
      %v953 = vadd.f32 0.0, %v952
      %v954 = vpop.f32.mrb[0].mxu0
      %955 = vdwg.mxu0
      %v956 = vmax.f32 %v953, 1e-30
      %v957 = vrcp.pop %v956
      %v958 = vmul.f32 %v799, %v957
      %v960 = vsel %vm803, %v958, 0
      %962 = vmatprep.subr.mxu0 0.0
      %963 = vmatpush1.xpose.msra.mxu0 %v808
      %964 = vmatprep.subr.mxu0 0.0
      %965 = vmatpush1.xpose.msra.mxu0 0.0
      %966 = vmatprep.subr.mxu0 0.0
      %967 = vmatpush1.xpose.msra.mxu0 0.0
      %968 = vmatprep.subr.mxu0 0.0
      %969 = vmatpush1.xpose.msra.mxu0 0.0
      %970 = vmatprep.subr.mxu0 0.0
      %971 = vmatpush1.xpose.msra.mxu0 0.0
      %972 = vmatprep.subr.mxu0 0.0
      %973 = vmatpush1.xpose.msra.mxu0 0.0
      %974 = vmatprep.subr.mxu0 0.0
      %975 = vmatpush1.xpose.msra.mxu0 0.0
      %976 = vmatprep.subr.mxu0 0.0
      %977 = vmatpush1.xpose.msra.mxu0 0.0
      %978 = vmatprep.subr.mxu0 0.0
      %979 = vmatpush1.xpose.msra.mxu0 0.0
      %980 = vmatprep.subr.mxu0 0.0
      %981 = vmatpush1.xpose.msra.mxu0 0.0
      %982 = vmatprep.subr.mxu0 0.0
      %983 = vmatpush1.xpose.msra.mxu0 0.0
      %984 = vmatprep.subr.mxu0 0.0
      %985 = vmatpush1.xpose.msra.mxu0 0.0
      %986 = vmatprep.subr.mxu0 0.0
      %987 = vmatpush1.xpose.msra.mxu0 0.0
      %988 = vmatprep.subr.mxu0 0.0
      %989 = vmatpush1.xpose.msra.mxu0 0.0
      %990 = vmatprep.subr.mxu0 0.0
      %991 = vmatpush1.xpose.msra.mxu0 0.0
      %992 = vmatprep.subr.mxu0 0.0
      %993 = vmatpush1.xpose.msra.mxu0 0.0
      %994 = vmatprep.subr.mxu0 0.0
      %995 = vmatpush1.xpose.msra.mxu0 0.0
      %996 = vmatprep.subr.mxu0 0.0
      %997 = vmatpush1.xpose.msra.mxu0 0.0
      %998 = vmatprep.subr.mxu0 0.0
      %999 = vmatpush1.xpose.msra.mxu0 0.0
      %1000 = vmatprep.subr.mxu0 0.0
      %1001 = vmatpush1.xpose.msra.mxu0 0.0
      %1002 = vmatprep.subr.mxu0 0.0
      %1003 = vmatpush1.xpose.msra.mxu0 0.0
      %1004 = vmatprep.subr.mxu0 0.0
      %1005 = vmatpush1.xpose.msra.mxu0 0.0
      %1006 = vmatprep.subr.mxu0 0.0
      %1007 = vmatpush1.xpose.msra.mxu0 0.0
      %1008 = vmatprep.subr.mxu0 0.0
      %1009 = vmatpush1.xpose.msra.mxu0 0.0
      %1010 = vmatprep.subr.mxu0 0.0
      %1011 = vmatpush1.xpose.msra.mxu0 0.0
      %1012 = vmatprep.subr.mxu0 0.0
      %1013 = vmatpush1.xpose.msra.mxu0 0.0
      %1014 = vmatprep.subr.mxu0 0.0
      %1015 = vmatpush1.xpose.msra.mxu0 0.0
      %1016 = vmatprep.subr.mxu0 0.0
      %1017 = vmatpush1.xpose.msra.mxu0 0.0
      %1018 = vmatprep.subr.mxu0 0.0
      %1019 = vmatpush1.xpose.msra.mxu0 0.0
      %1020 = vmatprep.subr.mxu0 0.0
      %1021 = vmatpush1.xpose.msra.mxu0 0.0
      %1022 = vmatprep.subr.mxu0 0.0
      %1023 = vmatpush1.xpose.msra.mxu0 0.0
      %1024 = vmatprep.subr.mxu0 0.0
      %1025 = vmatpush1.xpose.msra.mxu0 0.0
      %1026 = vmatprep.mubr.f32.mxu0 0.0
      %1027 = vmatmul.mubr.f32.gmra.mrb[0].mxu0 %v960
      %v1028 = vpop.f32.mrb[0].mxu0
      %v1029 = vadd.f32 0.0, %v1028
      %v1030 = vpop.f32.mrb[0].mxu0
      %1031 = vdwg.mxu0
      %v1032 = vmax.f32 %v1029, 1e-30
      %v1033 = vrcp.pop %v1032
      %v1034 = vmul.f32 %v716, %v1033
      %v1036 = vsel %vm803, %v1034, 0
      %1038 = vmatprep.subr.mxu0 0.0
      %1039 = vmatpush1.msra.mxu0 %v802
      %1040 = vmatprep.subr.mxu0 0.0
      %1041 = vmatpush1.msra.mxu0 0.0
      %1042 = vmatprep.subr.mxu0 0.0
      %1043 = vmatpush1.msra.mxu0 0.0
      %1044 = vmatprep.subr.mxu0 0.0
      %1045 = vmatpush1.msra.mxu0 0.0
      %1046 = vmatprep.subr.mxu0 0.0
      %1047 = vmatpush1.msra.mxu0 0.0
      %1048 = vmatprep.subr.mxu0 0.0
      %1049 = vmatpush1.msra.mxu0 0.0
      %1050 = vmatprep.subr.mxu0 0.0
      %1051 = vmatpush1.msra.mxu0 0.0
      %1052 = vmatprep.subr.mxu0 0.0
      %1053 = vmatpush1.msra.mxu0 0.0
      %1054 = vmatprep.subr.mxu0 0.0
      %1055 = vmatpush1.msra.mxu0 0.0
      %1056 = vmatprep.subr.mxu0 0.0
      %1057 = vmatpush1.msra.mxu0 0.0
      %1058 = vmatprep.subr.mxu0 0.0
      %1059 = vmatpush1.msra.mxu0 0.0
      %1060 = vmatprep.subr.mxu0 0.0
      %1061 = vmatpush1.msra.mxu0 0.0
      %1062 = vmatprep.subr.mxu0 0.0
      %1063 = vmatpush1.msra.mxu0 0.0
      %1064 = vmatprep.subr.mxu0 0.0
      %1065 = vmatpush1.msra.mxu0 0.0
      %1066 = vmatprep.subr.mxu0 0.0
      %1067 = vmatpush1.msra.mxu0 0.0
      %1068 = vmatprep.subr.mxu0 0.0
      %1069 = vmatpush1.msra.mxu0 0.0
      %1070 = vmatprep.subr.mxu0 0.0
      %1071 = vmatpush1.msra.mxu0 0.0
      %1072 = vmatprep.subr.mxu0 0.0
      %1073 = vmatpush1.msra.mxu0 0.0
      %1074 = vmatprep.subr.mxu0 0.0
      %1075 = vmatpush1.msra.mxu0 0.0
      %1076 = vmatprep.subr.mxu0 0.0
      %1077 = vmatpush1.msra.mxu0 0.0
      %1078 = vmatprep.subr.mxu0 0.0
      %1079 = vmatpush1.msra.mxu0 0.0
      %1080 = vmatprep.subr.mxu0 0.0
      %1081 = vmatpush1.msra.mxu0 0.0
      %1082 = vmatprep.subr.mxu0 0.0
      %1083 = vmatpush1.msra.mxu0 0.0
      %1084 = vmatprep.subr.mxu0 0.0
      %1085 = vmatpush1.msra.mxu0 0.0
      %1086 = vmatprep.subr.mxu0 0.0
      %1087 = vmatpush1.msra.mxu0 0.0
      %1088 = vmatprep.subr.mxu0 0.0
      %1089 = vmatpush1.msra.mxu0 0.0
      %1090 = vmatprep.subr.mxu0 0.0
      %1091 = vmatpush1.msra.mxu0 0.0
      %1092 = vmatprep.subr.mxu0 0.0
      %1093 = vmatpush1.msra.mxu0 0.0
      %1094 = vmatprep.subr.mxu0 0.0
      %1095 = vmatpush1.msra.mxu0 0.0
      %1096 = vmatprep.subr.mxu0 0.0
      %1097 = vmatpush1.msra.mxu0 0.0
      %1098 = vmatprep.subr.mxu0 0.0
      %1099 = vmatpush1.msra.mxu0 0.0
      %1100 = vmatprep.subr.mxu0 0.0
      %1101 = vmatpush1.msra.mxu0 0.0
      %1102 = vmatprep.mubr.f32.mxu0 0.0
      %1103 = vmatmul.mubr.f32.gmra.mrb[0].mxu0 %v1036
      %v1104 = vpop.f32.mrb[0].mxu0
      %v1105 = vadd.f32 0.0, %v1104
      %v1106 = vpop.f32.mrb[0].mxu0
      %1107 = vdwg.mxu0
      %v1108 = vmax.f32 %v1105, 1e-30
      %v1109 = vrcp.pop %v1108
      %v1110 = vmul.f32 %v799, %v1109
      %v1112 = vsel %vm803, %v1110, 0
      %1114 = vmatprep.subr.mxu0 0.0
      %1115 = vmatpush1.xpose.msra.mxu0 %v808
      %1116 = vmatprep.subr.mxu0 0.0
      %1117 = vmatpush1.xpose.msra.mxu0 0.0
      %1118 = vmatprep.subr.mxu0 0.0
      %1119 = vmatpush1.xpose.msra.mxu0 0.0
      %1120 = vmatprep.subr.mxu0 0.0
      %1121 = vmatpush1.xpose.msra.mxu0 0.0
      %1122 = vmatprep.subr.mxu0 0.0
      %1123 = vmatpush1.xpose.msra.mxu0 0.0
      %1124 = vmatprep.subr.mxu0 0.0
      %1125 = vmatpush1.xpose.msra.mxu0 0.0
      %1126 = vmatprep.subr.mxu0 0.0
      %1127 = vmatpush1.xpose.msra.mxu0 0.0
      %1128 = vmatprep.subr.mxu0 0.0
      %1129 = vmatpush1.xpose.msra.mxu0 0.0
      %1130 = vmatprep.subr.mxu0 0.0
      %1131 = vmatpush1.xpose.msra.mxu0 0.0
      %1132 = vmatprep.subr.mxu0 0.0
      %1133 = vmatpush1.xpose.msra.mxu0 0.0
      %1134 = vmatprep.subr.mxu0 0.0
      %1135 = vmatpush1.xpose.msra.mxu0 0.0
      %1136 = vmatprep.subr.mxu0 0.0
      %1137 = vmatpush1.xpose.msra.mxu0 0.0
      %1138 = vmatprep.subr.mxu0 0.0
      %1139 = vmatpush1.xpose.msra.mxu0 0.0
      %1140 = vmatprep.subr.mxu0 0.0
      %1141 = vmatpush1.xpose.msra.mxu0 0.0
      %1142 = vmatprep.subr.mxu0 0.0
      %1143 = vmatpush1.xpose.msra.mxu0 0.0
      %1144 = vmatprep.subr.mxu0 0.0
      %1145 = vmatpush1.xpose.msra.mxu0 0.0
      %1146 = vmatprep.subr.mxu0 0.0
      %1147 = vmatpush1.xpose.msra.mxu0 0.0
      %1148 = vmatprep.subr.mxu0 0.0
      %1149 = vmatpush1.xpose.msra.mxu0 0.0
      %1150 = vmatprep.subr.mxu0 0.0
      %1151 = vmatpush1.xpose.msra.mxu0 0.0
      %1152 = vmatprep.subr.mxu0 0.0
      %1153 = vmatpush1.xpose.msra.mxu0 0.0
      %1154 = vmatprep.subr.mxu0 0.0
      %1155 = vmatpush1.xpose.msra.mxu0 0.0
      %1156 = vmatprep.subr.mxu0 0.0
      %1157 = vmatpush1.xpose.msra.mxu0 0.0
      %1158 = vmatprep.subr.mxu0 0.0
      %1159 = vmatpush1.xpose.msra.mxu0 0.0
      %1160 = vmatprep.subr.mxu0 0.0
      %1161 = vmatpush1.xpose.msra.mxu0 0.0
      %1162 = vmatprep.subr.mxu0 0.0
      %1163 = vmatpush1.xpose.msra.mxu0 0.0
      %1164 = vmatprep.subr.mxu0 0.0
      %1165 = vmatpush1.xpose.msra.mxu0 0.0
      %1166 = vmatprep.subr.mxu0 0.0
      %1167 = vmatpush1.xpose.msra.mxu0 0.0
      %1168 = vmatprep.subr.mxu0 0.0
      %1169 = vmatpush1.xpose.msra.mxu0 0.0
      %1170 = vmatprep.subr.mxu0 0.0
      %1171 = vmatpush1.xpose.msra.mxu0 0.0
      %1172 = vmatprep.subr.mxu0 0.0
      %1173 = vmatpush1.xpose.msra.mxu0 0.0
      %1174 = vmatprep.subr.mxu0 0.0
      %1175 = vmatpush1.xpose.msra.mxu0 0.0
      %1176 = vmatprep.subr.mxu0 0.0
      %1177 = vmatpush1.xpose.msra.mxu0 0.0
      %1178 = vmatprep.mubr.f32.mxu0 0.0
      %1179 = vmatmul.mubr.f32.gmra.mrb[0].mxu0 %v1112
      %v1180 = vpop.f32.mrb[0].mxu0
      %v1181 = vadd.f32 0.0, %v1180
      %v1182 = vpop.f32.mrb[0].mxu0
      %1183 = vdwg.mxu0
      %v1184 = vmax.f32 %v1181, 1e-30
      %v1185 = vrcp.pop %v1184
      %v1186 = vmul.f32 %v716, %v1185
      %v1188 = vsel %vm803, %v1186, 0
      %1190 = vmatprep.subr.mxu0 0.0
      %1191 = vmatpush1.msra.mxu0 %v802
      %1192 = vmatprep.subr.mxu0 0.0
      %1193 = vmatpush1.msra.mxu0 0.0
      %1194 = vmatprep.subr.mxu0 0.0
      %1195 = vmatpush1.msra.mxu0 0.0
      %1196 = vmatprep.subr.mxu0 0.0
      %1197 = vmatpush1.msra.mxu0 0.0
      %1198 = vmatprep.subr.mxu0 0.0
      %1199 = vmatpush1.msra.mxu0 0.0
      %1200 = vmatprep.subr.mxu0 0.0
      %1201 = vmatpush1.msra.mxu0 0.0
      %1202 = vmatprep.subr.mxu0 0.0
      %1203 = vmatpush1.msra.mxu0 0.0
      %1204 = vmatprep.subr.mxu0 0.0
      %1205 = vmatpush1.msra.mxu0 0.0
      %1206 = vmatprep.subr.mxu0 0.0
      %1207 = vmatpush1.msra.mxu0 0.0
      %1208 = vmatprep.subr.mxu0 0.0
      %1209 = vmatpush1.msra.mxu0 0.0
      %1210 = vmatprep.subr.mxu0 0.0
      %1211 = vmatpush1.msra.mxu0 0.0
      %1212 = vmatprep.subr.mxu0 0.0
      %1213 = vmatpush1.msra.mxu0 0.0
      %1214 = vmatprep.subr.mxu0 0.0
      %1215 = vmatpush1.msra.mxu0 0.0
      %1216 = vmatprep.subr.mxu0 0.0
      %1217 = vmatpush1.msra.mxu0 0.0
      %1218 = vmatprep.subr.mxu0 0.0
      %1219 = vmatpush1.msra.mxu0 0.0
      %1220 = vmatprep.subr.mxu0 0.0
      %1221 = vmatpush1.msra.mxu0 0.0
      %1222 = vmatprep.subr.mxu0 0.0
      %1223 = vmatpush1.msra.mxu0 0.0
      %1224 = vmatprep.subr.mxu0 0.0
      %1225 = vmatpush1.msra.mxu0 0.0
      %1226 = vmatprep.subr.mxu0 0.0
      %1227 = vmatpush1.msra.mxu0 0.0
      %1228 = vmatprep.subr.mxu0 0.0
      %1229 = vmatpush1.msra.mxu0 0.0
      %1230 = vmatprep.subr.mxu0 0.0
      %1231 = vmatpush1.msra.mxu0 0.0
      %1232 = vmatprep.subr.mxu0 0.0
      %1233 = vmatpush1.msra.mxu0 0.0
      %1234 = vmatprep.subr.mxu0 0.0
      %1235 = vmatpush1.msra.mxu0 0.0
      %1236 = vmatprep.subr.mxu0 0.0
      %1237 = vmatpush1.msra.mxu0 0.0
      %1238 = vmatprep.subr.mxu0 0.0
      %1239 = vmatpush1.msra.mxu0 0.0
      %1240 = vmatprep.subr.mxu0 0.0
      %1241 = vmatpush1.msra.mxu0 0.0
      %1242 = vmatprep.subr.mxu0 0.0
      %1243 = vmatpush1.msra.mxu0 0.0
      %1244 = vmatprep.subr.mxu0 0.0
      %1245 = vmatpush1.msra.mxu0 0.0
      %1246 = vmatprep.subr.mxu0 0.0
      %1247 = vmatpush1.msra.mxu0 0.0
      %1248 = vmatprep.subr.mxu0 0.0
      %1249 = vmatpush1.msra.mxu0 0.0
      %1250 = vmatprep.subr.mxu0 0.0
      %1251 = vmatpush1.msra.mxu0 0.0
      %1252 = vmatprep.subr.mxu0 0.0
      %1253 = vmatpush1.msra.mxu0 0.0
      %1254 = vmatprep.mubr.f32.mxu0 0.0
      %1255 = vmatmul.mubr.f32.gmra.mrb[0].mxu0 %v1188
      %v1256 = vpop.f32.mrb[0].mxu0
      %v1257 = vadd.f32 0.0, %v1256
      %v1258 = vpop.f32.mrb[0].mxu0
      %1259 = vdwg.mxu0
      %v1260 = vmax.f32 %v1257, 1e-30
      %v1261 = vrcp.pop %v1260
      %v1262 = vmul.f32 %v799, %v1261
      %v1264 = vsel %vm803, %v1262, 0
      %1266 = vmatprep.subr.mxu0 0.0
      %1267 = vmatpush1.xpose.msra.mxu0 %v808
      %1268 = vmatprep.subr.mxu0 0.0
      %1269 = vmatpush1.xpose.msra.mxu0 0.0
      %1270 = vmatprep.subr.mxu0 0.0
      %1271 = vmatpush1.xpose.msra.mxu0 0.0
      %1272 = vmatprep.subr.mxu0 0.0
      %1273 = vmatpush1.xpose.msra.mxu0 0.0
      %1274 = vmatprep.subr.mxu0 0.0
      %1275 = vmatpush1.xpose.msra.mxu0 0.0
      %1276 = vmatprep.subr.mxu0 0.0
      %1277 = vmatpush1.xpose.msra.mxu0 0.0
      %1278 = vmatprep.subr.mxu0 0.0
      %1279 = vmatpush1.xpose.msra.mxu0 0.0
      %1280 = vmatprep.subr.mxu0 0.0
      %1281 = vmatpush1.xpose.msra.mxu0 0.0
      %1282 = vmatprep.subr.mxu0 0.0
      %1283 = vmatpush1.xpose.msra.mxu0 0.0
      %1284 = vmatprep.subr.mxu0 0.0
      %1285 = vmatpush1.xpose.msra.mxu0 0.0
      %1286 = vmatprep.subr.mxu0 0.0
      %1287 = vmatpush1.xpose.msra.mxu0 0.0
      %1288 = vmatprep.subr.mxu0 0.0
      %1289 = vmatpush1.xpose.msra.mxu0 0.0
      %1290 = vmatprep.subr.mxu0 0.0
      %1291 = vmatpush1.xpose.msra.mxu0 0.0
      %1292 = vmatprep.subr.mxu0 0.0
      %1293 = vmatpush1.xpose.msra.mxu0 0.0
      %1294 = vmatprep.subr.mxu0 0.0
      %1295 = vmatpush1.xpose.msra.mxu0 0.0
      %1296 = vmatprep.subr.mxu0 0.0
      %1297 = vmatpush1.xpose.msra.mxu0 0.0
      %1298 = vmatprep.subr.mxu0 0.0
      %1299 = vmatpush1.xpose.msra.mxu0 0.0
      %1300 = vmatprep.subr.mxu0 0.0
      %1301 = vmatpush1.xpose.msra.mxu0 0.0
      %1302 = vmatprep.subr.mxu0 0.0
      %1303 = vmatpush1.xpose.msra.mxu0 0.0
      %1304 = vmatprep.subr.mxu0 0.0
      %1305 = vmatpush1.xpose.msra.mxu0 0.0
      %1306 = vmatprep.subr.mxu0 0.0
      %1307 = vmatpush1.xpose.msra.mxu0 0.0
      %1308 = vmatprep.subr.mxu0 0.0
      %1309 = vmatpush1.xpose.msra.mxu0 0.0
      %1310 = vmatprep.subr.mxu0 0.0
      %1311 = vmatpush1.xpose.msra.mxu0 0.0
      %1312 = vmatprep.subr.mxu0 0.0
      %1313 = vmatpush1.xpose.msra.mxu0 0.0
      %1314 = vmatprep.subr.mxu0 0.0
      %1315 = vmatpush1.xpose.msra.mxu0 0.0
      %1316 = vmatprep.subr.mxu0 0.0
      %1317 = vmatpush1.xpose.msra.mxu0 0.0
      %1318 = vmatprep.subr.mxu0 0.0
      %1319 = vmatpush1.xpose.msra.mxu0 0.0
      %1320 = vmatprep.subr.mxu0 0.0
      %1321 = vmatpush1.xpose.msra.mxu0 0.0
      %1322 = vmatprep.subr.mxu0 0.0
      %1323 = vmatpush1.xpose.msra.mxu0 0.0
      %1324 = vmatprep.subr.mxu0 0.0
      %1325 = vmatpush1.xpose.msra.mxu0 0.0
      %1326 = vmatprep.subr.mxu0 0.0
      %1327 = vmatpush1.xpose.msra.mxu0 0.0
      %1328 = vmatprep.subr.mxu0 0.0
      %1329 = vmatpush1.xpose.msra.mxu0 0.0
      %1330 = vmatprep.mubr.f32.mxu0 0.0
      %1331 = vmatmul.mubr.f32.gmra.mrb[0].mxu0 %v1264
      %v1332 = vpop.f32.mrb[0].mxu0
      %v1333 = vadd.f32 0.0, %v1332
      %v1334 = vpop.f32.mrb[0].mxu0
      %1335 = vdwg.mxu0
      %v1336 = vmax.f32 %v1333, 1e-30
      %v1337 = vrcp.pop %v1336
      %v1338 = vmul.f32 %v716, %v1337
      %v1340 = vsel %vm803, %v1338, 0
      %1342 = vmatprep.subr.mxu0 0.0
      %1343 = vmatpush1.msra.mxu0 %v802
      %1344 = vmatprep.subr.mxu0 0.0
      %1345 = vmatpush1.msra.mxu0 0.0
      %1346 = vmatprep.subr.mxu0 0.0
      %1347 = vmatpush1.msra.mxu0 0.0
      %1348 = vmatprep.subr.mxu0 0.0
      %1349 = vmatpush1.msra.mxu0 0.0
      %1350 = vmatprep.subr.mxu0 0.0
      %1351 = vmatpush1.msra.mxu0 0.0
      %1352 = vmatprep.subr.mxu0 0.0
      %1353 = vmatpush1.msra.mxu0 0.0
      %1354 = vmatprep.subr.mxu0 0.0
      %1355 = vmatpush1.msra.mxu0 0.0
      %1356 = vmatprep.subr.mxu0 0.0
      %1357 = vmatpush1.msra.mxu0 0.0
      %1358 = vmatprep.subr.mxu0 0.0
      %1359 = vmatpush1.msra.mxu0 0.0
      %1360 = vmatprep.subr.mxu0 0.0
      %1361 = vmatpush1.msra.mxu0 0.0
      %1362 = vmatprep.subr.mxu0 0.0
      %1363 = vmatpush1.msra.mxu0 0.0
      %1364 = vmatprep.subr.mxu0 0.0
      %1365 = vmatpush1.msra.mxu0 0.0
      %1366 = vmatprep.subr.mxu0 0.0
      %1367 = vmatpush1.msra.mxu0 0.0
      %1368 = vmatprep.subr.mxu0 0.0
      %1369 = vmatpush1.msra.mxu0 0.0
      %1370 = vmatprep.subr.mxu0 0.0
      %1371 = vmatpush1.msra.mxu0 0.0
      %1372 = vmatprep.subr.mxu0 0.0
      %1373 = vmatpush1.msra.mxu0 0.0
      %1374 = vmatprep.subr.mxu0 0.0
      %1375 = vmatpush1.msra.mxu0 0.0
      %1376 = vmatprep.subr.mxu0 0.0
      %1377 = vmatpush1.msra.mxu0 0.0
      %1378 = vmatprep.subr.mxu0 0.0
      %1379 = vmatpush1.msra.mxu0 0.0
      %1380 = vmatprep.subr.mxu0 0.0
      %1381 = vmatpush1.msra.mxu0 0.0
      %1382 = vmatprep.subr.mxu0 0.0
      %1383 = vmatpush1.msra.mxu0 0.0
      %1384 = vmatprep.subr.mxu0 0.0
      %1385 = vmatpush1.msra.mxu0 0.0
      %1386 = vmatprep.subr.mxu0 0.0
      %1387 = vmatpush1.msra.mxu0 0.0
      %1388 = vmatprep.subr.mxu0 0.0
      %1389 = vmatpush1.msra.mxu0 0.0
      %1390 = vmatprep.subr.mxu0 0.0
      %1391 = vmatpush1.msra.mxu0 0.0
      %1392 = vmatprep.subr.mxu0 0.0
      %1393 = vmatpush1.msra.mxu0 0.0
      %1394 = vmatprep.subr.mxu0 0.0
      %1395 = vmatpush1.msra.mxu0 0.0
      %1396 = vmatprep.subr.mxu0 0.0
      %1397 = vmatpush1.msra.mxu0 0.0
      %1398 = vmatprep.subr.mxu0 0.0
      %1399 = vmatpush1.msra.mxu0 0.0
      %1400 = vmatprep.subr.mxu0 0.0
      %1401 = vmatpush1.msra.mxu0 0.0
      %1402 = vmatprep.subr.mxu0 0.0
      %1403 = vmatpush1.msra.mxu0 0.0
      %1404 = vmatprep.subr.mxu0 0.0
      %1405 = vmatpush1.msra.mxu0 0.0
      %1406 = vmatprep.mubr.f32.mxu0 0.0
      %1407 = vmatmul.mubr.f32.gmra.mrb[0].mxu0 %v1340
      %v1408 = vpop.f32.mrb[0].mxu0
      %v1409 = vadd.f32 0.0, %v1408
      %v1410 = vpop.f32.mrb[0].mxu0
      %1411 = vdwg.mxu0
      %v1412 = vmax.f32 %v1409, 1e-30
      %v1413 = vrcp.pop %v1412
      %v1414 = vmul.f32 %v799, %v1413
      %v1416 = vsel %vm803, %v1414, 0
      %1418 = vmatprep.subr.mxu0 0.0
      %1419 = vmatpush1.xpose.msra.mxu0 %v808
      %1420 = vmatprep.subr.mxu0 0.0
      %1421 = vmatpush1.xpose.msra.mxu0 0.0
      %1422 = vmatprep.subr.mxu0 0.0
      %1423 = vmatpush1.xpose.msra.mxu0 0.0
      %1424 = vmatprep.subr.mxu0 0.0
      %1425 = vmatpush1.xpose.msra.mxu0 0.0
      %1426 = vmatprep.subr.mxu0 0.0
      %1427 = vmatpush1.xpose.msra.mxu0 0.0
      %1428 = vmatprep.subr.mxu0 0.0
      %1429 = vmatpush1.xpose.msra.mxu0 0.0
      %1430 = vmatprep.subr.mxu0 0.0
      %1431 = vmatpush1.xpose.msra.mxu0 0.0
      %1432 = vmatprep.subr.mxu0 0.0
      %1433 = vmatpush1.xpose.msra.mxu0 0.0
      %1434 = vmatprep.subr.mxu0 0.0
      %1435 = vmatpush1.xpose.msra.mxu0 0.0
      %1436 = vmatprep.subr.mxu0 0.0
      %1437 = vmatpush1.xpose.msra.mxu0 0.0
      %1438 = vmatprep.subr.mxu0 0.0
      %1439 = vmatpush1.xpose.msra.mxu0 0.0
      %1440 = vmatprep.subr.mxu0 0.0
      %1441 = vmatpush1.xpose.msra.mxu0 0.0
      %1442 = vmatprep.subr.mxu0 0.0
      %1443 = vmatpush1.xpose.msra.mxu0 0.0
      %1444 = vmatprep.subr.mxu0 0.0
      %1445 = vmatpush1.xpose.msra.mxu0 0.0
      %1446 = vmatprep.subr.mxu0 0.0
      %1447 = vmatpush1.xpose.msra.mxu0 0.0
      %1448 = vmatprep.subr.mxu0 0.0
      %1449 = vmatpush1.xpose.msra.mxu0 0.0
      %1450 = vmatprep.subr.mxu0 0.0
      %1451 = vmatpush1.xpose.msra.mxu0 0.0
      %1452 = vmatprep.subr.mxu0 0.0
      %1453 = vmatpush1.xpose.msra.mxu0 0.0
      %1454 = vmatprep.subr.mxu0 0.0
      %1455 = vmatpush1.xpose.msra.mxu0 0.0
      %1456 = vmatprep.subr.mxu0 0.0
      %1457 = vmatpush1.xpose.msra.mxu0 0.0
      %1458 = vmatprep.subr.mxu0 0.0
      %1459 = vmatpush1.xpose.msra.mxu0 0.0
      %1460 = vmatprep.subr.mxu0 0.0
      %1461 = vmatpush1.xpose.msra.mxu0 0.0
      %1462 = vmatprep.subr.mxu0 0.0
      %1463 = vmatpush1.xpose.msra.mxu0 0.0
      %1464 = vmatprep.subr.mxu0 0.0
      %1465 = vmatpush1.xpose.msra.mxu0 0.0
      %1466 = vmatprep.subr.mxu0 0.0
      %1467 = vmatpush1.xpose.msra.mxu0 0.0
      %1468 = vmatprep.subr.mxu0 0.0
      %1469 = vmatpush1.xpose.msra.mxu0 0.0
      %1470 = vmatprep.subr.mxu0 0.0
      %1471 = vmatpush1.xpose.msra.mxu0 0.0
      %1472 = vmatprep.subr.mxu0 0.0
      %1473 = vmatpush1.xpose.msra.mxu0 0.0
      %1474 = vmatprep.subr.mxu0 0.0
      %1475 = vmatpush1.xpose.msra.mxu0 0.0
      %1476 = vmatprep.subr.mxu0 0.0
      %1477 = vmatpush1.xpose.msra.mxu0 0.0
      %1478 = vmatprep.subr.mxu0 0.0
      %1479 = vmatpush1.xpose.msra.mxu0 0.0
      %1480 = vmatprep.subr.mxu0 0.0
      %1481 = vmatpush1.xpose.msra.mxu0 0.0
      %1482 = vmatprep.mubr.f32.mxu0 0.0
      %1483 = vmatmul.mubr.f32.gmra.mrb[0].mxu0 %v1416
      %v1484 = vpop.f32.mrb[0].mxu0
      %v1485 = vadd.f32 0.0, %v1484
      %v1486 = vpop.f32.mrb[0].mxu0
      %1487 = vdwg.mxu0
      %v1488 = vmax.f32 %v1485, 1e-30
      %v1489 = vrcp.pop %v1488
      %v1490 = vmul.f32 %v716, %v1489
      %v1492 = vsel %vm803, %v1490, 0
      %1494 = vmatprep.subr.mxu0 0.0
      %1495 = vmatpush1.msra.mxu0 %v802
      %1496 = vmatprep.subr.mxu0 0.0
      %1497 = vmatpush1.msra.mxu0 0.0
      %1498 = vmatprep.subr.mxu0 0.0
      %1499 = vmatpush1.msra.mxu0 0.0
      %1500 = vmatprep.subr.mxu0 0.0
      %1501 = vmatpush1.msra.mxu0 0.0
      %1502 = vmatprep.subr.mxu0 0.0
      %1503 = vmatpush1.msra.mxu0 0.0
      %1504 = vmatprep.subr.mxu0 0.0
      %1505 = vmatpush1.msra.mxu0 0.0
      %1506 = vmatprep.subr.mxu0 0.0
      %1507 = vmatpush1.msra.mxu0 0.0
      %1508 = vmatprep.subr.mxu0 0.0
      %1509 = vmatpush1.msra.mxu0 0.0
      %1510 = vmatprep.subr.mxu0 0.0
      %1511 = vmatpush1.msra.mxu0 0.0
      %1512 = vmatprep.subr.mxu0 0.0
      %1513 = vmatpush1.msra.mxu0 0.0
      %1514 = vmatprep.subr.mxu0 0.0
      %1515 = vmatpush1.msra.mxu0 0.0
      %1516 = vmatprep.subr.mxu0 0.0
      %1517 = vmatpush1.msra.mxu0 0.0
      %1518 = vmatprep.subr.mxu0 0.0
      %1519 = vmatpush1.msra.mxu0 0.0
      %1520 = vmatprep.subr.mxu0 0.0
      %1521 = vmatpush1.msra.mxu0 0.0
      %1522 = vmatprep.subr.mxu0 0.0
      %1523 = vmatpush1.msra.mxu0 0.0
      %1524 = vmatprep.subr.mxu0 0.0
      %1525 = vmatpush1.msra.mxu0 0.0
      %1526 = vmatprep.subr.mxu0 0.0
      %1527 = vmatpush1.msra.mxu0 0.0
      %1528 = vmatprep.subr.mxu0 0.0
      %1529 = vmatpush1.msra.mxu0 0.0
      %1530 = vmatprep.subr.mxu0 0.0
      %1531 = vmatpush1.msra.mxu0 0.0
      %1532 = vmatprep.subr.mxu0 0.0
      %1533 = vmatpush1.msra.mxu0 0.0
      %1534 = vmatprep.subr.mxu0 0.0
      %1535 = vmatpush1.msra.mxu0 0.0
      %1536 = vmatprep.subr.mxu0 0.0
      %1537 = vmatpush1.msra.mxu0 0.0
      %1538 = vmatprep.subr.mxu0 0.0
      %1539 = vmatpush1.msra.mxu0 0.0
      %1540 = vmatprep.subr.mxu0 0.0
      %1541 = vmatpush1.msra.mxu0 0.0
      %1542 = vmatprep.subr.mxu0 0.0
      %1543 = vmatpush1.msra.mxu0 0.0
      %1544 = vmatprep.subr.mxu0 0.0
      %1545 = vmatpush1.msra.mxu0 0.0
      %1546 = vmatprep.subr.mxu0 0.0
      %1547 = vmatpush1.msra.mxu0 0.0
      %1548 = vmatprep.subr.mxu0 0.0
      %1549 = vmatpush1.msra.mxu0 0.0
      %1550 = vmatprep.subr.mxu0 0.0
      %1551 = vmatpush1.msra.mxu0 0.0
      %1552 = vmatprep.subr.mxu0 0.0
      %1553 = vmatpush1.msra.mxu0 0.0
      %1554 = vmatprep.subr.mxu0 0.0
      %1555 = vmatpush1.msra.mxu0 0.0
      %1556 = vmatprep.subr.mxu0 0.0
      %1557 = vmatpush1.msra.mxu0 0.0
      %1558 = vmatprep.mubr.f32.mxu0 0.0
      %1559 = vmatmul.mubr.f32.gmra.mrb[0].mxu0 %v1492
      %v1560 = vpop.f32.mrb[0].mxu0
      %v1561 = vadd.f32 0.0, %v1560
      %v1562 = vpop.f32.mrb[0].mxu0
      %1563 = vdwg.mxu0
      %v1564 = vmax.f32 %v1561, 1e-30
      %v1565 = vrcp.pop %v1564
      %v1566 = vmul.f32 %v799, %v1565
      %v1567 = vmul.f32 %v802, %v632
      %1568 = vmatprep.subr.mxu0 0.0
      %1569 = vmatpush1.msra.mxu0 %v1567
      %1570 = vmatprep.subr.mxu0 0.0
      %1571 = vmatpush1.msra.mxu0 0.0
      %1572 = vmatprep.subr.mxu0 0.0
      %1573 = vmatpush1.msra.mxu0 0.0
      %1574 = vmatprep.subr.mxu0 0.0
      %1575 = vmatpush1.msra.mxu0 0.0
      %1576 = vmatprep.subr.mxu0 0.0
      %1577 = vmatpush1.msra.mxu0 0.0
      %1578 = vmatprep.subr.mxu0 0.0
      %1579 = vmatpush1.msra.mxu0 0.0
      %1580 = vmatprep.subr.mxu0 0.0
      %1581 = vmatpush1.msra.mxu0 0.0
      %1582 = vmatprep.subr.mxu0 0.0
      %1583 = vmatpush1.msra.mxu0 0.0
      %1584 = vmatprep.subr.mxu0 0.0
      %1585 = vmatpush1.msra.mxu0 0.0
      %1586 = vmatprep.subr.mxu0 0.0
      %1587 = vmatpush1.msra.mxu0 0.0
      %1588 = vmatprep.subr.mxu0 0.0
      %1589 = vmatpush1.msra.mxu0 0.0
      %1590 = vmatprep.subr.mxu0 0.0
      %1591 = vmatpush1.msra.mxu0 0.0
      %1592 = vmatprep.subr.mxu0 0.0
      %1593 = vmatpush1.msra.mxu0 0.0
      %1594 = vmatprep.subr.mxu0 0.0
      %1595 = vmatpush1.msra.mxu0 0.0
      %1596 = vmatprep.subr.mxu0 0.0
      %1597 = vmatpush1.msra.mxu0 0.0
      %1598 = vmatprep.subr.mxu0 0.0
      %1599 = vmatpush1.msra.mxu0 0.0
      %1600 = vmatprep.subr.mxu0 0.0
      %1601 = vmatpush1.msra.mxu0 0.0
      %1602 = vmatprep.subr.mxu0 0.0
      %1603 = vmatpush1.msra.mxu0 0.0
      %1604 = vmatprep.subr.mxu0 0.0
      %1605 = vmatpush1.msra.mxu0 0.0
      %1606 = vmatprep.subr.mxu0 0.0
      %1607 = vmatpush1.msra.mxu0 0.0
      %1608 = vmatprep.subr.mxu0 0.0
      %1609 = vmatpush1.msra.mxu0 0.0
      %1610 = vmatprep.subr.mxu0 0.0
      %1611 = vmatpush1.msra.mxu0 0.0
      %1612 = vmatprep.subr.mxu0 0.0
      %1613 = vmatpush1.msra.mxu0 0.0
      %1614 = vmatprep.subr.mxu0 0.0
      %1615 = vmatpush1.msra.mxu0 0.0
      %1616 = vmatprep.subr.mxu0 0.0
      %1617 = vmatpush1.msra.mxu0 0.0
      %1618 = vmatprep.subr.mxu0 0.0
      %1619 = vmatpush1.msra.mxu0 0.0
      %1620 = vmatprep.subr.mxu0 0.0
      %1621 = vmatpush1.msra.mxu0 0.0
      %1622 = vmatprep.subr.mxu0 0.0
      %1623 = vmatpush1.msra.mxu0 0.0
      %1624 = vmatprep.subr.mxu0 0.0
      %1625 = vmatpush1.msra.mxu0 0.0
      %1626 = vmatprep.subr.mxu0 0.0
      %1627 = vmatpush1.msra.mxu0 0.0
      %1628 = vmatprep.subr.mxu0 0.0
      %1629 = vmatpush1.msra.mxu0 0.0
      %1630 = vmatprep.subr.mxu0 0.0
      %1631 = vmatpush1.msra.mxu0 0.0
      %1632 = vmatprep.mubr.f32.mxu0 0.0
      %1633 = vmatmul.mubr.f32.gmra.mrb[0].mxu0 %v1492
      %v1634 = vpop.f32.mrb[0].mxu0
      %v1635 = vadd.f32 0.0, %v1634
      %v1636 = vpop.f32.mrb[0].mxu0
      %1637 = vdwg.mxu0
      %v1638 = vmul.f32 %v1635, %v1566
      %v1639 = vsel %vm711, %v1638, 0.0
      %1640 = vadd.xlane.f32.xlu0 %v1639
      %v1641 = vpop.xlane.xlu0 %1640
      %v1642 = vmul.f32 %v1641, 2.0
      %v1643 = vsub.f32 2.0, %v1642
      %v1644 = vld [vmem:[%s494] sm:$0xff]
      %v1645 = vld [vmem:[%s513] sm:$0x1]
      %v1646 = vmul.f32 %v1644, %v1644
      %v1647 = vsel %vm570, %v1646, 0.0
      %1648 = vadd.xlane.f32.xlu0 %v1647
      %v1649 = vpop.xlane.xlu0 %1648
      %v1650 = vmax.f32 %v1649, 1e-24
      %v1651 = vrsqrt.pop %v1650
      %v1652 = vmul.f32 %v1644, %v1651
      %v1653 = vpack.c.bf16 %v1652, %v1652
      %v1655 = vsel %vm570, %v1653, 0
      %1657 = vmatprep.subr.bf16.mxu0 0
      %1658 = vmatpush1.bf16.xpose.msra.mxu0 %v1655
      %1659 = vmatprep.subr.bf16.mxu0 0
      %1660 = vmatpush1.bf16.xpose.msra.mxu0 0
      %1661 = vmatprep.subr.bf16.mxu0 0
      %1662 = vmatpush1.bf16.xpose.msra.mxu0 0
      %1663 = vmatprep.subr.bf16.mxu0 0
      %1664 = vmatpush1.bf16.xpose.msra.mxu0 0
      %1665 = vmatprep.subr.bf16.mxu0 0
      %1666 = vmatpush1.bf16.xpose.msra.mxu0 0
      %1667 = vmatprep.subr.bf16.mxu0 0
      %1668 = vmatpush1.bf16.xpose.msra.mxu0 0
      %1669 = vmatprep.subr.bf16.mxu0 0
      %1670 = vmatpush1.bf16.xpose.msra.mxu0 0
      %1671 = vmatprep.subr.bf16.mxu0 0
      %1672 = vmatpush1.bf16.xpose.msra.mxu0 0
      %1673 = vmatprep.subr.bf16.mxu0 0
      %1674 = vmatpush1.bf16.xpose.msra.mxu0 0
      %1675 = vmatprep.subr.bf16.mxu0 0
      %1676 = vmatpush1.bf16.xpose.msra.mxu0 0
      %1677 = vmatprep.subr.bf16.mxu0 0
      %1678 = vmatpush1.bf16.xpose.msra.mxu0 0
      %1679 = vmatprep.subr.bf16.mxu0 0
      %1680 = vmatpush1.bf16.xpose.msra.mxu0 0
      %1681 = vmatprep.subr.bf16.mxu0 0
      %1682 = vmatpush1.bf16.xpose.msra.mxu0 0
      %1683 = vmatprep.subr.bf16.mxu0 0
      %1684 = vmatpush1.bf16.xpose.msra.mxu0 0
      %1685 = vmatprep.subr.bf16.mxu0 0
      %1686 = vmatpush1.bf16.xpose.msra.mxu0 0
      %1687 = vmatprep.subr.bf16.mxu0 0
      %1688 = vmatpush1.bf16.xpose.msra.mxu0 0
      %1689 = vmatprep.mubr.bf16.mxu0 0
      %1690 = vmatmul.mubr.bf16.gmra.mrb[0].mxu0 %v587
      %v1691 = vpop.f32.mrb[0].mxu0
      %v1692 = vadd.f32 0.0, %v1691
      %v1693 = vpop.f32.mrb[0].mxu0
      %v1694 = vpop.f32.mrb[0].mxu0
      %v1695 = vpop.f32.mrb[0].mxu0
      %1696 = vdwg.mxu0
      %v1697 = vsub.f32 1.0, %v1692
      %v1699 = vsel %vm570, %v1645, 0
      %1701 = vmatprep.subr.mxu0 0.0
      %1702 = vmatpush1.xpose.msra.mxu0 %v637
      %1703 = vmatprep.subr.mxu0 0.0
      %1704 = vmatpush1.xpose.msra.mxu0 0.0
      %1705 = vmatprep.subr.mxu0 0.0
      %1706 = vmatpush1.xpose.msra.mxu0 0.0
      %1707 = vmatprep.subr.mxu0 0.0
      %1708 = vmatpush1.xpose.msra.mxu0 0.0
      %1709 = vmatprep.subr.mxu0 0.0
      %1710 = vmatpush1.xpose.msra.mxu0 0.0
      %1711 = vmatprep.subr.mxu0 0.0
      %1712 = vmatpush1.xpose.msra.mxu0 0.0
      %1713 = vmatprep.subr.mxu0 0.0
      %1714 = vmatpush1.xpose.msra.mxu0 0.0
      %1715 = vmatprep.subr.mxu0 0.0
      %1716 = vmatpush1.xpose.msra.mxu0 0.0
      %1717 = vmatprep.subr.mxu0 0.0
      %1718 = vmatpush1.xpose.msra.mxu0 0.0
      %1719 = vmatprep.subr.mxu0 0.0
      %1720 = vmatpush1.xpose.msra.mxu0 0.0
      %1721 = vmatprep.subr.mxu0 0.0
      %1722 = vmatpush1.xpose.msra.mxu0 0.0
      %1723 = vmatprep.subr.mxu0 0.0
      %1724 = vmatpush1.xpose.msra.mxu0 0.0
      %1725 = vmatprep.subr.mxu0 0.0
      %1726 = vmatpush1.xpose.msra.mxu0 0.0
      %1727 = vmatprep.subr.mxu0 0.0
      %1728 = vmatpush1.xpose.msra.mxu0 0.0
      %1729 = vmatprep.subr.mxu0 0.0
      %1730 = vmatpush1.xpose.msra.mxu0 0.0
      %1731 = vmatprep.subr.mxu0 0.0
      %1732 = vmatpush1.xpose.msra.mxu0 0.0
      %1733 = vmatprep.subr.mxu0 0.0
      %1734 = vmatpush1.xpose.msra.mxu0 0.0
      %1735 = vmatprep.subr.mxu0 0.0
      %1736 = vmatpush1.xpose.msra.mxu0 0.0
      %1737 = vmatprep.subr.mxu0 0.0
      %1738 = vmatpush1.xpose.msra.mxu0 0.0
      %1739 = vmatprep.subr.mxu0 0.0
      %1740 = vmatpush1.xpose.msra.mxu0 0.0
      %1741 = vmatprep.subr.mxu0 0.0
      %1742 = vmatpush1.xpose.msra.mxu0 0.0
      %1743 = vmatprep.subr.mxu0 0.0
      %1744 = vmatpush1.xpose.msra.mxu0 0.0
      %1745 = vmatprep.subr.mxu0 0.0
      %1746 = vmatpush1.xpose.msra.mxu0 0.0
      %1747 = vmatprep.subr.mxu0 0.0
      %1748 = vmatpush1.xpose.msra.mxu0 0.0
      %1749 = vmatprep.subr.mxu0 0.0
      %1750 = vmatpush1.xpose.msra.mxu0 0.0
      %1751 = vmatprep.subr.mxu0 0.0
      %1752 = vmatpush1.xpose.msra.mxu0 0.0
      %1753 = vmatprep.subr.mxu0 0.0
      %1754 = vmatpush1.xpose.msra.mxu0 0.0
      %1755 = vmatprep.subr.mxu0 0.0
      %1756 = vmatpush1.xpose.msra.mxu0 0.0
      %1757 = vmatprep.subr.mxu0 0.0
      %1758 = vmatpush1.xpose.msra.mxu0 0.0
      %1759 = vmatprep.subr.mxu0 0.0
      %1760 = vmatpush1.xpose.msra.mxu0 0.0
      %1761 = vmatprep.subr.mxu0 0.0
      %1762 = vmatpush1.xpose.msra.mxu0 0.0
      %1763 = vmatprep.subr.mxu0 0.0
      %1764 = vmatpush1.xpose.msra.mxu0 0.0
      %1765 = vmatprep.mubr.f32.mxu0 0.0
      %1766 = vmatmul.mubr.f32.gmra.mrb[0].mxu0 %v1699
      %v1767 = vpop.f32.mrb[0].mxu0
      %v1768 = vadd.f32 0.0, %v1767
      %v1769 = vpop.f32.mrb[0].mxu0
      %1770 = vdwg.mxu0
      %vm1771 = vcmp.le.f32.partialorder %v1768, 0.0
      %v1772 = vsel %vm1771, 1e-08, %v1768
      %v1773 = vsel %vm711, %v1772, 0.0
      %1774 = vadd.xlane.f32.xlu0 %v1773
      %v1775 = vpop.xlane.xlu0 %1774
      %v1776 = vrcp.pop %v1775
      %v1777 = vmul.f32 %v1772, %v1776
      %v1779 = vsel %vm570, %v1644, 0
      %1781 = vmatprep.subr.mxu0 0.0
      %1782 = vmatpush1.xpose.msra.mxu0 %v1779
      %1783 = vmatprep.subr.mxu0 0.0
      %1784 = vmatpush1.xpose.msra.mxu0 0.0
      %1785 = vmatprep.subr.mxu0 0.0
      %1786 = vmatpush1.xpose.msra.mxu0 0.0
      %1787 = vmatprep.subr.mxu0 0.0
      %1788 = vmatpush1.xpose.msra.mxu0 0.0
      %1789 = vmatprep.subr.mxu0 0.0
      %1790 = vmatpush1.xpose.msra.mxu0 0.0
      %1791 = vmatprep.subr.mxu0 0.0
      %1792 = vmatpush1.xpose.msra.mxu0 0.0
      %1793 = vmatprep.subr.mxu0 0.0
      %1794 = vmatpush1.xpose.msra.mxu0 0.0
      %1795 = vmatprep.subr.mxu0 0.0
      %1796 = vmatpush1.xpose.msra.mxu0 0.0
      %1797 = vmatprep.subr.mxu0 0.0
      %1798 = vmatpush1.xpose.msra.mxu0 0.0
      %1799 = vmatprep.subr.mxu0 0.0
      %1800 = vmatpush1.xpose.msra.mxu0 0.0
      %1801 = vmatprep.subr.mxu0 0.0
      %1802 = vmatpush1.xpose.msra.mxu0 0.0
      %1803 = vmatprep.subr.mxu0 0.0
      %1804 = vmatpush1.xpose.msra.mxu0 0.0
      %1805 = vmatprep.subr.mxu0 0.0
      %1806 = vmatpush1.xpose.msra.mxu0 0.0
      %1807 = vmatprep.subr.mxu0 0.0
      %1808 = vmatpush1.xpose.msra.mxu0 0.0
      %1809 = vmatprep.subr.mxu0 0.0
      %1810 = vmatpush1.xpose.msra.mxu0 0.0
      %1811 = vmatprep.subr.mxu0 0.0
      %1812 = vmatpush1.xpose.msra.mxu0 0.0
      %1813 = vmatprep.subr.mxu0 0.0
      %1814 = vmatpush1.xpose.msra.mxu0 0.0
      %1815 = vmatprep.subr.mxu0 0.0
      %1816 = vmatpush1.xpose.msra.mxu0 0.0
      %1817 = vmatprep.subr.mxu0 0.0
      %1818 = vmatpush1.xpose.msra.mxu0 0.0
      %1819 = vmatprep.subr.mxu0 0.0
      %1820 = vmatpush1.xpose.msra.mxu0 0.0
      %1821 = vmatprep.subr.mxu0 0.0
      %1822 = vmatpush1.xpose.msra.mxu0 0.0
      %1823 = vmatprep.subr.mxu0 0.0
      %1824 = vmatpush1.xpose.msra.mxu0 0.0
      %1825 = vmatprep.subr.mxu0 0.0
      %1826 = vmatpush1.xpose.msra.mxu0 0.0
      %1827 = vmatprep.subr.mxu0 0.0
      %1828 = vmatpush1.xpose.msra.mxu0 0.0
      %1829 = vmatprep.subr.mxu0 0.0
      %1830 = vmatpush1.xpose.msra.mxu0 0.0
      %1831 = vmatprep.subr.mxu0 0.0
      %1832 = vmatpush1.xpose.msra.mxu0 0.0
      %1833 = vmatprep.subr.mxu0 0.0
      %1834 = vmatpush1.xpose.msra.mxu0 0.0
      %1835 = vmatprep.subr.mxu0 0.0
      %1836 = vmatpush1.xpose.msra.mxu0 0.0
      %1837 = vmatprep.subr.mxu0 0.0
      %1838 = vmatpush1.xpose.msra.mxu0 0.0
      %1839 = vmatprep.subr.mxu0 0.0
      %1840 = vmatpush1.xpose.msra.mxu0 0.0
      %1841 = vmatprep.subr.mxu0 0.0
      %1842 = vmatpush1.xpose.msra.mxu0 0.0
      %1843 = vmatprep.subr.mxu0 0.0
      %1844 = vmatpush1.xpose.msra.mxu0 0.0
      %1845 = vmatprep.mubr.f32.mxu0 0.0
      %1846 = vmatmul.mubr.f32.gmra.mrb[0].mxu0 %v718
      %v1847 = vpop.f32.mrb[0].mxu0
      %v1848 = vadd.f32 0.0, %v1847
      %v1849 = vpop.f32.mrb[0].mxu0
      %1850 = vdwg.mxu0
      %vm1851 = vcmp.le.f32.partialorder %v1848, 0.0
      %v1852 = vsel %vm1851, 1e-08, %v1848
      %v1853 = vsel %vm711, %v1852, 0.0
      %1854 = vadd.xlane.f32.xlu0 %v1853
      %v1855 = vpop.xlane.xlu0 %1854
      %v1856 = vrcp.pop %v1855
      %v1857 = vmul.f32 %v1852, %v1856
      %v1858 = vmul.f32 %v1697, -20.0
      %v1859 = vmul.f32 %v1858, 1.442695
      %v1860 = vpow.pop %v1859
      %v1862 = vsel %vm803, %v1860, 0
      %1864 = vmatprep.subr.mxu0 0.0
      %1865 = vmatpush1.xpose.msra.mxu0 %v1862
      %1866 = vmatprep.subr.mxu0 0.0
      %1867 = vmatpush1.xpose.msra.mxu0 0.0
      %1868 = vmatprep.subr.mxu0 0.0
      %1869 = vmatpush1.xpose.msra.mxu0 0.0
      %1870 = vmatprep.subr.mxu0 0.0
      %1871 = vmatpush1.xpose.msra.mxu0 0.0
      %1872 = vmatprep.subr.mxu0 0.0
      %1873 = vmatpush1.xpose.msra.mxu0 0.0
      %1874 = vmatprep.subr.mxu0 0.0
      %1875 = vmatpush1.xpose.msra.mxu0 0.0
      %1876 = vmatprep.subr.mxu0 0.0
      %1877 = vmatpush1.xpose.msra.mxu0 0.0
      %1878 = vmatprep.subr.mxu0 0.0
      %1879 = vmatpush1.xpose.msra.mxu0 0.0
      %1880 = vmatprep.subr.mxu0 0.0
      %1881 = vmatpush1.xpose.msra.mxu0 0.0
      %1882 = vmatprep.subr.mxu0 0.0
      %1883 = vmatpush1.xpose.msra.mxu0 0.0
      %1884 = vmatprep.subr.mxu0 0.0
      %1885 = vmatpush1.xpose.msra.mxu0 0.0
      %1886 = vmatprep.subr.mxu0 0.0
      %1887 = vmatpush1.xpose.msra.mxu0 0.0
      %1888 = vmatprep.subr.mxu0 0.0
      %1889 = vmatpush1.xpose.msra.mxu0 0.0
      %1890 = vmatprep.subr.mxu0 0.0
      %1891 = vmatpush1.xpose.msra.mxu0 0.0
      %1892 = vmatprep.subr.mxu0 0.0
      %1893 = vmatpush1.xpose.msra.mxu0 0.0
      %1894 = vmatprep.subr.mxu0 0.0
      %1895 = vmatpush1.xpose.msra.mxu0 0.0
      %1896 = vmatprep.subr.mxu0 0.0
      %1897 = vmatpush1.xpose.msra.mxu0 0.0
      %1898 = vmatprep.subr.mxu0 0.0
      %1899 = vmatpush1.xpose.msra.mxu0 0.0
      %1900 = vmatprep.subr.mxu0 0.0
      %1901 = vmatpush1.xpose.msra.mxu0 0.0
      %1902 = vmatprep.subr.mxu0 0.0
      %1903 = vmatpush1.xpose.msra.mxu0 0.0
      %1904 = vmatprep.subr.mxu0 0.0
      %1905 = vmatpush1.xpose.msra.mxu0 0.0
      %1906 = vmatprep.subr.mxu0 0.0
      %1907 = vmatpush1.xpose.msra.mxu0 0.0
      %1908 = vmatprep.subr.mxu0 0.0
      %1909 = vmatpush1.xpose.msra.mxu0 0.0
      %1910 = vmatprep.subr.mxu0 0.0
      %1911 = vmatpush1.xpose.msra.mxu0 0.0
      %1912 = vmatprep.subr.mxu0 0.0
      %1913 = vmatpush1.xpose.msra.mxu0 0.0
      %1914 = vmatprep.subr.mxu0 0.0
      %1915 = vmatpush1.xpose.msra.mxu0 0.0
      %1916 = vmatprep.subr.mxu0 0.0
      %1917 = vmatpush1.xpose.msra.mxu0 0.0
      %1918 = vmatprep.subr.mxu0 0.0
      %1919 = vmatpush1.xpose.msra.mxu0 0.0
      %1920 = vmatprep.subr.mxu0 0.0
      %1921 = vmatpush1.xpose.msra.mxu0 0.0
      %1922 = vmatprep.subr.mxu0 0.0
      %1923 = vmatpush1.xpose.msra.mxu0 0.0
      %1924 = vmatprep.subr.mxu0 0.0
      %1925 = vmatpush1.xpose.msra.mxu0 0.0
      %1926 = vmatprep.subr.mxu0 0.0
      %1927 = vmatpush1.xpose.msra.mxu0 0.0
      %1928 = vmatprep.mubr.f32.mxu0 0.0
      %1929 = vmatmul.mubr.f32.gmra.mrb[0].mxu0 %v805
      %v1930 = vpop.f32.mrb[0].mxu0
      %v1931 = vadd.f32 0.0, %v1930
      %v1932 = vpop.f32.mrb[0].mxu0
      %1933 = vdwg.mxu0
      %v1934 = vmax.f32 %v1931, 1e-30
      %v1935 = vrcp.pop %v1934
      %v1936 = vmul.f32 %v1777, %v1935
      %v1938 = vsel %vm803, %v1936, 0
      %1940 = vmatprep.subr.mxu0 0.0
      %1941 = vmatpush1.msra.mxu0 %v1860
      %1942 = vmatprep.subr.mxu0 0.0
      %1943 = vmatpush1.msra.mxu0 0.0
      %1944 = vmatprep.subr.mxu0 0.0
      %1945 = vmatpush1.msra.mxu0 0.0
      %1946 = vmatprep.subr.mxu0 0.0
      %1947 = vmatpush1.msra.mxu0 0.0
      %1948 = vmatprep.subr.mxu0 0.0
      %1949 = vmatpush1.msra.mxu0 0.0
      %1950 = vmatprep.subr.mxu0 0.0
      %1951 = vmatpush1.msra.mxu0 0.0
      %1952 = vmatprep.subr.mxu0 0.0
      %1953 = vmatpush1.msra.mxu0 0.0
      %1954 = vmatprep.subr.mxu0 0.0
      %1955 = vmatpush1.msra.mxu0 0.0
      %1956 = vmatprep.subr.mxu0 0.0
      %1957 = vmatpush1.msra.mxu0 0.0
      %1958 = vmatprep.subr.mxu0 0.0
      %1959 = vmatpush1.msra.mxu0 0.0
      %1960 = vmatprep.subr.mxu0 0.0
      %1961 = vmatpush1.msra.mxu0 0.0
      %1962 = vmatprep.subr.mxu0 0.0
      %1963 = vmatpush1.msra.mxu0 0.0
      %1964 = vmatprep.subr.mxu0 0.0
      %1965 = vmatpush1.msra.mxu0 0.0
      %1966 = vmatprep.subr.mxu0 0.0
      %1967 = vmatpush1.msra.mxu0 0.0
      %1968 = vmatprep.subr.mxu0 0.0
      %1969 = vmatpush1.msra.mxu0 0.0
      %1970 = vmatprep.subr.mxu0 0.0
      %1971 = vmatpush1.msra.mxu0 0.0
      %1972 = vmatprep.subr.mxu0 0.0
      %1973 = vmatpush1.msra.mxu0 0.0
      %1974 = vmatprep.subr.mxu0 0.0
      %1975 = vmatpush1.msra.mxu0 0.0
      %1976 = vmatprep.subr.mxu0 0.0
      %1977 = vmatpush1.msra.mxu0 0.0
      %1978 = vmatprep.subr.mxu0 0.0
      %1979 = vmatpush1.msra.mxu0 0.0
      %1980 = vmatprep.subr.mxu0 0.0
      %1981 = vmatpush1.msra.mxu0 0.0
      %1982 = vmatprep.subr.mxu0 0.0
      %1983 = vmatpush1.msra.mxu0 0.0
      %1984 = vmatprep.subr.mxu0 0.0
      %1985 = vmatpush1.msra.mxu0 0.0
      %1986 = vmatprep.subr.mxu0 0.0
      %1987 = vmatpush1.msra.mxu0 0.0
      %1988 = vmatprep.subr.mxu0 0.0
      %1989 = vmatpush1.msra.mxu0 0.0
      %1990 = vmatprep.subr.mxu0 0.0
      %1991 = vmatpush1.msra.mxu0 0.0
      %1992 = vmatprep.subr.mxu0 0.0
      %1993 = vmatpush1.msra.mxu0 0.0
      %1994 = vmatprep.subr.mxu0 0.0
      %1995 = vmatpush1.msra.mxu0 0.0
      %1996 = vmatprep.subr.mxu0 0.0
      %1997 = vmatpush1.msra.mxu0 0.0
      %1998 = vmatprep.subr.mxu0 0.0
      %1999 = vmatpush1.msra.mxu0 0.0
      %2000 = vmatprep.subr.mxu0 0.0
      %2001 = vmatpush1.msra.mxu0 0.0
      %2002 = vmatprep.subr.mxu0 0.0
      %2003 = vmatpush1.msra.mxu0 0.0
      %2004 = vmatprep.mubr.f32.mxu0 0.0
      %2005 = vmatmul.mubr.f32.gmra.mrb[0].mxu0 %v1938
      %v2006 = vpop.f32.mrb[0].mxu0
      %v2007 = vadd.f32 0.0, %v2006
      %v2008 = vpop.f32.mrb[0].mxu0
      %2009 = vdwg.mxu0
      %v2010 = vmax.f32 %v2007, 1e-30
      %v2011 = vrcp.pop %v2010
      %v2012 = vmul.f32 %v1857, %v2011
      %v2014 = vsel %vm803, %v2012, 0
      %2016 = vmatprep.subr.mxu0 0.0
      %2017 = vmatpush1.xpose.msra.mxu0 %v1862
      %2018 = vmatprep.subr.mxu0 0.0
      %2019 = vmatpush1.xpose.msra.mxu0 0.0
      %2020 = vmatprep.subr.mxu0 0.0
      %2021 = vmatpush1.xpose.msra.mxu0 0.0
      %2022 = vmatprep.subr.mxu0 0.0
      %2023 = vmatpush1.xpose.msra.mxu0 0.0
      %2024 = vmatprep.subr.mxu0 0.0
      %2025 = vmatpush1.xpose.msra.mxu0 0.0
      %2026 = vmatprep.subr.mxu0 0.0
      %2027 = vmatpush1.xpose.msra.mxu0 0.0
      %2028 = vmatprep.subr.mxu0 0.0
      %2029 = vmatpush1.xpose.msra.mxu0 0.0
      %2030 = vmatprep.subr.mxu0 0.0
      %2031 = vmatpush1.xpose.msra.mxu0 0.0
      %2032 = vmatprep.subr.mxu0 0.0
      %2033 = vmatpush1.xpose.msra.mxu0 0.0
      %2034 = vmatprep.subr.mxu0 0.0
      %2035 = vmatpush1.xpose.msra.mxu0 0.0
      %2036 = vmatprep.subr.mxu0 0.0
      %2037 = vmatpush1.xpose.msra.mxu0 0.0
      %2038 = vmatprep.subr.mxu0 0.0
      %2039 = vmatpush1.xpose.msra.mxu0 0.0
      %2040 = vmatprep.subr.mxu0 0.0
      %2041 = vmatpush1.xpose.msra.mxu0 0.0
      %2042 = vmatprep.subr.mxu0 0.0
      %2043 = vmatpush1.xpose.msra.mxu0 0.0
      %2044 = vmatprep.subr.mxu0 0.0
      %2045 = vmatpush1.xpose.msra.mxu0 0.0
      %2046 = vmatprep.subr.mxu0 0.0
      %2047 = vmatpush1.xpose.msra.mxu0 0.0
      %2048 = vmatprep.subr.mxu0 0.0
      %2049 = vmatpush1.xpose.msra.mxu0 0.0
      %2050 = vmatprep.subr.mxu0 0.0
      %2051 = vmatpush1.xpose.msra.mxu0 0.0
      %2052 = vmatprep.subr.mxu0 0.0
      %2053 = vmatpush1.xpose.msra.mxu0 0.0
      %2054 = vmatprep.subr.mxu0 0.0
      %2055 = vmatpush1.xpose.msra.mxu0 0.0
      %2056 = vmatprep.subr.mxu0 0.0
      %2057 = vmatpush1.xpose.msra.mxu0 0.0
      %2058 = vmatprep.subr.mxu0 0.0
      %2059 = vmatpush1.xpose.msra.mxu0 0.0
      %2060 = vmatprep.subr.mxu0 0.0
      %2061 = vmatpush1.xpose.msra.mxu0 0.0
      %2062 = vmatprep.subr.mxu0 0.0
      %2063 = vmatpush1.xpose.msra.mxu0 0.0
      %2064 = vmatprep.subr.mxu0 0.0
      %2065 = vmatpush1.xpose.msra.mxu0 0.0
      %2066 = vmatprep.subr.mxu0 0.0
      %2067 = vmatpush1.xpose.msra.mxu0 0.0
      %2068 = vmatprep.subr.mxu0 0.0
      %2069 = vmatpush1.xpose.msra.mxu0 0.0
      %2070 = vmatprep.subr.mxu0 0.0
      %2071 = vmatpush1.xpose.msra.mxu0 0.0
      %2072 = vmatprep.subr.mxu0 0.0
      %2073 = vmatpush1.xpose.msra.mxu0 0.0
      %2074 = vmatprep.subr.mxu0 0.0
      %2075 = vmatpush1.xpose.msra.mxu0 0.0
      %2076 = vmatprep.subr.mxu0 0.0
      %2077 = vmatpush1.xpose.msra.mxu0 0.0
      %2078 = vmatprep.subr.mxu0 0.0
      %2079 = vmatpush1.xpose.msra.mxu0 0.0
      %2080 = vmatprep.mubr.f32.mxu0 0.0
      %2081 = vmatmul.mubr.f32.gmra.mrb[0].mxu0 %v2014
      %v2082 = vpop.f32.mrb[0].mxu0
      %v2083 = vadd.f32 0.0, %v2082
      %v2084 = vpop.f32.mrb[0].mxu0
      %2085 = vdwg.mxu0
      %v2086 = vmax.f32 %v2083, 1e-30
      %v2087 = vrcp.pop %v2086
      %v2088 = vmul.f32 %v1777, %v2087
      %v2090 = vsel %vm803, %v2088, 0
      %2092 = vmatprep.subr.mxu0 0.0
      %2093 = vmatpush1.msra.mxu0 %v1860
      %2094 = vmatprep.subr.mxu0 0.0
      %2095 = vmatpush1.msra.mxu0 0.0
      %2096 = vmatprep.subr.mxu0 0.0
      %2097 = vmatpush1.msra.mxu0 0.0
      %2098 = vmatprep.subr.mxu0 0.0
      %2099 = vmatpush1.msra.mxu0 0.0
      %2100 = vmatprep.subr.mxu0 0.0
      %2101 = vmatpush1.msra.mxu0 0.0
      %2102 = vmatprep.subr.mxu0 0.0
      %2103 = vmatpush1.msra.mxu0 0.0
      %2104 = vmatprep.subr.mxu0 0.0
      %2105 = vmatpush1.msra.mxu0 0.0
      %2106 = vmatprep.subr.mxu0 0.0
      %2107 = vmatpush1.msra.mxu0 0.0
      %2108 = vmatprep.subr.mxu0 0.0
      %2109 = vmatpush1.msra.mxu0 0.0
      %2110 = vmatprep.subr.mxu0 0.0
      %2111 = vmatpush1.msra.mxu0 0.0
      %2112 = vmatprep.subr.mxu0 0.0
      %2113 = vmatpush1.msra.mxu0 0.0
      %2114 = vmatprep.subr.mxu0 0.0
      %2115 = vmatpush1.msra.mxu0 0.0
      %2116 = vmatprep.subr.mxu0 0.0
      %2117 = vmatpush1.msra.mxu0 0.0
      %2118 = vmatprep.subr.mxu0 0.0
      %2119 = vmatpush1.msra.mxu0 0.0
      %2120 = vmatprep.subr.mxu0 0.0
      %2121 = vmatpush1.msra.mxu0 0.0
      %2122 = vmatprep.subr.mxu0 0.0
      %2123 = vmatpush1.msra.mxu0 0.0
      %2124 = vmatprep.subr.mxu0 0.0
      %2125 = vmatpush1.msra.mxu0 0.0
      %2126 = vmatprep.subr.mxu0 0.0
      %2127 = vmatpush1.msra.mxu0 0.0
      %2128 = vmatprep.subr.mxu0 0.0
      %2129 = vmatpush1.msra.mxu0 0.0
      %2130 = vmatprep.subr.mxu0 0.0
      %2131 = vmatpush1.msra.mxu0 0.0
      %2132 = vmatprep.subr.mxu0 0.0
      %2133 = vmatpush1.msra.mxu0 0.0
      %2134 = vmatprep.subr.mxu0 0.0
      %2135 = vmatpush1.msra.mxu0 0.0
      %2136 = vmatprep.subr.mxu0 0.0
      %2137 = vmatpush1.msra.mxu0 0.0
      %2138 = vmatprep.subr.mxu0 0.0
      %2139 = vmatpush1.msra.mxu0 0.0
      %2140 = vmatprep.subr.mxu0 0.0
      %2141 = vmatpush1.msra.mxu0 0.0
      %2142 = vmatprep.subr.mxu0 0.0
      %2143 = vmatpush1.msra.mxu0 0.0
      %2144 = vmatprep.subr.mxu0 0.0
      %2145 = vmatpush1.msra.mxu0 0.0
      %2146 = vmatprep.subr.mxu0 0.0
      %2147 = vmatpush1.msra.mxu0 0.0
      %2148 = vmatprep.subr.mxu0 0.0
      %2149 = vmatpush1.msra.mxu0 0.0
      %2150 = vmatprep.subr.mxu0 0.0
      %2151 = vmatpush1.msra.mxu0 0.0
      %2152 = vmatprep.subr.mxu0 0.0
      %2153 = vmatpush1.msra.mxu0 0.0
      %2154 = vmatprep.subr.mxu0 0.0
      %2155 = vmatpush1.msra.mxu0 0.0
      %2156 = vmatprep.mubr.f32.mxu0 0.0
      %2157 = vmatmul.mubr.f32.gmra.mrb[0].mxu0 %v2090
      %v2158 = vpop.f32.mrb[0].mxu0
      %v2159 = vadd.f32 0.0, %v2158
      %v2160 = vpop.f32.mrb[0].mxu0
      %2161 = vdwg.mxu0
      %v2162 = vmax.f32 %v2159, 1e-30
      %v2163 = vrcp.pop %v2162
      %v2164 = vmul.f32 %v1857, %v2163
      %v2166 = vsel %vm803, %v2164, 0
      %2168 = vmatprep.subr.mxu0 0.0
      %2169 = vmatpush1.xpose.msra.mxu0 %v1862
      %2170 = vmatprep.subr.mxu0 0.0
      %2171 = vmatpush1.xpose.msra.mxu0 0.0
      %2172 = vmatprep.subr.mxu0 0.0
      %2173 = vmatpush1.xpose.msra.mxu0 0.0
      %2174 = vmatprep.subr.mxu0 0.0
      %2175 = vmatpush1.xpose.msra.mxu0 0.0
      %2176 = vmatprep.subr.mxu0 0.0
      %2177 = vmatpush1.xpose.msra.mxu0 0.0
      %2178 = vmatprep.subr.mxu0 0.0
      %2179 = vmatpush1.xpose.msra.mxu0 0.0
      %2180 = vmatprep.subr.mxu0 0.0
      %2181 = vmatpush1.xpose.msra.mxu0 0.0
      %2182 = vmatprep.subr.mxu0 0.0
      %2183 = vmatpush1.xpose.msra.mxu0 0.0
      %2184 = vmatprep.subr.mxu0 0.0
      %2185 = vmatpush1.xpose.msra.mxu0 0.0
      %2186 = vmatprep.subr.mxu0 0.0
      %2187 = vmatpush1.xpose.msra.mxu0 0.0
      %2188 = vmatprep.subr.mxu0 0.0
      %2189 = vmatpush1.xpose.msra.mxu0 0.0
      %2190 = vmatprep.subr.mxu0 0.0
      %2191 = vmatpush1.xpose.msra.mxu0 0.0
      %2192 = vmatprep.subr.mxu0 0.0
      %2193 = vmatpush1.xpose.msra.mxu0 0.0
      %2194 = vmatprep.subr.mxu0 0.0
      %2195 = vmatpush1.xpose.msra.mxu0 0.0
      %2196 = vmatprep.subr.mxu0 0.0
      %2197 = vmatpush1.xpose.msra.mxu0 0.0
      %2198 = vmatprep.subr.mxu0 0.0
      %2199 = vmatpush1.xpose.msra.mxu0 0.0
      %2200 = vmatprep.subr.mxu0 0.0
      %2201 = vmatpush1.xpose.msra.mxu0 0.0
      %2202 = vmatprep.subr.mxu0 0.0
      %2203 = vmatpush1.xpose.msra.mxu0 0.0
      %2204 = vmatprep.subr.mxu0 0.0
      %2205 = vmatpush1.xpose.msra.mxu0 0.0
      %2206 = vmatprep.subr.mxu0 0.0
      %2207 = vmatpush1.xpose.msra.mxu0 0.0
      %2208 = vmatprep.subr.mxu0 0.0
      %2209 = vmatpush1.xpose.msra.mxu0 0.0
      %2210 = vmatprep.subr.mxu0 0.0
      %2211 = vmatpush1.xpose.msra.mxu0 0.0
      %2212 = vmatprep.subr.mxu0 0.0
      %2213 = vmatpush1.xpose.msra.mxu0 0.0
      %2214 = vmatprep.subr.mxu0 0.0
      %2215 = vmatpush1.xpose.msra.mxu0 0.0
      %2216 = vmatprep.subr.mxu0 0.0
      %2217 = vmatpush1.xpose.msra.mxu0 0.0
      %2218 = vmatprep.subr.mxu0 0.0
      %2219 = vmatpush1.xpose.msra.mxu0 0.0
      %2220 = vmatprep.subr.mxu0 0.0
      %2221 = vmatpush1.xpose.msra.mxu0 0.0
      %2222 = vmatprep.subr.mxu0 0.0
      %2223 = vmatpush1.xpose.msra.mxu0 0.0
      %2224 = vmatprep.subr.mxu0 0.0
      %2225 = vmatpush1.xpose.msra.mxu0 0.0
      %2226 = vmatprep.subr.mxu0 0.0
      %2227 = vmatpush1.xpose.msra.mxu0 0.0
      %2228 = vmatprep.subr.mxu0 0.0
      %2229 = vmatpush1.xpose.msra.mxu0 0.0
      %2230 = vmatprep.subr.mxu0 0.0
      %2231 = vmatpush1.xpose.msra.mxu0 0.0
      %2232 = vmatprep.mubr.f32.mxu0 0.0
      %2233 = vmatmul.mubr.f32.gmra.mrb[0].mxu0 %v2166
      %v2234 = vpop.f32.mrb[0].mxu0
      %v2235 = vadd.f32 0.0, %v2234
      %v2236 = vpop.f32.mrb[0].mxu0
      %2237 = vdwg.mxu0
      %v2238 = vmax.f32 %v2235, 1e-30
      %v2239 = vrcp.pop %v2238
      %v2240 = vmul.f32 %v1777, %v2239
      %v2242 = vsel %vm803, %v2240, 0
      %2244 = vmatprep.subr.mxu0 0.0
      %2245 = vmatpush1.msra.mxu0 %v1860
      %2246 = vmatprep.subr.mxu0 0.0
      %2247 = vmatpush1.msra.mxu0 0.0
      %2248 = vmatprep.subr.mxu0 0.0
      %2249 = vmatpush1.msra.mxu0 0.0
      %2250 = vmatprep.subr.mxu0 0.0
      %2251 = vmatpush1.msra.mxu0 0.0
      %2252 = vmatprep.subr.mxu0 0.0
      %2253 = vmatpush1.msra.mxu0 0.0
      %2254 = vmatprep.subr.mxu0 0.0
      %2255 = vmatpush1.msra.mxu0 0.0
      %2256 = vmatprep.subr.mxu0 0.0
      %2257 = vmatpush1.msra.mxu0 0.0
      %2258 = vmatprep.subr.mxu0 0.0
      %2259 = vmatpush1.msra.mxu0 0.0
      %2260 = vmatprep.subr.mxu0 0.0
      %2261 = vmatpush1.msra.mxu0 0.0
      %2262 = vmatprep.subr.mxu0 0.0
      %2263 = vmatpush1.msra.mxu0 0.0
      %2264 = vmatprep.subr.mxu0 0.0
      %2265 = vmatpush1.msra.mxu0 0.0
      %2266 = vmatprep.subr.mxu0 0.0
      %2267 = vmatpush1.msra.mxu0 0.0
      %2268 = vmatprep.subr.mxu0 0.0
      %2269 = vmatpush1.msra.mxu0 0.0
      %2270 = vmatprep.subr.mxu0 0.0
      %2271 = vmatpush1.msra.mxu0 0.0
      %2272 = vmatprep.subr.mxu0 0.0
      %2273 = vmatpush1.msra.mxu0 0.0
      %2274 = vmatprep.subr.mxu0 0.0
      %2275 = vmatpush1.msra.mxu0 0.0
      %2276 = vmatprep.subr.mxu0 0.0
      %2277 = vmatpush1.msra.mxu0 0.0
      %2278 = vmatprep.subr.mxu0 0.0
      %2279 = vmatpush1.msra.mxu0 0.0
      %2280 = vmatprep.subr.mxu0 0.0
      %2281 = vmatpush1.msra.mxu0 0.0
      %2282 = vmatprep.subr.mxu0 0.0
      %2283 = vmatpush1.msra.mxu0 0.0
      %2284 = vmatprep.subr.mxu0 0.0
      %2285 = vmatpush1.msra.mxu0 0.0
      %2286 = vmatprep.subr.mxu0 0.0
      %2287 = vmatpush1.msra.mxu0 0.0
      %2288 = vmatprep.subr.mxu0 0.0
      %2289 = vmatpush1.msra.mxu0 0.0
      %2290 = vmatprep.subr.mxu0 0.0
      %2291 = vmatpush1.msra.mxu0 0.0
      %2292 = vmatprep.subr.mxu0 0.0
      %2293 = vmatpush1.msra.mxu0 0.0
      %2294 = vmatprep.subr.mxu0 0.0
      %2295 = vmatpush1.msra.mxu0 0.0
      %2296 = vmatprep.subr.mxu0 0.0
      %2297 = vmatpush1.msra.mxu0 0.0
      %2298 = vmatprep.subr.mxu0 0.0
      %2299 = vmatpush1.msra.mxu0 0.0
      %2300 = vmatprep.subr.mxu0 0.0
      %2301 = vmatpush1.msra.mxu0 0.0
      %2302 = vmatprep.subr.mxu0 0.0
      %2303 = vmatpush1.msra.mxu0 0.0
      %2304 = vmatprep.subr.mxu0 0.0
      %2305 = vmatpush1.msra.mxu0 0.0
      %2306 = vmatprep.subr.mxu0 0.0
      %2307 = vmatpush1.msra.mxu0 0.0
      %2308 = vmatprep.mubr.f32.mxu0 0.0
      %2309 = vmatmul.mubr.f32.gmra.mrb[0].mxu0 %v2242
      %v2310 = vpop.f32.mrb[0].mxu0
      %v2311 = vadd.f32 0.0, %v2310
      %v2312 = vpop.f32.mrb[0].mxu0
      %2313 = vdwg.mxu0
      %v2314 = vmax.f32 %v2311, 1e-30
      %v2315 = vrcp.pop %v2314
      %v2316 = vmul.f32 %v1857, %v2315
      %v2318 = vsel %vm803, %v2316, 0
      %2320 = vmatprep.subr.mxu0 0.0
      %2321 = vmatpush1.xpose.msra.mxu0 %v1862
      %2322 = vmatprep.subr.mxu0 0.0
      %2323 = vmatpush1.xpose.msra.mxu0 0.0
      %2324 = vmatprep.subr.mxu0 0.0
      %2325 = vmatpush1.xpose.msra.mxu0 0.0
      %2326 = vmatprep.subr.mxu0 0.0
      %2327 = vmatpush1.xpose.msra.mxu0 0.0
      %2328 = vmatprep.subr.mxu0 0.0
      %2329 = vmatpush1.xpose.msra.mxu0 0.0
      %2330 = vmatprep.subr.mxu0 0.0
      %2331 = vmatpush1.xpose.msra.mxu0 0.0
      %2332 = vmatprep.subr.mxu0 0.0
      %2333 = vmatpush1.xpose.msra.mxu0 0.0
      %2334 = vmatprep.subr.mxu0 0.0
      %2335 = vmatpush1.xpose.msra.mxu0 0.0
      %2336 = vmatprep.subr.mxu0 0.0
      %2337 = vmatpush1.xpose.msra.mxu0 0.0
      %2338 = vmatprep.subr.mxu0 0.0
      %2339 = vmatpush1.xpose.msra.mxu0 0.0
      %2340 = vmatprep.subr.mxu0 0.0
      %2341 = vmatpush1.xpose.msra.mxu0 0.0
      %2342 = vmatprep.subr.mxu0 0.0
      %2343 = vmatpush1.xpose.msra.mxu0 0.0
      %2344 = vmatprep.subr.mxu0 0.0
      %2345 = vmatpush1.xpose.msra.mxu0 0.0
      %2346 = vmatprep.subr.mxu0 0.0
      %2347 = vmatpush1.xpose.msra.mxu0 0.0
      %2348 = vmatprep.subr.mxu0 0.0
      %2349 = vmatpush1.xpose.msra.mxu0 0.0
      %2350 = vmatprep.subr.mxu0 0.0
      %2351 = vmatpush1.xpose.msra.mxu0 0.0
      %2352 = vmatprep.subr.mxu0 0.0
      %2353 = vmatpush1.xpose.msra.mxu0 0.0
      %2354 = vmatprep.subr.mxu0 0.0
      %2355 = vmatpush1.xpose.msra.mxu0 0.0
      %2356 = vmatprep.subr.mxu0 0.0
      %2357 = vmatpush1.xpose.msra.mxu0 0.0
      %2358 = vmatprep.subr.mxu0 0.0
      %2359 = vmatpush1.xpose.msra.mxu0 0.0
      %2360 = vmatprep.subr.mxu0 0.0
      %2361 = vmatpush1.xpose.msra.mxu0 0.0
      %2362 = vmatprep.subr.mxu0 0.0
      %2363 = vmatpush1.xpose.msra.mxu0 0.0
      %2364 = vmatprep.subr.mxu0 0.0
      %2365 = vmatpush1.xpose.msra.mxu0 0.0
      %2366 = vmatprep.subr.mxu0 0.0
      %2367 = vmatpush1.xpose.msra.mxu0 0.0
      %2368 = vmatprep.subr.mxu0 0.0
      %2369 = vmatpush1.xpose.msra.mxu0 0.0
      %2370 = vmatprep.subr.mxu0 0.0
      %2371 = vmatpush1.xpose.msra.mxu0 0.0
      %2372 = vmatprep.subr.mxu0 0.0
      %2373 = vmatpush1.xpose.msra.mxu0 0.0
      %2374 = vmatprep.subr.mxu0 0.0
      %2375 = vmatpush1.xpose.msra.mxu0 0.0
      %2376 = vmatprep.subr.mxu0 0.0
      %2377 = vmatpush1.xpose.msra.mxu0 0.0
      %2378 = vmatprep.subr.mxu0 0.0
      %2379 = vmatpush1.xpose.msra.mxu0 0.0
      %2380 = vmatprep.subr.mxu0 0.0
      %2381 = vmatpush1.xpose.msra.mxu0 0.0
      %2382 = vmatprep.subr.mxu0 0.0
      %2383 = vmatpush1.xpose.msra.mxu0 0.0
      %2384 = vmatprep.mubr.f32.mxu0 0.0
      %2385 = vmatmul.mubr.f32.gmra.mrb[0].mxu0 %v2318
      %v2386 = vpop.f32.mrb[0].mxu0
      %v2387 = vadd.f32 0.0, %v2386
      %v2388 = vpop.f32.mrb[0].mxu0
      %2389 = vdwg.mxu0
      %v2390 = vmax.f32 %v2387, 1e-30
      %v2391 = vrcp.pop %v2390
      %v2392 = vmul.f32 %v1777, %v2391
      %v2394 = vsel %vm803, %v2392, 0
      %2396 = vmatprep.subr.mxu0 0.0
      %2397 = vmatpush1.msra.mxu0 %v1860
      %2398 = vmatprep.subr.mxu0 0.0
      %2399 = vmatpush1.msra.mxu0 0.0
      %2400 = vmatprep.subr.mxu0 0.0
      %2401 = vmatpush1.msra.mxu0 0.0
      %2402 = vmatprep.subr.mxu0 0.0
      %2403 = vmatpush1.msra.mxu0 0.0
      %2404 = vmatprep.subr.mxu0 0.0
      %2405 = vmatpush1.msra.mxu0 0.0
      %2406 = vmatprep.subr.mxu0 0.0
      %2407 = vmatpush1.msra.mxu0 0.0
      %2408 = vmatprep.subr.mxu0 0.0
      %2409 = vmatpush1.msra.mxu0 0.0
      %2410 = vmatprep.subr.mxu0 0.0
      %2411 = vmatpush1.msra.mxu0 0.0
      %2412 = vmatprep.subr.mxu0 0.0
      %2413 = vmatpush1.msra.mxu0 0.0
      %2414 = vmatprep.subr.mxu0 0.0
      %2415 = vmatpush1.msra.mxu0 0.0
      %2416 = vmatprep.subr.mxu0 0.0
      %2417 = vmatpush1.msra.mxu0 0.0
      %2418 = vmatprep.subr.mxu0 0.0
      %2419 = vmatpush1.msra.mxu0 0.0
      %2420 = vmatprep.subr.mxu0 0.0
      %2421 = vmatpush1.msra.mxu0 0.0
      %2422 = vmatprep.subr.mxu0 0.0
      %2423 = vmatpush1.msra.mxu0 0.0
      %2424 = vmatprep.subr.mxu0 0.0
      %2425 = vmatpush1.msra.mxu0 0.0
      %2426 = vmatprep.subr.mxu0 0.0
      %2427 = vmatpush1.msra.mxu0 0.0
      %2428 = vmatprep.subr.mxu0 0.0
      %2429 = vmatpush1.msra.mxu0 0.0
      %2430 = vmatprep.subr.mxu0 0.0
      %2431 = vmatpush1.msra.mxu0 0.0
      %2432 = vmatprep.subr.mxu0 0.0
      %2433 = vmatpush1.msra.mxu0 0.0
      %2434 = vmatprep.subr.mxu0 0.0
      %2435 = vmatpush1.msra.mxu0 0.0
      %2436 = vmatprep.subr.mxu0 0.0
      %2437 = vmatpush1.msra.mxu0 0.0
      %2438 = vmatprep.subr.mxu0 0.0
      %2439 = vmatpush1.msra.mxu0 0.0
      %2440 = vmatprep.subr.mxu0 0.0
      %2441 = vmatpush1.msra.mxu0 0.0
      %2442 = vmatprep.subr.mxu0 0.0
      %2443 = vmatpush1.msra.mxu0 0.0
      %2444 = vmatprep.subr.mxu0 0.0
      %2445 = vmatpush1.msra.mxu0 0.0
      %2446 = vmatprep.subr.mxu0 0.0
      %2447 = vmatpush1.msra.mxu0 0.0
      %2448 = vmatprep.subr.mxu0 0.0
      %2449 = vmatpush1.msra.mxu0 0.0
      %2450 = vmatprep.subr.mxu0 0.0
      %2451 = vmatpush1.msra.mxu0 0.0
      %2452 = vmatprep.subr.mxu0 0.0
      %2453 = vmatpush1.msra.mxu0 0.0
      %2454 = vmatprep.subr.mxu0 0.0
      %2455 = vmatpush1.msra.mxu0 0.0
      %2456 = vmatprep.subr.mxu0 0.0
      %2457 = vmatpush1.msra.mxu0 0.0
      %2458 = vmatprep.subr.mxu0 0.0
      %2459 = vmatpush1.msra.mxu0 0.0
      %2460 = vmatprep.mubr.f32.mxu0 0.0
      %2461 = vmatmul.mubr.f32.gmra.mrb[0].mxu0 %v2394
      %v2462 = vpop.f32.mrb[0].mxu0
      %v2463 = vadd.f32 0.0, %v2462
      %v2464 = vpop.f32.mrb[0].mxu0
      %2465 = vdwg.mxu0
      %v2466 = vmax.f32 %v2463, 1e-30
      %v2467 = vrcp.pop %v2466
      %v2468 = vmul.f32 %v1857, %v2467
      %v2470 = vsel %vm803, %v2468, 0
      %2472 = vmatprep.subr.mxu0 0.0
      %2473 = vmatpush1.xpose.msra.mxu0 %v1862
      %2474 = vmatprep.subr.mxu0 0.0
      %2475 = vmatpush1.xpose.msra.mxu0 0.0
      %2476 = vmatprep.subr.mxu0 0.0
      %2477 = vmatpush1.xpose.msra.mxu0 0.0
      %2478 = vmatprep.subr.mxu0 0.0
      %2479 = vmatpush1.xpose.msra.mxu0 0.0
      %2480 = vmatprep.subr.mxu0 0.0
      %2481 = vmatpush1.xpose.msra.mxu0 0.0
      %2482 = vmatprep.subr.mxu0 0.0
      %2483 = vmatpush1.xpose.msra.mxu0 0.0
      %2484 = vmatprep.subr.mxu0 0.0
      %2485 = vmatpush1.xpose.msra.mxu0 0.0
      %2486 = vmatprep.subr.mxu0 0.0
      %2487 = vmatpush1.xpose.msra.mxu0 0.0
      %2488 = vmatprep.subr.mxu0 0.0
      %2489 = vmatpush1.xpose.msra.mxu0 0.0
      %2490 = vmatprep.subr.mxu0 0.0
      %2491 = vmatpush1.xpose.msra.mxu0 0.0
      %2492 = vmatprep.subr.mxu0 0.0
      %2493 = vmatpush1.xpose.msra.mxu0 0.0
      %2494 = vmatprep.subr.mxu0 0.0
      %2495 = vmatpush1.xpose.msra.mxu0 0.0
      %2496 = vmatprep.subr.mxu0 0.0
      %2497 = vmatpush1.xpose.msra.mxu0 0.0
      %2498 = vmatprep.subr.mxu0 0.0
      %2499 = vmatpush1.xpose.msra.mxu0 0.0
      %2500 = vmatprep.subr.mxu0 0.0
      %2501 = vmatpush1.xpose.msra.mxu0 0.0
      %2502 = vmatprep.subr.mxu0 0.0
      %2503 = vmatpush1.xpose.msra.mxu0 0.0
      %2504 = vmatprep.subr.mxu0 0.0
      %2505 = vmatpush1.xpose.msra.mxu0 0.0
      %2506 = vmatprep.subr.mxu0 0.0
      %2507 = vmatpush1.xpose.msra.mxu0 0.0
      %2508 = vmatprep.subr.mxu0 0.0
      %2509 = vmatpush1.xpose.msra.mxu0 0.0
      %2510 = vmatprep.subr.mxu0 0.0
      %2511 = vmatpush1.xpose.msra.mxu0 0.0
      %2512 = vmatprep.subr.mxu0 0.0
      %2513 = vmatpush1.xpose.msra.mxu0 0.0
      %2514 = vmatprep.subr.mxu0 0.0
      %2515 = vmatpush1.xpose.msra.mxu0 0.0
      %2516 = vmatprep.subr.mxu0 0.0
      %2517 = vmatpush1.xpose.msra.mxu0 0.0
      %2518 = vmatprep.subr.mxu0 0.0
      %2519 = vmatpush1.xpose.msra.mxu0 0.0
      %2520 = vmatprep.subr.mxu0 0.0
      %2521 = vmatpush1.xpose.msra.mxu0 0.0
      %2522 = vmatprep.subr.mxu0 0.0
      %2523 = vmatpush1.xpose.msra.mxu0 0.0
      %2524 = vmatprep.subr.mxu0 0.0
      %2525 = vmatpush1.xpose.msra.mxu0 0.0
      %2526 = vmatprep.subr.mxu0 0.0
      %2527 = vmatpush1.xpose.msra.mxu0 0.0
      %2528 = vmatprep.subr.mxu0 0.0
      %2529 = vmatpush1.xpose.msra.mxu0 0.0
      %2530 = vmatprep.subr.mxu0 0.0
      %2531 = vmatpush1.xpose.msra.mxu0 0.0
      %2532 = vmatprep.subr.mxu0 0.0
      %2533 = vmatpush1.xpose.msra.mxu0 0.0
      %2534 = vmatprep.subr.mxu0 0.0
      %2535 = vmatpush1.xpose.msra.mxu0 0.0
      %2536 = vmatprep.mubr.f32.mxu0 0.0
      %2537 = vmatmul.mubr.f32.gmra.mrb[0].mxu0 %v2470
      %v2538 = vpop.f32.mrb[0].mxu0
      %v2539 = vadd.f32 0.0, %v2538
      %v2540 = vpop.f32.mrb[0].mxu0
      %2541 = vdwg.mxu0
      %v2542 = vmax.f32 %v2539, 1e-30
      %v2543 = vrcp.pop %v2542
      %v2544 = vmul.f32 %v1777, %v2543
      %v2546 = vsel %vm803, %v2544, 0
      %2548 = vmatprep.subr.mxu0 0.0
      %2549 = vmatpush1.msra.mxu0 %v1860
      %2550 = vmatprep.subr.mxu0 0.0
      %2551 = vmatpush1.msra.mxu0 0.0
      %2552 = vmatprep.subr.mxu0 0.0
      %2553 = vmatpush1.msra.mxu0 0.0
      %2554 = vmatprep.subr.mxu0 0.0
      %2555 = vmatpush1.msra.mxu0 0.0
      %2556 = vmatprep.subr.mxu0 0.0
      %2557 = vmatpush1.msra.mxu0 0.0
      %2558 = vmatprep.subr.mxu0 0.0
      %2559 = vmatpush1.msra.mxu0 0.0
      %2560 = vmatprep.subr.mxu0 0.0
      %2561 = vmatpush1.msra.mxu0 0.0
      %2562 = vmatprep.subr.mxu0 0.0
      %2563 = vmatpush1.msra.mxu0 0.0
      %2564 = vmatprep.subr.mxu0 0.0
      %2565 = vmatpush1.msra.mxu0 0.0
      %2566 = vmatprep.subr.mxu0 0.0
      %2567 = vmatpush1.msra.mxu0 0.0
      %2568 = vmatprep.subr.mxu0 0.0
      %2569 = vmatpush1.msra.mxu0 0.0
      %2570 = vmatprep.subr.mxu0 0.0
      %2571 = vmatpush1.msra.mxu0 0.0
      %2572 = vmatprep.subr.mxu0 0.0
      %2573 = vmatpush1.msra.mxu0 0.0
      %2574 = vmatprep.subr.mxu0 0.0
      %2575 = vmatpush1.msra.mxu0 0.0
      %2576 = vmatprep.subr.mxu0 0.0
      %2577 = vmatpush1.msra.mxu0 0.0
      %2578 = vmatprep.subr.mxu0 0.0
      %2579 = vmatpush1.msra.mxu0 0.0
      %2580 = vmatprep.subr.mxu0 0.0
      %2581 = vmatpush1.msra.mxu0 0.0
      %2582 = vmatprep.subr.mxu0 0.0
      %2583 = vmatpush1.msra.mxu0 0.0
      %2584 = vmatprep.subr.mxu0 0.0
      %2585 = vmatpush1.msra.mxu0 0.0
      %2586 = vmatprep.subr.mxu0 0.0
      %2587 = vmatpush1.msra.mxu0 0.0
      %2588 = vmatprep.subr.mxu0 0.0
      %2589 = vmatpush1.msra.mxu0 0.0
      %2590 = vmatprep.subr.mxu0 0.0
      %2591 = vmatpush1.msra.mxu0 0.0
      %2592 = vmatprep.subr.mxu0 0.0
      %2593 = vmatpush1.msra.mxu0 0.0
      %2594 = vmatprep.subr.mxu0 0.0
      %2595 = vmatpush1.msra.mxu0 0.0
      %2596 = vmatprep.subr.mxu0 0.0
      %2597 = vmatpush1.msra.mxu0 0.0
      %2598 = vmatprep.subr.mxu0 0.0
      %2599 = vmatpush1.msra.mxu0 0.0
      %2600 = vmatprep.subr.mxu0 0.0
      %2601 = vmatpush1.msra.mxu0 0.0
      %2602 = vmatprep.subr.mxu0 0.0
      %2603 = vmatpush1.msra.mxu0 0.0
      %2604 = vmatprep.subr.mxu0 0.0
      %2605 = vmatpush1.msra.mxu0 0.0
      %2606 = vmatprep.subr.mxu0 0.0
      %2607 = vmatpush1.msra.mxu0 0.0
      %2608 = vmatprep.subr.mxu0 0.0
      %2609 = vmatpush1.msra.mxu0 0.0
      %2610 = vmatprep.subr.mxu0 0.0
      %2611 = vmatpush1.msra.mxu0 0.0
      %2612 = vmatprep.mubr.f32.mxu0 0.0
      %2613 = vmatmul.mubr.f32.gmra.mrb[0].mxu0 %v2546
      %v2614 = vpop.f32.mrb[0].mxu0
      %v2615 = vadd.f32 0.0, %v2614
      %v2616 = vpop.f32.mrb[0].mxu0
      %2617 = vdwg.mxu0
      %v2618 = vmax.f32 %v2615, 1e-30
      %v2619 = vrcp.pop %v2618
      %v2620 = vmul.f32 %v1857, %v2619
      %v2621 = vmul.f32 %v1860, %v1697
      %2622 = vmatprep.subr.mxu0 0.0
      %2623 = vmatpush1.msra.mxu0 %v2621
      %2624 = vmatprep.subr.mxu0 0.0
      %2625 = vmatpush1.msra.mxu0 0.0
      %2626 = vmatprep.subr.mxu0 0.0
      %2627 = vmatpush1.msra.mxu0 0.0
      %2628 = vmatprep.subr.mxu0 0.0
      %2629 = vmatpush1.msra.mxu0 0.0
      %2630 = vmatprep.subr.mxu0 0.0
      %2631 = vmatpush1.msra.mxu0 0.0
      %2632 = vmatprep.subr.mxu0 0.0
      %2633 = vmatpush1.msra.mxu0 0.0
      %2634 = vmatprep.subr.mxu0 0.0
      %2635 = vmatpush1.msra.mxu0 0.0
      %2636 = vmatprep.subr.mxu0 0.0
      %2637 = vmatpush1.msra.mxu0 0.0
      %2638 = vmatprep.subr.mxu0 0.0
      %2639 = vmatpush1.msra.mxu0 0.0
      %2640 = vmatprep.subr.mxu0 0.0
      %2641 = vmatpush1.msra.mxu0 0.0
      %2642 = vmatprep.subr.mxu0 0.0
      %2643 = vmatpush1.msra.mxu0 0.0
      %2644 = vmatprep.subr.mxu0 0.0
      %2645 = vmatpush1.msra.mxu0 0.0
      %2646 = vmatprep.subr.mxu0 0.0
      %2647 = vmatpush1.msra.mxu0 0.0
      %2648 = vmatprep.subr.mxu0 0.0
      %2649 = vmatpush1.msra.mxu0 0.0
      %2650 = vmatprep.subr.mxu0 0.0
      %2651 = vmatpush1.msra.mxu0 0.0
      %2652 = vmatprep.subr.mxu0 0.0
      %2653 = vmatpush1.msra.mxu0 0.0
      %2654 = vmatprep.subr.mxu0 0.0
      %2655 = vmatpush1.msra.mxu0 0.0
      %2656 = vmatprep.subr.mxu0 0.0
      %2657 = vmatpush1.msra.mxu0 0.0
      %2658 = vmatprep.subr.mxu0 0.0
      %2659 = vmatpush1.msra.mxu0 0.0
      %2660 = vmatprep.subr.mxu0 0.0
      %2661 = vmatpush1.msra.mxu0 0.0
      %2662 = vmatprep.subr.mxu0 0.0
      %2663 = vmatpush1.msra.mxu0 0.0
      %2664 = vmatprep.subr.mxu0 0.0
      %2665 = vmatpush1.msra.mxu0 0.0
      %2666 = vmatprep.subr.mxu0 0.0
      %2667 = vmatpush1.msra.mxu0 0.0
      %2668 = vmatprep.subr.mxu0 0.0
      %2669 = vmatpush1.msra.mxu0 0.0
      %2670 = vmatprep.subr.mxu0 0.0
      %2671 = vmatpush1.msra.mxu0 0.0
      %2672 = vmatprep.subr.mxu0 0.0
      %2673 = vmatpush1.msra.mxu0 0.0
      %2674 = vmatprep.subr.mxu0 0.0
      %2675 = vmatpush1.msra.mxu0 0.0
      %2676 = vmatprep.subr.mxu0 0.0
      %2677 = vmatpush1.msra.mxu0 0.0
      %2678 = vmatprep.subr.mxu0 0.0
      %2679 = vmatpush1.msra.mxu0 0.0
      %2680 = vmatprep.subr.mxu0 0.0
      %2681 = vmatpush1.msra.mxu0 0.0
      %2682 = vmatprep.subr.mxu0 0.0
      %2683 = vmatpush1.msra.mxu0 0.0
      %2684 = vmatprep.subr.mxu0 0.0
      %2685 = vmatpush1.msra.mxu0 0.0
      %2686 = vmatprep.mubr.f32.mxu0 0.0
      %2687 = vmatmul.mubr.f32.gmra.mrb[0].mxu0 %v2546
      %v2688 = vpop.f32.mrb[0].mxu0
      %v2689 = vadd.f32 0.0, %v2688
      %v2690 = vpop.f32.mrb[0].mxu0
      %2691 = vdwg.mxu0
      %v2692 = vmul.f32 %v2689, %v2620
      %v2693 = vsel %vm711, %v2692, 0.0
      %2694 = vadd.xlane.f32.xlu0 %v2693
      %v2695 = vpop.xlane.xlu0 %2694
      %v2696 = vmul.f32 %v2695, 2.0
      %v2697 = vsub.f32 2.0, %v2696
      %p2698 = scmp.eq.s32.totalorder %s29, 0
      // Predicated region
      $region45: #{rosa_forward.9} parent=43 // pred_check
        %p2699 = pneg %p2698
      $region46: #{rosa_forward.9} parent=43 // pred_check_branch
        %2701 = sbr.rel (%p2699) target = $region48
      $region47: #{rosa_forward.9} parent=43 // pred_region
        %vm2702 = vcmask 0
        %2703 = vst.msk [vmem:[#allocation2] sm:$0x1] %vm2702, %v1643
        %2704 = vst.msk [vmem:[#allocation3] sm:$0x1] %vm2702, 0.0
      $region48: #{rosa_forward.9} parent=43 // pred_fallthru
        _
      %p2705 = scmp.gt.s32.totalorder %s29, 0
      // Predicated region
      $region49: #{rosa_forward.9} parent=43 // pred_check
        %p2706 = pneg %p2705
      $region50: #{rosa_forward.9} parent=43 // pred_check_branch
        %2708 = sbr.rel (%p2706) target = $region52
      $region51: #{rosa_forward.9} parent=43 // pred_region
        %v2709 = vld [vmem:[#allocation3] sm:$0x1]
        %v2710 = vmul.f32 %v1643, 2.5
        %v2711 = vmul.f32 %v2710, 1.442695
        %v2712 = vpow.pop %v2711
        %v2713 = vmul.f32 %v2697, 2.5
        %v2714 = vmul.f32 %v2713, 1.442695
        %v2715 = vpow.pop %v2714
        %v2716 = vadd.f32 %v2712, %v2715
        %v2717 = vadd.f32 %v2709, %v2716
        %vm2718 = vcmask 0
        %2719 = vst.msk [vmem:[#allocation3] sm:$0x1] %vm2718, %v2717
      $region52: #{rosa_forward.9} parent=43 // pred_fallthru
        _
      %p2720 = scmp.eq.s32.totalorder %s29, 1
      // Predicated region
      $region53: #{rosa_forward.9} parent=43 // pred_check
        %p2721 = pneg %p2720
      $region54: #{rosa_forward.9} parent=43 // pred_check_branch
        %2723 = sbr.rel (%p2721) target = $region56
      $region55: #{rosa_forward.9} parent=43 // pred_region
        %v2724 = vld [vmem:[#allocation3] sm:$0x1]
        %v2725 = vlog2.pop %v2724
        %v2726 = vmul.f32 %v2725, 0.6931472
        %v2727 = vld [vmem:[#allocation2] sm:$0x1]
        %v2728 = vmul.f32 %v2727, 2.5
        %v2729 = vsub.f32 %v2726, %v2728
        %vm2730 = vcmask 0
        %2731 = vst.msk [vmem:[%s563] sm:$0x1] %vm2730, %v2729
      $region56: #{rosa_forward.9} parent=43 // pred_fallthru
        _
      %p2732 = scmp.lt.s32.totalorder %s28, 1
      %s2733 = scalar_select %p2732, %s28, 1
      %s2734 = scalar_lea.vmem %s7, %s2733
      // Predicated region
      $region57: #{rosa_forward.9} parent=43 // pred_check
        %p2735 = pneg %p274
      $region58: #{rosa_forward.9} parent=43 // pred_check_branch
        %2737 = sbr.rel (%p2735) target = $region60
      $region59: #{rosa_forward.9} parent=43 // pred_region
        _
      $region60: #{rosa_forward.9} parent=43 // pred_fallthru
        _
    $region44: #{rosa_forward.9} parent=5 // pred_fallthru
      _
    %p2738 = scmp.le.s32.totalorder 2, %s19
    // Predicated region
    $region61: #{rosa_forward.9} parent=5 // pred_check
      %p2739 = pneg %p2738
    $region62: #{rosa_forward.9} parent=5 // pred_check_branch
      %2741 = sbr.rel (%p2739) target = $region64
    $region63: #{rosa_forward.9} parent=5 // pred_region
      %s2742 = ssub.s32 %s19, 2
      // Predicated region
      $region65: #{rosa_forward.9} parent=63 // pred_check
        %p2743 = pneg %p280
      $region66: #{rosa_forward.9} parent=63 // pred_check_branch
        %2745 = sbr.rel (%p2743) target = $region68
      $region67: #{rosa_forward.9} parent=63 // pred_region
        %p2746 = scmp.lt.s32.totalorder %s30, 1
        %s2747 = scalar_select %p2746, %s30, 1
        %s2748 = scalar_lea.vmem %s7, %s2747
      $region68: #{rosa_forward.9} parent=63 // pred_fallthru
        _
    $region64: #{rosa_forward.9} parent=5 // pred_fallthru
      _
  $region6: #{rosa_forward.9} parent=0 // loop_footer
    %s23 = sadd.s32 1, %s19
  $region7: #{rosa_forward.9} parent=0 // loop_footer_branch
    %18 = sbr.rel target = $region3
  $region8: #{rosa_forward.9} parent=0 // loop_exit
    _

</llo_original>
